<compile_context>
chip_gen: v7x
topology: tpu7x:2x2x1
jax: 0.10.0
libtpu: 0.0.40
codegen_flags: <defaults>
</compile_context>

<pallas_src>
import jax
import jax.numpy as jnp
from jax.experimental import pallas as pl
from jax.experimental.pallas import tpu as pltpu

EPS = 1e-5


# ---------------------------------------------------------------------------
# Kernel 1: per-sample per-channel partial statistics (sum, sum^2) over (H, W)
# ---------------------------------------------------------------------------
def _stats_kernel(x_ref, sum_ref, sq_ref):
    c = x_ref.shape[-1]
    xv = x_ref[0].astype(jnp.float32).reshape(-1, c)
    sum_ref[0] = jnp.sum(xv, axis=0, keepdims=True)
    sq_ref[0] = jnp.sum(xv * xv, axis=0, keepdims=True)


def batch_channel_stats(x):
    """Per-channel (sum, sum of squares) over (N, H, W) for NHWC x.

    Each grid step writes its own per-sample partial row so the batch axis is
    "parallel"; the (N, C)-sized final reduction is done in the wrapper.
    """
    N, H, W, C = x.shape
    s, s2 = pl.pallas_call(
        _stats_kernel,
        grid=(N,),
        in_specs=[pl.BlockSpec((1, H, W, C), lambda n: (n, 0, 0, 0))],
        out_specs=(pl.BlockSpec((1, 1, C), lambda n: (n, 0, 0)),
                   pl.BlockSpec((1, 1, C), lambda n: (n, 0, 0))),
        out_shape=(jax.ShapeDtypeStruct((N, 1, C), jnp.float32),
                   jax.ShapeDtypeStruct((N, 1, C), jnp.float32)),
        compiler_params=pltpu.CompilerParams(
            dimension_semantics=("parallel",)),
    )(x)
    return jnp.sum(s, axis=(0, 1)), jnp.sum(s2, axis=(0, 1))


def _scale_shift(s, s2, count, gamma, beta):
    mean = s / count
    var = s2 / count - mean * mean
    scale = gamma * jax.lax.rsqrt(var + EPS)
    shift = beta - mean * scale
    return scale, shift


# ---------------------------------------------------------------------------
# Kernels 2/3: fused [BN-apply + relu] -> KxK conv [+ bias] [+ residual add],
#              optionally emitting per-sample batch stats of the conv output.
# ---------------------------------------------------------------------------
def _make_fused_conv_kernel(H, W, Cin, Cout, K, has_bias, add_residual,
                            emit_stats):
    pad = K // 2

    def kernel(*refs):
        i = 0
        x_ref = refs[i]; i += 1
        scale_ref = refs[i]; shift_ref = refs[i + 1]; i += 2
        w_ref = refs[i]; i += 1
        b_ref = None
        if has_bias:
            b_ref = refs[i]; i += 1
        res_ref = None
        if add_residual:
            res_ref = refs[i]; i += 1
        o_ref = refs[i]; i += 1
        if emit_stats:
            sum_ref = refs[i]; sq_ref = refs[i + 1]; i += 2
        xs_ref = refs[i]                    # VMEM (H + 2*pad, W, K*Cin) slab

        # Zero only the 2*pad halo rows (the interior is fully overwritten).
        if pad > 0:
            zrow = jnp.zeros((pad, W, K * Cin), jnp.float32)
            xs_ref[0:pad] = zrow
            xs_ref[pad + H:pad + H + pad] = zrow

        # BN-apply + ReLU in registers.
        a = x_ref[0].astype(jnp.float32)                     # (H, W, Cin)
        sc = scale_ref[...].reshape(1, 1, Cin)
        sh = shift_ref[...].reshape(1, 1, Cin)
        a = jnp.maximum(a * sc + sh, 0.0)

        # Fold the dx taps into the lane axis:
        #   slab[y, x, dx*Cin + c] = a[y, x + dx - pad, c]   (0 outside [0, W)).
        parts = []
        if K > 1:
            col = jax.lax.broadcasted_iota(jnp.int32, (H, W, Cin), 1)
        for dx in range(K):
            off = dx - pad
            if off == 0:
                parts.append(a)
            else:
                s = pltpu.roll(a, (-off) % W, 1)             # s[:,x,:] = a[:,x+off,:]
                if off < 0:
                    s = jnp.where(col >= -off, s, 0.0)
                else:
                    s = jnp.where(col < W - off, s, 0.0)
                parts.append(s)
        xs_ref[pad:pad + H] = jnp.concatenate(parts, axis=-1)  # (H, W, K*Cin)

        # K fat matmuls (contraction K*Cin) instead of K*K thin ones; the dy
        # tap is a cheap leading-axis row offset into the slab scratch.
        acc = jnp.zeros((H * W, Cout), jnp.float32)
        for dy in range(K):
            patch = xs_ref[dy:dy + H].reshape(H * W, K * Cin)
            acc = acc + jnp.dot(patch, w_ref[dy],
                                preferred_element_type=jnp.float32)
        if has_bias:
            acc = acc + b_ref[...]                           # (1, Cout)

        if emit_stats:
            # Per-sample partial stats of this conv's own output feed the next
            # BatchNorm without an extra HBM pass over h; the final reduction
            # over N happens in the wrapper so the batch axis stays parallel.
            sum_ref[0] = jnp.sum(acc, axis=0, keepdims=True)
            sq_ref[0] = jnp.sum(acc * acc, axis=0, keepdims=True)

        out = acc.reshape(H, W, Cout)
        if add_residual:
            out = out + res_ref[0].astype(jnp.float32)
        o_ref[0] = out.astype(o_ref.dtype)

    return kernel


def _conv_vmem_estimate(H, W, Cin, Cout, K, add_res):
    f32 = 4
    pad = K // 2
    est = 2 * H * W * Cin * f32                    # x block (double-buffered)
    est += 2 * H * W * Cout * f32                  # out block (double-buffered)
    if add_res:
        est += 2 * H * W * Cout * f32              # residual block
    est += (H + 2 * pad) * W * K * Cin * f32       # slab scratch
    est += K * K * Cin * Cout * f32 + 4 * (Cin + Cout) * f32
    return est


def _compiler_params(semantics, est_bytes):
    vmem = None
    if 4 * est_bytes > 16 * 2**20:                 # raise the scoped limit only when needed
        vmem = int(min(4 * est_bytes, 48 * 2**20))
    return pltpu.CompilerParams(dimension_semantics=semantics,
                                vmem_limit_bytes=vmem)


def fused_bn_relu_conv(x, scale, shift, w, b=None, residual=None,
                       emit_stats=False):
    """x: (N,H,W,Cin) NHWC, w: (K,K,Cin,Cout) HWIO.
    Computes conv(relu(x*scale+shift)) [+ b] [+ residual]; optionally also
    returns per-channel (sum, sum^2) of the conv output (pre-residual)."""
    N, H, W, Cin = x.shape
    K = w.shape[0]
    Cout = w.shape[-1]
    pad = K // 2
    has_bias = b is not None
    add_res = residual is not None

    kernel = _make_fused_conv_kernel(H, W, Cin, Cout, K, has_bias, add_res,
                                     emit_stats)

    # dx taps folded into the contraction axis: (K, K*Cin, Cout).
    w_slab = w.reshape(K, K * Cin, Cout)

    in_specs = [
        pl.BlockSpec((1, H, W, Cin), lambda n: (n, 0, 0, 0)),
        pl.BlockSpec((1, Cin), lambda n: (0, 0)),
        pl.BlockSpec((1, Cin), lambda n: (0, 0)),
        pl.BlockSpec((K, K * Cin, Cout), lambda n: (0, 0, 0)),
    ]
    args = [x, scale.reshape(1, Cin), shift.reshape(1, Cin), w_slab]
    if has_bias:
        in_specs.append(pl.BlockSpec((1, Cout), lambda n: (0, 0)))
        args.append(b.reshape(1, Cout))
    if add_res:
        in_specs.append(pl.BlockSpec((1, H, W, Cout), lambda n: (n, 0, 0, 0)))
        args.append(residual)

    out_specs = [pl.BlockSpec((1, H, W, Cout), lambda n: (n, 0, 0, 0))]
    out_shape = [jax.ShapeDtypeStruct((N, H, W, Cout), jnp.float32)]
    if emit_stats:
        out_specs += [pl.BlockSpec((1, 1, Cout), lambda n: (n, 0, 0)),
                      pl.BlockSpec((1, 1, Cout), lambda n: (n, 0, 0))]
        out_shape += [jax.ShapeDtypeStruct((N, 1, Cout), jnp.float32),
                      jax.ShapeDtypeStruct((N, 1, Cout), jnp.float32)]

    # No cross-step accumulators -> the batch grid axis is always parallel
    # (megacore sharding on v7x).
    outs = pl.pallas_call(
        kernel,
        grid=(N,),
        in_specs=in_specs,
        out_specs=tuple(out_specs),
        out_shape=tuple(out_shape),
        scratch_shapes=[pltpu.VMEM((H + 2 * pad, W, K * Cin), jnp.float32)],
        compiler_params=_compiler_params(
            ("parallel",), _conv_vmem_estimate(H, W, Cin, Cout, K, add_res)),
    )(*args)

    if emit_stats:
        y, s, s2 = outs
        return y, jnp.sum(s, axis=(0, 1)), jnp.sum(s2, axis=(0, 1))
    return outs[0]


# ---------------------------------------------------------------------------
# Parameter construction (deterministic, synthetic); weight_norm folded in glue
# ---------------------------------------------------------------------------
def _wn_conv_params(key, cin, cout, k, bias):
    kv, kg, kb = jax.random.split(key, 3)
    v = 0.1 * jax.random.normal(kv, (cout, cin, k, k), jnp.float32)
    norm = jnp.sqrt(jnp.sum(v * v, axis=(1, 2, 3)))                 # (cout,)
    g = norm * (1.0 + 0.1 * jax.random.normal(kg, (cout,), jnp.float32))
    w = v * (g / norm).reshape(-1, 1, 1, 1)                         # weight_norm
    w = jnp.transpose(w, (2, 3, 1, 0))                              # OIHW -> HWIO
    b = (0.1 * jax.random.normal(kb, (cout,), jnp.float32)
         if bias else None)
    return {"w": w, "b": b}


def _bn_params(key, c):
    kg, kb = jax.random.split(key)
    return {"gamma": 1.0 + 0.1 * jax.random.normal(kg, (c,), jnp.float32),
            "beta": 0.1 * jax.random.normal(kb, (c,), jnp.float32)}


def init_params(key, in_channel, mid_channel):
    k1, k2, k3, k4 = jax.random.split(key, 4)
    return {
        "in_norm": _bn_params(k1, in_channel),
        "in_conv": _wn_conv_params(k2, in_channel, mid_channel, 3, bias=False),
        "out_norm": _bn_params(k3, mid_channel),
        "out_conv": _wn_conv_params(k4, mid_channel, mid_channel, 3, bias=True),
    }


# ---------------------------------------------------------------------------
# ResidualBlock forward (matches the PyTorch module's forward)
# ---------------------------------------------------------------------------
def residual_block_forward(params, x_nchw):
    x = jnp.transpose(x_nchw, (0, 2, 3, 1)).astype(jnp.float32)     # NCHW -> NHWC
    N, H, W, _ = x.shape
    count = float(N * H * W)

    # in_norm statistics (standalone reduction pass over the external input).
    s, s2 = batch_channel_stats(x)
    scale1, shift1 = _scale_shift(s, s2, count,
                                  params["in_norm"]["gamma"],
                                  params["in_norm"]["beta"])

    # BN + relu + in_conv, with out_norm stats fused into the conv epilogue.
    h, hs, hs2 = fused_bn_relu_conv(x, scale1, shift1,
                                    params["in_conv"]["w"], b=None,
                                    residual=None, emit_stats=True)

    scale2, shift2 = _scale_shift(hs, hs2, count,
                                  params["out_norm"]["gamma"],
                                  params["out_norm"]["beta"])

    # BN + relu + out_conv + bias + residual(skip = x), all in one kernel.
    y = fused_bn_relu_conv(h, scale2, shift2,
                           params["out_conv"]["w"], b=params["out_conv"]["b"],
                           residual=x, emit_stats=False)

    return jnp.transpose(y, (0, 3, 1, 2))                           # NHWC -> NCHW


# ---------------------------------------------------------------------------
# Pure-JAX reference (no Pallas) for a correctness spot-check
# ---------------------------------------------------------------------------
def residual_block_reference(params, x_nchw):
    x = x_nchw.astype(jnp.float32)

    def bn(v, gamma, beta):
        mean = jnp.mean(v, axis=(0, 2, 3), keepdims=True)
        var = jnp.mean(jnp.square(v - mean), axis=(0, 2, 3), keepdims=True)
        return ((v - mean) * jax.lax.rsqrt(var + EPS)
                * gamma.reshape(1, -1, 1, 1) + beta.reshape(1, -1, 1, 1))

    def conv(v, w_hwio, b):
        y = jax.lax.conv_general_dilated(
            v, w_hwio, window_strides=(1, 1), padding="SAME",
            dimension_numbers=("NCHW", "HWIO", "NCHW"),
            precision=jax.lax.Precision.HIGHEST)
        if b is not None:
            y = y + b.reshape(1, -1, 1, 1)
        return y

    skip = x
    h = conv(jax.nn.relu(bn(x, params["in_norm"]["gamma"],
                            params["in_norm"]["beta"])),
             params["in_conv"]["w"], params["in_conv"]["b"])
    y = conv(jax.nn.relu(bn(h, params["out_norm"]["gamma"],
                            params["out_norm"]["beta"])),
             params["out_conv"]["w"], params["out_conv"]["b"])
    return y + skip


if __name__ == "__main__":
    # ResidualBlock's residual add requires mid_channel == in_channel.
    in_channel = mid_channel = 8
    N, H, W = 2, 16, 16

    key = jax.random.PRNGKey(0)
    kx, kp = jax.random.split(key)
    x = jax.random.normal(kx, (N, in_channel, H, W), jnp.float32)
    params = init_params(kp, in_channel, mid_channel)

    fwd = jax.jit(residual_block_forward)
    out = jax.block_until_ready(fwd(params, x))

    assert out.shape == (N, mid_channel, H, W), out.shape
    assert bool(jnp.all(jnp.isfinite(out)))

    ref = residual_block_reference(params, x)
    err = float(jnp.max(jnp.abs(out - ref)))
    assert err < 2e-2, f"max abs err vs reference: {err}"

    print("KERNEL_OK")
</pallas_src>

<mosaic_0001>
module attributes {stable_mosaic.version = 11 : i64} {
  func.func @_stats_kernel(%arg0: i32, %arg1: memref<1x16x16x8xf32, #tpu.memory_space<vmem>>, %arg2: memref<1x1x8xf32, #tpu.memory_space<vmem>>, %arg3: memref<1x1x8xf32, #tpu.memory_space<vmem>>) attributes {dimension_semantics = [#tpu.dimension_semantics<parallel>], iteration_bounds = array<i64: 2>, scalar_prefetch = 0 : i64, scratch_operands = 0 : i64, tpu.core_type = #tpu.core_type<tc>, window_params = [{transform_indices = @transform_0, window_bounds = array<i64: 1, 16, 16, 8>}, {transform_indices = @transform_1, window_bounds = array<i64: 1, 1, 8>}, {transform_indices = @transform_2, window_bounds = array<i64: 1, 1, 8>}]} {
    %c0 = arith.constant 0 : index
    %c0_0 = arith.constant 0 : index
    %c0_1 = arith.constant 0 : index
    %c0_2 = arith.constant 0 : index
    %0 = vector.load %arg1[%c0, %c0_0, %c0_1, %c0_2] : memref<1x16x16x8xf32, #tpu.memory_space<vmem>>, vector<1x16x16x8xf32>
    %1 = vector.shape_cast %0 : vector<1x16x16x8xf32> to vector<16x16x8xf32>
    %2 = vector.shape_cast %1 : vector<16x16x8xf32> to vector<256x8xf32>
    %cst = arith.constant dense<0.000000e+00> : vector<8xf32>
    %3 = vector.multi_reduction <add>, %2, %cst [0] : vector<256x8xf32> to vector<8xf32>
    %4 = vector.shape_cast %3 : vector<8xf32> to vector<1x8xf32>
    %c0_3 = arith.constant 0 : index
    %c0_4 = arith.constant 0 : index
    %c0_5 = arith.constant 0 : index
    %5 = vector.load %arg2[%c0_3, %c0_4, %c0_5] : memref<1x1x8xf32, #tpu.memory_space<vmem>>, vector<1x1x8xf32>
    %6 = vector.shape_cast %5 : vector<1x1x8xf32> to vector<1x8xf32>
    %7 = vector.shape_cast %4 : vector<1x8xf32> to vector<1x1x8xf32>
    tpu.vector_store %arg2[%c0_3, %c0_4, %c0_5], %7 {strides = array<i32>} : memref<1x1x8xf32, #tpu.memory_space<vmem>>, vector<1x1x8xf32>,
    %8 = arith.mulf %2, %2 : vector<256x8xf32>
    %cst_6 = arith.constant dense<0.000000e+00> : vector<8xf32>
    %9 = vector.multi_reduction <add>, %8, %cst_6 [0] : vector<256x8xf32> to vector<8xf32>
    %10 = vector.shape_cast %9 : vector<8xf32> to vector<1x8xf32>
    %c0_7 = arith.constant 0 : index
    %c0_8 = arith.constant 0 : index
    %c0_9 = arith.constant 0 : index
    %11 = vector.load %arg3[%c0_7, %c0_8, %c0_9] : memref<1x1x8xf32, #tpu.memory_space<vmem>>, vector<1x1x8xf32>
    %12 = vector.shape_cast %11 : vector<1x1x8xf32> to vector<1x8xf32>
    %13 = vector.shape_cast %10 : vector<1x8xf32> to vector<1x1x8xf32>
    tpu.vector_store %arg3[%c0_7, %c0_8, %c0_9], %13 {strides = array<i32>} : memref<1x1x8xf32, #tpu.memory_space<vmem>>, vector<1x1x8xf32>,
    return
  }
  func.func @transform_0(%arg0: i32) -> (i32, i32, i32, i32) {
    %c0_i32 = arith.constant 0 : i32
    %c0_i32_0 = arith.constant 0 : i32
    %c0_i32_1 = arith.constant 0 : i32
    %c0_i32_2 = arith.constant 0 : i32
    return %arg0, %c0_i32, %c0_i32_0, %c0_i32_1 : i32, i32, i32, i32
  }
  func.func @transform_1(%arg0: i32) -> (i32, i32, i32) {
    %c0_i32 = arith.constant 0 : i32
    %c0_i32_0 = arith.constant 0 : i32
    %c0_i32_1 = arith.constant 0 : i32
    return %arg0, %c0_i32, %c0_i32_0 : i32, i32, i32
  }
  func.func @transform_2(%arg0: i32) -> (i32, i32, i32) {
    %c0_i32 = arith.constant 0 : i32
    %c0_i32_0 = arith.constant 0 : i32
    %c0_i32_1 = arith.constant 0 : i32
    return %arg0, %c0_i32, %c0_i32_0 : i32, i32, i32
  }
}

module attributes {stable_mosaic.version = 11 : i64} {
  func.func @kernel(%arg0: i32, %arg1: memref<1x16x16x8xf32, #tpu.memory_space<vmem>>, %arg2: memref<1x8xf32, #tpu.memory_space<vmem>>, %arg3: memref<1x8xf32, #tpu.memory_space<vmem>>, %arg4: memref<3x24x8xf32, #tpu.memory_space<vmem>>, %arg5: memref<1x8xf32, #tpu.memory_space<vmem>>, %arg6: memref<1x16x16x8xf32, #tpu.memory_space<vmem>>, %arg7: memref<1x16x16x8xf32, #tpu.memory_space<vmem>>, %arg8: memref<18x16x24xf32, #tpu.memory_space<vmem>>) attributes {dimension_semantics = [#tpu.dimension_semantics<parallel>], iteration_bounds = array<i64: 2>, scalar_prefetch = 0 : i64, scratch_operands = 1 : i64, tpu.core_type = #tpu.core_type<tc>, window_params = [{transform_indices = @transform_0, window_bounds = array<i64: 1, 16, 16, 8>}, {pipeline_mode = #tpu.pipeline_mode<synchronous>, transform_indices = @transform_1, window_bounds = array<i64: 1, 8>}, {pipeline_mode = #tpu.pipeline_mode<synchronous>, transform_indices = @transform_2, window_bounds = array<i64: 1, 8>}, {pipeline_mode = #tpu.pipeline_mode<synchronous>, transform_indices = @transform_3, window_bounds = array<i64: 3, 24, 8>}, {pipeline_mode = #tpu.pipeline_mode<synchronous>, transform_indices = @transform_4, window_bounds = array<i64: 1, 8>}, {transform_indices = @transform_5, window_bounds = array<i64: 1, 16, 16, 8>}, {transform_indices = @transform_6, window_bounds = array<i64: 1, 16, 16, 8>}]} {
    %cst = arith.constant 0.000000e+00 : f32
    %0 = vector.broadcast %cst : f32 to vector<1x16x24xf32>
    %c0 = arith.constant 0 : index
    %c0_0 = arith.constant 0 : index
    %c0_1 = arith.constant 0 : index
    %1 = vector.load %arg8[%c0, %c0_0, %c0_1] : memref<18x16x24xf32, #tpu.memory_space<vmem>>, vector<1x16x24xf32>
    tpu.vector_store %arg8[%c0, %c0_0, %c0_1], %0 {strides = array<i32>} : memref<18x16x24xf32, #tpu.memory_space<vmem>>, vector<1x16x24xf32>,
    %c17 = arith.constant 17 : index
    %c0_2 = arith.constant 0 : index
    %c0_3 = arith.constant 0 : index
    %2 = vector.load %arg8[%c17, %c0_2, %c0_3] : memref<18x16x24xf32, #tpu.memory_space<vmem>>, vector<1x16x24xf32>
    tpu.vector_store %arg8[%c17, %c0_2, %c0_3], %0 {strides = array<i32>} : memref<18x16x24xf32, #tpu.memory_space<vmem>>, vector<1x16x24xf32>,
    %c0_4 = arith.constant 0 : index
    %c0_5 = arith.constant 0 : index
    %c0_6 = arith.constant 0 : index
    %c0_7 = arith.constant 0 : index
    %3 = vector.load %arg1[%c0_4, %c0_5, %c0_6, %c0_7] : memref<1x16x16x8xf32, #tpu.memory_space<vmem>>, vector<1x16x16x8xf32>
    %4 = vector.shape_cast %3 : vector<1x16x16x8xf32> to vector<16x16x8xf32>
    %c0_8 = arith.constant 0 : index
    %c0_9 = arith.constant 0 : index
    %5 = vector.load %arg2[%c0_8, %c0_9] : memref<1x8xf32, #tpu.memory_space<vmem>>, vector<1x8xf32>
    %6 = vector.shape_cast %5 : vector<1x8xf32> to vector<1x1x8xf32>
    %c0_10 = arith.constant 0 : index
    %c0_11 = arith.constant 0 : index
    %7 = vector.load %arg3[%c0_10, %c0_11] : memref<1x8xf32, #tpu.memory_space<vmem>>, vector<1x8xf32>
    %8 = vector.shape_cast %7 : vector<1x8xf32> to vector<1x1x8xf32>
    %9 = vector.broadcast %6 : vector<1x1x8xf32> to vector<16x16x8xf32>
    %10 = arith.mulf %4, %9 : vector<16x16x8xf32>
    %11 = vector.broadcast %8 : vector<1x1x8xf32> to vector<16x16x8xf32>
    %12 = arith.addf %10, %11 : vector<16x16x8xf32>
    %cst_12 = arith.constant 0.000000e+00 : f32
    %13 = vector.broadcast %cst_12 : f32 to vector<16x16x8xf32>
    %14 = arith.maximumf %12, %13 : vector<16x16x8xf32>
    %15 = tpu.iota {dimensions = array<i32: 1>} : vector<16x16x8xi32>
    %c1_i32 = arith.constant 1 : i32
    %16 = tpu.dynamic_rotate %14 by %c1_i32 dim 1 : vector<16x16x8xf32>, i32 -> vector<16x16x8xf32>
    %c1_i32_13 = arith.constant 1 : i32
    %17 = vector.broadcast %c1_i32_13 : i32 to vector<16x16x8xi32>
    %18 = arith.cmpi sge, %15, %17 : vector<16x16x8xi32>
    %cst_14 = arith.constant 0.000000e+00 : f32
    %19 = vector.broadcast %cst_14 : f32 to vector<16x16x8xf32>
    %20 = arith.select %18, %16, %19 : vector<16x16x8xi1>, vector<16x16x8xf32>
    %c15_i32 = arith.constant 15 : i32
    %21 = tpu.dynamic_rotate %14 by %c15_i32 dim 1 : vector<16x16x8xf32>, i32 -> vector<16x16x8xf32>
    %c15_i32_15 = arith.constant 15 : i32
    %22 = vector.broadcast %c15_i32_15 : i32 to vector<16x16x8xi32>
    %23 = arith.cmpi slt, %15, %22 : vector<16x16x8xi32>
    %cst_16 = arith.constant 0.000000e+00 : f32
    %24 = vector.broadcast %cst_16 : f32 to vector<16x16x8xf32>
    %25 = arith.select %23, %21, %24 : vector<16x16x8xi1>, vector<16x16x8xf32>
    %26 = tpu.concatenate %20, %14, %25 in 2 : vector<16x16x8xf32>, vector<16x16x8xf32>, vector<16x16x8xf32> -> vector<16x16x24xf32>
    %c1 = arith.constant 1 : index
    %c0_17 = arith.constant 0 : index
    %c0_18 = arith.constant 0 : index
    %27 = vector.load %arg8[%c1, %c0_17, %c0_18] : memref<18x16x24xf32, #tpu.memory_space<vmem>>, vector<16x16x24xf32>
    tpu.vector_store %arg8[%c1, %c0_17, %c0_18], %26 {strides = array<i32>} : memref<18x16x24xf32, #tpu.memory_space<vmem>>, vector<16x16x24xf32>,
    %cst_19 = arith.constant 0.000000e+00 : f32
    %28 = vector.broadcast %cst_19 : f32 to vector<256x8xf32>
    %c0_20 = arith.constant 0 : index
    %c0_21 = arith.constant 0 : index
    %c0_22 = arith.constant 0 : index
    %29 = vector.load %arg8[%c0_20, %c0_21, %c0_22] : memref<18x16x24xf32, #tpu.memory_space<vmem>>, vector<16x16x24xf32>
    %30 = vector.shape_cast %29 : vector<16x16x24xf32> to vector<256x24xf32>
    %c0_23 = arith.constant 0 : index
    %c0_24 = arith.constant 0 : index
    %c0_25 = arith.constant 0 : index
    %31 = vector.load %arg4[%c0_23, %c0_24, %c0_25] : memref<3x24x8xf32, #tpu.memory_space<vmem>>, vector<1x24x8xf32>
    %32 = vector.shape_cast %31 : vector<1x24x8xf32> to vector<24x8xf32>
    %cst_26 = arith.constant dense<0.000000e+00> : vector<256x8xf32>
    %33 = tpu.matmul %30, %32, %cst_26 {dimension_numbers = #tpu.dot_dimension_numbers<[1], [0], [0], [1], [0, 0, 1, 1], [], []>} : vector<256x24xf32>, vector<24x8xf32>, vector<256x8xf32> -> vector<256x8xf32>
    %34 = arith.addf %28, %33 : vector<256x8xf32>
    %c1_27 = arith.constant 1 : index
    %c0_28 = arith.constant 0 : index
    %c0_29 = arith.constant 0 : index
    %35 = vector.load %arg8[%c1_27, %c0_28, %c0_29] : memref<18x16x24xf32, #tpu.memory_space<vmem>>, vector<16x16x24xf32>
    %36 = vector.shape_cast %35 : vector<16x16x24xf32> to vector<256x24xf32>
    %c1_30 = arith.constant 1 : index
    %c0_31 = arith.constant 0 : index
    %c0_32 = arith.constant 0 : index
    %37 = vector.load %arg4[%c1_30, %c0_31, %c0_32] : memref<3x24x8xf32, #tpu.memory_space<vmem>>, vector<1x24x8xf32>
    %38 = vector.shape_cast %37 : vector<1x24x8xf32> to vector<24x8xf32>
    %cst_33 = arith.constant dense<0.000000e+00> : vector<256x8xf32>
    %39 = tpu.matmul %36, %38, %cst_33 {dimension_numbers = #tpu.dot_dimension_numbers<[1], [0], [0], [1], [0, 0, 1, 1], [], []>} : vector<256x24xf32>, vector<24x8xf32>, vector<256x8xf32> -> vector<256x8xf32>
    %40 = arith.addf %34, %39 : vector<256x8xf32>
    %c2 = arith.constant 2 : index
    %c0_34 = arith.constant 0 : index
    %c0_35 = arith.constant 0 : index
    %41 = vector.load %arg8[%c2, %c0_34, %c0_35] : memref<18x16x24xf32, #tpu.memory_space<vmem>>, vector<16x16x24xf32>
    %42 = vector.shape_cast %41 : vector<16x16x24xf32> to vector<256x24xf32>
    %c2_36 = arith.constant 2 : index
    %c0_37 = arith.constant 0 : index
    %c0_38 = arith.constant 0 : index
    %43 = vector.load %arg4[%c2_36, %c0_37, %c0_38] : memref<3x24x8xf32, #tpu.memory_space<vmem>>, vector<1x24x8xf32>
    %44 = vector.shape_cast %43 : vector<1x24x8xf32> to vector<24x8xf32>
    %cst_39 = arith.constant dense<0.000000e+00> : vector<256x8xf32>
    %45 = tpu.matmul %42, %44, %cst_39 {dimension_numbers = #tpu.dot_dimension_numbers<[1], [0], [0], [1], [0, 0, 1, 1], [], []>} : vector<256x24xf32>, vector<24x8xf32>, vector<256x8xf32> -> vector<256x8xf32>
    %46 = arith.addf %40, %45 : vector<256x8xf32>
    %c0_40 = arith.constant 0 : index
    %c0_41 = arith.constant 0 : index
    %47 = vector.load %arg5[%c0_40, %c0_41] : memref<1x8xf32, #tpu.memory_space<vmem>>, vector<1x8xf32>
    %48 = vector.broadcast %47 : vector<1x8xf32> to vector<256x8xf32>
    %49 = arith.addf %46, %48 : vector<256x8xf32>
    %50 = vector.shape_cast %49 : vector<256x8xf32> to vector<16x16x8xf32>
    %c0_42 = arith.constant 0 : index
    %c0_43 = arith.constant 0 : index
    %c0_44 = arith.constant 0 : index
    %c0_45 = arith.constant 0 : index
    %51 = vector.load %arg6[%c0_42, %c0_43, %c0_44, %c0_45] : memref<1x16x16x8xf32, #tpu.memory_space<vmem>>, vector<1x16x16x8xf32>
    %52 = vector.shape_cast %51 : vector<1x16x16x8xf32> to vector<16x16x8xf32>
    %53 = arith.addf %50, %52 : vector<16x16x8xf32>
    %c0_46 = arith.constant 0 : index
    %c0_47 = arith.constant 0 : index
    %c0_48 = arith.constant 0 : index
    %c0_49 = arith.constant 0 : index
    %54 = vector.load %arg7[%c0_46, %c0_47, %c0_48, %c0_49] : memref<1x16x16x8xf32, #tpu.memory_space<vmem>>, vector<1x16x16x8xf32>
    %55 = vector.shape_cast %54 : vector<1x16x16x8xf32> to vector<16x16x8xf32>
    %56 = vector.shape_cast %53 : vector<16x16x8xf32> to vector<1x16x16x8xf32>
    tpu.vector_store %arg7[%c0_46, %c0_47, %c0_48, %c0_49], %56 {strides = array<i32>} : memref<1x16x16x8xf32, #tpu.memory_space<vmem>>, vector<1x16x16x8xf32>,
    return
  }
  func.func @transform_0(%arg0: i32) -> (i32, i32, i32, i32) {
    %c0_i32 = arith.constant 0 : i32
    %c0_i32_0 = arith.constant 0 : i32
    %c0_i32_1 = arith.constant 0 : i32
    %c0_i32_2 = arith.constant 0 : i32
    return %arg0, %c0_i32, %c0_i32_0, %c0_i32_1 : i32, i32, i32, i32
  }
  func.func @transform_1(%arg0: i32) -> (i32, i32) {
    %c0_i32 = arith.constant 0 : i32
    %c0_i32_0 = arith.constant 0 : i32
    %c0_i32_1 = arith.constant 0 : i32
    return %c0_i32, %c0_i32_0 : i32, i32
  }
  func.func @transform_2(%arg0: i32) -> (i32, i32) {
    %c0_i32 = arith.constant 0 : i32
    %c0_i32_0 = arith.constant 0 : i32
    %c0_i32_1 = arith.constant 0 : i32
    return %c0_i32, %c0_i32_0 : i32, i32
  }
  func.func @transform_3(%arg0: i32) -> (i32, i32, i32) {
    %c0_i32 = arith.constant 0 : i32
    %c0_i32_0 = arith.constant 0 : i32
    %c0_i32_1 = arith.constant 0 : i32
    %c0_i32_2 = arith.constant 0 : i32
    return %c0_i32, %c0_i32_0, %c0_i32_1 : i32, i32, i32
  }
  func.func @transform_4(%arg0: i32) -> (i32, i32) {
    %c0_i32 = arith.constant 0 : i32
    %c0_i32_0 = arith.constant 0 : i32
    %c0_i32_1 = arith.constant 0 : i32
    return %c0_i32, %c0_i32_0 : i32, i32
  }
  func.func @transform_5(%arg0: i32) -> (i32, i32, i32, i32) {
    %c0_i32 = arith.constant 0 : i32
    %c0_i32_0 = arith.constant 0 : i32
    %c0_i32_1 = arith.constant 0 : i32
    %c0_i32_2 = arith.constant 0 : i32
    return %arg0, %c0_i32, %c0_i32_0, %c0_i32_1 : i32, i32, i32, i32
  }
  func.func @transform_6(%arg0: i32) -> (i32, i32, i32, i32) {
    %c0_i32 = arith.constant 0 : i32
    %c0_i32_0 = arith.constant 0 : i32
    %c0_i32_1 = arith.constant 0 : i32
    %c0_i32_2 = arith.constant 0 : i32
    return %arg0, %c0_i32, %c0_i32_0, %c0_i32_1 : i32, i32, i32, i32
  }
}

module attributes {stable_mosaic.version = 11 : i64} {
  func.func @kernel(%arg0: i32, %arg1: memref<1x16x16x8xf32, #tpu.memory_space<vmem>>, %arg2: memref<1x8xf32, #tpu.memory_space<vmem>>, %arg3: memref<1x8xf32, #tpu.memory_space<vmem>>, %arg4: memref<3x24x8xf32, #tpu.memory_space<vmem>>, %arg5: memref<1x16x16x8xf32, #tpu.memory_space<vmem>>, %arg6: memref<1x1x8xf32, #tpu.memory_space<vmem>>, %arg7: memref<1x1x8xf32, #tpu.memory_space<vmem>>, %arg8: memref<18x16x24xf32, #tpu.memory_space<vmem>>) attributes {dimension_semantics = [#tpu.dimension_semantics<parallel>], iteration_bounds = array<i64: 2>, scalar_prefetch = 0 : i64, scratch_operands = 1 : i64, tpu.core_type = #tpu.core_type<tc>, window_params = [{transform_indices = @transform_0, window_bounds = array<i64: 1, 16, 16, 8>}, {pipeline_mode = #tpu.pipeline_mode<synchronous>, transform_indices = @transform_1, window_bounds = array<i64: 1, 8>}, {pipeline_mode = #tpu.pipeline_mode<synchronous>, transform_indices = @transform_2, window_bounds = array<i64: 1, 8>}, {pipeline_mode = #tpu.pipeline_mode<synchronous>, transform_indices = @transform_3, window_bounds = array<i64: 3, 24, 8>}, {transform_indices = @transform_4, window_bounds = array<i64: 1, 16, 16, 8>}, {transform_indices = @transform_5, window_bounds = array<i64: 1, 1, 8>}, {transform_indices = @transform_6, window_bounds = array<i64: 1, 1, 8>}]} {
    %cst = arith.constant 0.000000e+00 : f32
    %0 = vector.broadcast %cst : f32 to vector<1x16x24xf32>
    %c0 = arith.constant 0 : index
    %c0_0 = arith.constant 0 : index
    %c0_1 = arith.constant 0 : index
    %1 = vector.load %arg8[%c0, %c0_0, %c0_1] : memref<18x16x24xf32, #tpu.memory_space<vmem>>, vector<1x16x24xf32>
    tpu.vector_store %arg8[%c0, %c0_0, %c0_1], %0 {strides = array<i32>} : memref<18x16x24xf32, #tpu.memory_space<vmem>>, vector<1x16x24xf32>,
    %c17 = arith.constant 17 : index
    %c0_2 = arith.constant 0 : index
    %c0_3 = arith.constant 0 : index
    %2 = vector.load %arg8[%c17, %c0_2, %c0_3] : memref<18x16x24xf32, #tpu.memory_space<vmem>>, vector<1x16x24xf32>
    tpu.vector_store %arg8[%c17, %c0_2, %c0_3], %0 {strides = array<i32>} : memref<18x16x24xf32, #tpu.memory_space<vmem>>, vector<1x16x24xf32>,
    %c0_4 = arith.constant 0 : index
    %c0_5 = arith.constant 0 : index
    %c0_6 = arith.constant 0 : index
    %c0_7 = arith.constant 0 : index
    %3 = vector.load %arg1[%c0_4, %c0_5, %c0_6, %c0_7] : memref<1x16x16x8xf32, #tpu.memory_space<vmem>>, vector<1x16x16x8xf32>
    %4 = vector.shape_cast %3 : vector<1x16x16x8xf32> to vector<16x16x8xf32>
    %c0_8 = arith.constant 0 : index
    %c0_9 = arith.constant 0 : index
    %5 = vector.load %arg2[%c0_8, %c0_9] : memref<1x8xf32, #tpu.memory_space<vmem>>, vector<1x8xf32>
    %6 = vector.shape_cast %5 : vector<1x8xf32> to vector<1x1x8xf32>
    %c0_10 = arith.constant 0 : index
    %c0_11 = arith.constant 0 : index
    %7 = vector.load %arg3[%c0_10, %c0_11] : memref<1x8xf32, #tpu.memory_space<vmem>>, vector<1x8xf32>
    %8 = vector.shape_cast %7 : vector<1x8xf32> to vector<1x1x8xf32>
    %9 = vector.broadcast %6 : vector<1x1x8xf32> to vector<16x16x8xf32>
    %10 = arith.mulf %4, %9 : vector<16x16x8xf32>
    %11 = vector.broadcast %8 : vector<1x1x8xf32> to vector<16x16x8xf32>
    %12 = arith.addf %10, %11 : vector<16x16x8xf32>
    %cst_12 = arith.constant 0.000000e+00 : f32
    %13 = vector.broadcast %cst_12 : f32 to vector<16x16x8xf32>
    %14 = arith.maximumf %12, %13 : vector<16x16x8xf32>
    %15 = tpu.iota {dimensions = array<i32: 1>} : vector<16x16x8xi32>
    %c1_i32 = arith.constant 1 : i32
    %16 = tpu.dynamic_rotate %14 by %c1_i32 dim 1 : vector<16x16x8xf32>, i32 -> vector<16x16x8xf32>
    %c1_i32_13 = arith.constant 1 : i32
    %17 = vector.broadcast %c1_i32_13 : i32 to vector<16x16x8xi32>
    %18 = arith.cmpi sge, %15, %17 : vector<16x16x8xi32>
    %cst_14 = arith.constant 0.000000e+00 : f32
    %19 = vector.broadcast %cst_14 : f32 to vector<16x16x8xf32>
    %20 = arith.select %18, %16, %19 : vector<16x16x8xi1>, vector<16x16x8xf32>
    %c15_i32 = arith.constant 15 : i32
    %21 = tpu.dynamic_rotate %14 by %c15_i32 dim 1 : vector<16x16x8xf32>, i32 -> vector<16x16x8xf32>
    %c15_i32_15 = arith.constant 15 : i32
    %22 = vector.broadcast %c15_i32_15 : i32 to vector<16x16x8xi32>
    %23 = arith.cmpi slt, %15, %22 : vector<16x16x8xi32>
    %cst_16 = arith.constant 0.000000e+00 : f32
    %24 = vector.broadcast %cst_16 : f32 to vector<16x16x8xf32>
    %25 = arith.select %23, %21, %24 : vector<16x16x8xi1>, vector<16x16x8xf32>
    %26 = tpu.concatenate %20, %14, %25 in 2 : vector<16x16x8xf32>, vector<16x16x8xf32>, vector<16x16x8xf32> -> vector<16x16x24xf32>
    %c1 = arith.constant 1 : index
    %c0_17 = arith.constant 0 : index
    %c0_18 = arith.constant 0 : index
    %27 = vector.load %arg8[%c1, %c0_17, %c0_18] : memref<18x16x24xf32, #tpu.memory_space<vmem>>, vector<16x16x24xf32>
    tpu.vector_store %arg8[%c1, %c0_17, %c0_18], %26 {strides = array<i32>} : memref<18x16x24xf32, #tpu.memory_space<vmem>>, vector<16x16x24xf32>,
    %cst_19 = arith.constant 0.000000e+00 : f32
    %28 = vector.broadcast %cst_19 : f32 to vector<256x8xf32>
    %c0_20 = arith.constant 0 : index
    %c0_21 = arith.constant 0 : index
    %c0_22 = arith.constant 0 : index
    %29 = vector.load %arg8[%c0_20, %c0_21, %c0_22] : memref<18x16x24xf32, #tpu.memory_space<vmem>>, vector<16x16x24xf32>
    %30 = vector.shape_cast %29 : vector<16x16x24xf32> to vector<256x24xf32>
    %c0_23 = arith.constant 0 : index
    %c0_24 = arith.constant 0 : index
    %c0_25 = arith.constant 0 : index
    %31 = vector.load %arg4[%c0_23, %c0_24, %c0_25] : memref<3x24x8xf32, #tpu.memory_space<vmem>>, vector<1x24x8xf32>
    %32 = vector.shape_cast %31 : vector<1x24x8xf32> to vector<24x8xf32>
    %cst_26 = arith.constant dense<0.000000e+00> : vector<256x8xf32>
    %33 = tpu.matmul %30, %32, %cst_26 {dimension_numbers = #tpu.dot_dimension_numbers<[1], [0], [0], [1], [0, 0, 1, 1], [], []>} : vector<256x24xf32>, vector<24x8xf32>, vector<256x8xf32> -> vector<256x8xf32>
    %34 = arith.addf %28, %33 : vector<256x8xf32>
    %c1_27 = arith.constant 1 : index
    %c0_28 = arith.constant 0 : index
    %c0_29 = arith.constant 0 : index
    %35 = vector.load %arg8[%c1_27, %c0_28, %c0_29] : memref<18x16x24xf32, #tpu.memory_space<vmem>>, vector<16x16x24xf32>
    %36 = vector.shape_cast %35 : vector<16x16x24xf32> to vector<256x24xf32>
    %c1_30 = arith.constant 1 : index
    %c0_31 = arith.constant 0 : index
    %c0_32 = arith.constant 0 : index
    %37 = vector.load %arg4[%c1_30, %c0_31, %c0_32] : memref<3x24x8xf32, #tpu.memory_space<vmem>>, vector<1x24x8xf32>
    %38 = vector.shape_cast %37 : vector<1x24x8xf32> to vector<24x8xf32>
    %cst_33 = arith.constant dense<0.000000e+00> : vector<256x8xf32>
    %39 = tpu.matmul %36, %38, %cst_33 {dimension_numbers = #tpu.dot_dimension_numbers<[1], [0], [0], [1], [0, 0, 1, 1], [], []>} : vector<256x24xf32>, vector<24x8xf32>, vector<256x8xf32> -> vector<256x8xf32>
    %40 = arith.addf %34, %39 : vector<256x8xf32>
    %c2 = arith.constant 2 : index
    %c0_34 = arith.constant 0 : index
    %c0_35 = arith.constant 0 : index
    %41 = vector.load %arg8[%c2, %c0_34, %c0_35] : memref<18x16x24xf32, #tpu.memory_space<vmem>>, vector<16x16x24xf32>
    %42 = vector.shape_cast %41 : vector<16x16x24xf32> to vector<256x24xf32>
    %c2_36 = arith.constant 2 : index
    %c0_37 = arith.constant 0 : index
    %c0_38 = arith.constant 0 : index
    %43 = vector.load %arg4[%c2_36, %c0_37, %c0_38] : memref<3x24x8xf32, #tpu.memory_space<vmem>>, vector<1x24x8xf32>
    %44 = vector.shape_cast %43 : vector<1x24x8xf32> to vector<24x8xf32>
    %cst_39 = arith.constant dense<0.000000e+00> : vector<256x8xf32>
    %45 = tpu.matmul %42, %44, %cst_39 {dimension_numbers = #tpu.dot_dimension_numbers<[1], [0], [0], [1], [0, 0, 1, 1], [], []>} : vector<256x24xf32>, vector<24x8xf32>, vector<256x8xf32> -> vector<256x8xf32>
    %46 = arith.addf %40, %45 : vector<256x8xf32>
    %cst_40 = arith.constant dense<0.000000e+00> : vector<8xf32>
    %47 = vector.multi_reduction <add>, %46, %cst_40 [0] : vector<256x8xf32> to vector<8xf32>
    %48 = vector.shape_cast %47 : vector<8xf32> to vector<1x8xf32>
    %c0_41 = arith.constant 0 : index
    %c0_42 = arith.constant 0 : index
    %c0_43 = arith.constant 0 : index
    %49 = vector.load %arg6[%c0_41, %c0_42, %c0_43] : memref<1x1x8xf32, #tpu.memory_space<vmem>>, vector<1x1x8xf32>
    %50 = vector.shape_cast %49 : vector<1x1x8xf32> to vector<1x8xf32>
    %51 = vector.shape_cast %48 : vector<1x8xf32> to vector<1x1x8xf32>
    tpu.vector_store %arg6[%c0_41, %c0_42, %c0_43], %51 {strides = array<i32>} : memref<1x1x8xf32, #tpu.memory_space<vmem>>, vector<1x1x8xf32>,
    %52 = arith.mulf %46, %46 : vector<256x8xf32>
    %cst_44 = arith.constant dense<0.000000e+00> : vector<8xf32>
    %53 = vector.multi_reduction <add>, %52, %cst_44 [0] : vector<256x8xf32> to vector<8xf32>
    %54 = vector.shape_cast %53 : vector<8xf32> to vector<1x8xf32>
    %c0_45 = arith.constant 0 : index
    %c0_46 = arith.constant 0 : index
    %c0_47 = arith.constant 0 : index
    %55 = vector.load %arg7[%c0_45, %c0_46, %c0_47] : memref<1x1x8xf32, #tpu.memory_space<vmem>>, vector<1x1x8xf32>
    %56 = vector.shape_cast %55 : vector<1x1x8xf32> to vector<1x8xf32>
    %57 = vector.shape_cast %54 : vector<1x8xf32> to vector<1x1x8xf32>
    tpu.vector_store %arg7[%c0_45, %c0_46, %c0_47], %57 {strides = array<i32>} : memref<1x1x8xf32, #tpu.memory_space<vmem>>, vector<1x1x8xf32>,
    %58 = vector.shape_cast %46 : vector<256x8xf32> to vector<16x16x8xf32>
    %c0_48 = arith.constant 0 : index
    %c0_49 = arith.constant 0 : index
    %c0_50 = arith.constant 0 : index
    %c0_51 = arith.constant 0 : index
    %59 = vector.load %arg5[%c0_48, %c0_49, %c0_50, %c0_51] : memref<1x16x16x8xf32, #tpu.memory_space<vmem>>, vector<1x16x16x8xf32>
    %60 = vector.shape_cast %59 : vector<1x16x16x8xf32> to vector<16x16x8xf32>
    %61 = vector.shape_cast %58 : vector<16x16x8xf32> to vector<1x16x16x8xf32>
    tpu.vector_store %arg5[%c0_48, %c0_49, %c0_50, %c0_51], %61 {strides = array<i32>} : memref<1x16x16x8xf32, #tpu.memory_space<vmem>>, vector<1x16x16x8xf32>,
    return
  }
  func.func @transform_0(%arg0: i32) -> (i32, i32, i32, i32) {
    %c0_i32 = arith.constant 0 : i32
    %c0_i32_0 = arith.constant 0 : i32
    %c0_i32_1 = arith.constant 0 : i32
    %c0_i32_2 = arith.constant 0 : i32
    return %arg0, %c0_i32, %c0_i32_0, %c0_i32_1 : i32, i32, i32, i32
  }
  func.func @transform_1(%arg0: i32) -> (i32, i32) {
    %c0_i32 = arith.constant 0 : i32
    %c0_i32_0 = arith.constant 0 : i32
    %c0_i32_1 = arith.constant 0 : i32
    return %c0_i32, %c0_i32_0 : i32, i32
  }
  func.func @transform_2(%arg0: i32) -> (i32, i32) {
    %c0_i32 = arith.constant 0 : i32
    %c0_i32_0 = arith.constant 0 : i32
    %c0_i32_1 = arith.constant 0 : i32
    return %c0_i32, %c0_i32_0 : i32, i32
  }
  func.func @transform_3(%arg0: i32) -> (i32, i32, i32) {
    %c0_i32 = arith.constant 0 : i32
    %c0_i32_0 = arith.constant 0 : i32
    %c0_i32_1 = arith.constant 0 : i32
    %c0_i32_2 = arith.constant 0 : i32
    return %c0_i32, %c0_i32_0, %c0_i32_1 : i32, i32, i32
  }
  func.func @transform_4(%arg0: i32) -> (i32, i32, i32, i32) {
    %c0_i32 = arith.constant 0 : i32
    %c0_i32_0 = arith.constant 0 : i32
    %c0_i32_1 = arith.constant 0 : i32
    %c0_i32_2 = arith.constant 0 : i32
    return %arg0, %c0_i32, %c0_i32_0, %c0_i32_1 : i32, i32, i32, i32
  }
  func.func @transform_5(%arg0: i32) -> (i32, i32, i32) {
    %c0_i32 = arith.constant 0 : i32
    %c0_i32_0 = arith.constant 0 : i32
    %c0_i32_1 = arith.constant 0 : i32
    return %arg0, %c0_i32, %c0_i32_0 : i32, i32, i32
  }
  func.func @transform_6(%arg0: i32) -> (i32, i32, i32) {
    %c0_i32 = arith.constant 0 : i32
    %c0_i32_0 = arith.constant 0 : i32
    %c0_i32_1 = arith.constant 0 : i32
    return %arg0, %c0_i32, %c0_i32_0 : i32, i32, i32
  }
}

</mosaic_0001>

<llo_original>
// kernel: residual_block_forward.3
$region0: #{residual_block_forward.3}
  #allocation0 [shape = 'u32[]', space=smem, size = 0x4, offset = 0x4, fixed_abs, tag = 'smem constant byte address 0x4 - core index']
  #allocation1 [shape = 'u32[144,128]{1,0:T(1,128)}', space=vmem, size = 0x12000, scoped, tag = 'internal scratch']
  %s0 = inlined_call_operand.vmem [shape: f32[2,16,16,8], index: 0, kind: input, shape index: {}]
  %s1 = inlined_call_operand.vmem [shape: f32[2,1,8], index: 1, kind: output, shape index: {0}]
  %s2 = inlined_call_operand.vmem [shape: f32[2,1,8], index: 2, kind: output, shape index: {1}]
  %3 = xla_tuple %s1, %s2
  %s4 = sld [smem:[#allocation0]]
  $region45: #{residual_block_forward.3} parent=0
    _
  %s6 = ssub.s32 1, %s4
  %s7 = scalar_select 0, %s6, %s4
  loop: start=0, step=1, limit=4
  $region2: #{residual_block_forward.3} parent=0 // loop_pre_header
    _
  $region3: #{residual_block_forward.3} parent=0 // loop_header
    %s9 = sphi 0, %s13
    %p10 = scmp.ge.s32.totalorder %s9, 4
    %s19 = sphi 0, %s21
    %s22 = sphi 0, %s19
    %s23 = sphi 0, %s22
    %s39 = sphi 0, %s23
    %s45 = sphi 0, %s47
    %s48 = sphi 0, %s45
    %s49 = sphi 0, %s48
    %s65 = sphi 0, %s49
    %s71 = sphi 0, %s73
    %s74 = sphi 0, %s71
    %s75 = sphi 0, %s74
    %s91 = sphi 0, %s75
  $region4: #{residual_block_forward.3} parent=0 // loop_header_branch
    %12 = sbr.rel (%p10) target = $region8
  $region5: #{residual_block_forward.3} parent=0 // loop_body
    %s14 = ssub.s32 %s9, 1
    %s15 = ssub.s32 %s9, 2
    %s16 = sadd.s32 %s9, 1
    %s17 = ssub.s32 %s9, %s16
    %p18 = scmp.eq.s32.totalorder %s17, 0
    %s20 = sadd.s32 %s19, 1
    %s21 = scalar_select %p18, %s19, %s20
    %p24 = pneg %p18
    %p25 = scmp.eq.s32.totalorder %s9, 1
    %p26 = por %p24, %p25
    %p27 = scmp.ne.s32.totalorder %s19, %s22
    %p28 = scmp.eq.s32.totalorder %s9, 0
    %p29 = por %p27, %p28
    %p30 = scmp.ne.s32.totalorder %s19, %s22
    %p31 = scmp.eq.s32.totalorder %s14, 1
    %p32 = por %p30, %p31
    %p33 = scmp.ne.s32.totalorder %s22, %s23
    %p34 = scmp.eq.s32.totalorder %s14, 0
    %p35 = por %p33, %p34
    %p36 = scmp.ne.s32.totalorder %s22, %s23
    %p37 = scmp.eq.s32.totalorder %s15, 1
    %p38 = por %p36, %p37
    %p40 = scmp.ne.s32.totalorder %s23, %s39
    %p41 = scmp.eq.s32.totalorder %s15, 0
    %p42 = por %p40, %p41
    %s43 = ssub.s32 %s9, %s16
    %p44 = scmp.eq.s32.totalorder %s43, 0
    %s46 = sadd.s32 %s45, 1
    %s47 = scalar_select %p44, %s45, %s46
    %p50 = pneg %p44
    %p51 = scmp.eq.s32.totalorder %s9, 1
    %p52 = por %p50, %p51
    %p53 = scmp.ne.s32.totalorder %s45, %s48
    %p54 = scmp.eq.s32.totalorder %s9, 0
    %p55 = por %p53, %p54
    %p56 = scmp.ne.s32.totalorder %s45, %s48
    %p57 = scmp.eq.s32.totalorder %s14, 1
    %p58 = por %p56, %p57
    %p59 = scmp.ne.s32.totalorder %s48, %s49
    %p60 = scmp.eq.s32.totalorder %s14, 0
    %p61 = por %p59, %p60
    %p62 = scmp.ne.s32.totalorder %s48, %s49
    %p63 = scmp.eq.s32.totalorder %s15, 1
    %p64 = por %p62, %p63
    %p66 = scmp.ne.s32.totalorder %s49, %s65
    %p67 = scmp.eq.s32.totalorder %s15, 0
    %p68 = por %p66, %p67
    %s69 = ssub.s32 %s9, %s16
    %p70 = scmp.eq.s32.totalorder %s69, 0
    %s72 = sadd.s32 %s71, 1
    %s73 = scalar_select %p70, %s71, %s72
    %p76 = pneg %p70
    %p77 = scmp.eq.s32.totalorder %s9, 1
    %p78 = por %p76, %p77
    %p79 = scmp.ne.s32.totalorder %s71, %s74
    %p80 = scmp.eq.s32.totalorder %s9, 0
    %p81 = por %p79, %p80
    %p82 = scmp.ne.s32.totalorder %s71, %s74
    %p83 = scmp.eq.s32.totalorder %s14, 1
    %p84 = por %p82, %p83
    %p85 = scmp.ne.s32.totalorder %s74, %s75
    %p86 = scmp.eq.s32.totalorder %s14, 0
    %p87 = por %p85, %p86
    %p88 = scmp.ne.s32.totalorder %s74, %s75
    %p89 = scmp.eq.s32.totalorder %s15, 1
    %p90 = por %p88, %p89
    %p92 = scmp.ne.s32.totalorder %s75, %s91
    %p93 = scmp.eq.s32.totalorder %s15, 0
    %p94 = por %p92, %p93
    %p95 = scmp.le.s32.totalorder 1, %s9
    %p96 = scmp.lt.s32.totalorder %s9, 3
    %p97 = pnand %p95, %p96
    %p98 = pneg %p97
    // Predicated region
    $region9: #{residual_block_forward.3} parent=5 // pred_check
      _
    $region10: #{residual_block_forward.3} parent=5 // pred_check_branch
      %100 = sbr.rel (%p97) target = $region12
    $region11: #{residual_block_forward.3} parent=5 // pred_region
      %s101 = ssub.s32 %s9, 1
    $region12: #{residual_block_forward.3} parent=5 // pred_fallthru
      _
    %p102 = scmp.lt.s32.totalorder %s9, 2
    // Predicated region
    $region13: #{residual_block_forward.3} parent=5 // pred_check
      %p103 = pneg %p102
    $region14: #{residual_block_forward.3} parent=5 // pred_check_branch
      %105 = sbr.rel (%p103) target = $region16
    $region15: #{residual_block_forward.3} parent=5 // pred_region
      // Predicated region
      $region17: #{residual_block_forward.3} parent=15 // pred_check
        %p106 = pneg %p29
      $region18: #{residual_block_forward.3} parent=15 // pred_check_branch
        %108 = sbr.rel (%p106) target = $region20
      $region19: #{residual_block_forward.3} parent=15 // pred_region
        %p109 = scmp.lt.s32.totalorder %s9, 1
        %s110 = scalar_select %p109, %s9, 1
        %s111 = smul.addr %s110, 32
        %s112 = smul.addr %s111, 8
        %s113 = scalar_lea.vmem %s0, %s112
      $region20: #{residual_block_forward.3} parent=15 // pred_fallthru
        _
    $region16: #{residual_block_forward.3} parent=5 // pred_fallthru
      _
    %p114 = scmp.le.s32.totalorder 1, %s9
    %p115 = scmp.lt.s32.totalorder %s9, 3
    %p116 = pnand %p114, %p115
    %p117 = pneg %p116
    // Predicated region
    $region21: #{residual_block_forward.3} parent=5 // pred_check
      _
    $region22: #{residual_block_forward.3} parent=5 // pred_check_branch
      %119 = sbr.rel (%p116) target = $region24
    $region23: #{residual_block_forward.3} parent=5 // pred_region
      %s120 = ssub.s32 %s9, 1
      %p121 = scmp.lt.s32.totalorder %s14, 1
      %s122 = scalar_select %p121, %s14, 1
      %s123 = smul.addr %s122, 32
      %s124 = smul.addr %s123, 8
      %s125 = scalar_lea.vmem %s0, %s124
      %p126 = pneg %p35
      %p127 = pneg %p32
      %p128 = pneg %p61
      %p129 = pneg %p58
      %p130 = scmp.lt.s32.totalorder %s14, 1
      %s131 = scalar_select %p130, %s14, 1
      %s132 = scalar_lea.vmem %s1, %s131
      %p133 = pneg %p87
      %p134 = pneg %p84
      %p135 = scmp.lt.s32.totalorder %s14, 1
      %s136 = scalar_select %p135, %s14, 1
      %s137 = scalar_lea.vmem %s2, %s136
      %p138 = scmp.lt.s32.totalorder %s14, 1
      %s139 = scalar_select %p138, %s14, 1
      %s140 = smul.addr %s139, 32
      %s141 = smul.addr %s140, 8
      %s142 = scalar_lea.vmem %s0, %s141
      %p143 = scmp.lt.s32.totalorder %s14, 1
      %s144 = scalar_select %p143, %s14, 1
      %s145 = scalar_lea.vmem %s1, %s144
      %p146 = scmp.lt.s32.totalorder %s14, 1
      %s147 = scalar_select %p146, %s14, 1
      %s148 = scalar_lea.vmem %s2, %s147
      %v149 = vld [vmem:[%s142] sm:$0xff]
      %v150 = vld [vmem:[%s142 + $0x8] sm:$0xff]
      %v151 = vld [vmem:[%s142 + $0x10] sm:$0xff]
      %v152 = vld [vmem:[%s142 + $0x18] sm:$0xff]
      %v153 = vld [vmem:[%s142 + $0x20] sm:$0xff]
      %v154 = vld [vmem:[%s142 + $0x28] sm:$0xff]
      %v155 = vld [vmem:[%s142 + $0x30] sm:$0xff]
      %v156 = vld [vmem:[%s142 + $0x38] sm:$0xff]
      %v157 = vld [vmem:[%s142 + $0x40] sm:$0xff]
      %v158 = vld [vmem:[%s142 + $0x48] sm:$0xff]
      %v159 = vld [vmem:[%s142 + $0x50] sm:$0xff]
      %v160 = vld [vmem:[%s142 + $0x58] sm:$0xff]
      %v161 = vld [vmem:[%s142 + $0x60] sm:$0xff]
      %v162 = vld [vmem:[%s142 + $0x68] sm:$0xff]
      %v163 = vld [vmem:[%s142 + $0x70] sm:$0xff]
      %v164 = vld [vmem:[%s142 + $0x78] sm:$0xff]
      %v165 = vld [vmem:[%s142 + $0x80] sm:$0xff]
      %v166 = vld [vmem:[%s142 + $0x88] sm:$0xff]
      %v167 = vld [vmem:[%s142 + $0x90] sm:$0xff]
      %v168 = vld [vmem:[%s142 + $0x98] sm:$0xff]
      %v169 = vld [vmem:[%s142 + $0xa0] sm:$0xff]
      %v170 = vld [vmem:[%s142 + $0xa8] sm:$0xff]
      %v171 = vld [vmem:[%s142 + $0xb0] sm:$0xff]
      %v172 = vld [vmem:[%s142 + $0xb8] sm:$0xff]
      %v173 = vld [vmem:[%s142 + $0xc0] sm:$0xff]
      %v174 = vld [vmem:[%s142 + $0xc8] sm:$0xff]
      %v175 = vld [vmem:[%s142 + $0xd0] sm:$0xff]
      %v176 = vld [vmem:[%s142 + $0xd8] sm:$0xff]
      %v177 = vld [vmem:[%s142 + $0xe0] sm:$0xff]
      %v178 = vld [vmem:[%s142 + $0xe8] sm:$0xff]
      %v179 = vld [vmem:[%s142 + $0xf0] sm:$0xff]
      %v180 = vld [vmem:[%s142 + $0xf8] sm:$0xff]
      %vm181 = vcmask 64512
      %v182 = vsel %vm181, %v149, 0.0
      %v183 = vsel %vm181, %v150, 0.0
      %v184 = vadd.f32 %v182, %v183
      %v185 = vsel %vm181, %v151, 0.0
      %v186 = vadd.f32 %v184, %v185
      %v187 = vsel %vm181, %v152, 0.0
      %v188 = vadd.f32 %v186, %v187
      %v189 = vsel %vm181, %v153, 0.0
      %v190 = vadd.f32 %v188, %v189
      %v191 = vsel %vm181, %v154, 0.0
      %v192 = vadd.f32 %v190, %v191
      %v193 = vsel %vm181, %v155, 0.0
      %v194 = vadd.f32 %v192, %v193
      %v195 = vsel %vm181, %v156, 0.0
      %v196 = vadd.f32 %v194, %v195
      %v197 = vsel %vm181, %v157, 0.0
      %v198 = vadd.f32 %v196, %v197
      %v199 = vsel %vm181, %v158, 0.0
      %v200 = vadd.f32 %v198, %v199
      %v201 = vsel %vm181, %v159, 0.0
      %v202 = vadd.f32 %v200, %v201
      %v203 = vsel %vm181, %v160, 0.0
      %v204 = vadd.f32 %v202, %v203
      %v205 = vsel %vm181, %v161, 0.0
      %v206 = vadd.f32 %v204, %v205
      %v207 = vsel %vm181, %v162, 0.0
      %v208 = vadd.f32 %v206, %v207
      %v209 = vsel %vm181, %v163, 0.0
      %v210 = vadd.f32 %v208, %v209
      %v211 = vsel %vm181, %v164, 0.0
      %v212 = vadd.f32 %v210, %v211
      %v213 = vsel %vm181, %v165, 0.0
      %v214 = vadd.f32 %v212, %v213
      %v215 = vsel %vm181, %v166, 0.0
      %v216 = vadd.f32 %v214, %v215
      %v217 = vsel %vm181, %v167, 0.0
      %v218 = vadd.f32 %v216, %v217
      %v219 = vsel %vm181, %v168, 0.0
      %v220 = vadd.f32 %v218, %v219
      %v221 = vsel %vm181, %v169, 0.0
      %v222 = vadd.f32 %v220, %v221
      %v223 = vsel %vm181, %v170, 0.0
      %v224 = vadd.f32 %v222, %v223
      %v225 = vsel %vm181, %v171, 0.0
      %v226 = vadd.f32 %v224, %v225
      %v227 = vsel %vm181, %v172, 0.0
      %v228 = vadd.f32 %v226, %v227
      %v229 = vsel %vm181, %v173, 0.0
      %v230 = vadd.f32 %v228, %v229
      %v231 = vsel %vm181, %v174, 0.0
      %v232 = vadd.f32 %v230, %v231
      %v233 = vsel %vm181, %v175, 0.0
      %v234 = vadd.f32 %v232, %v233
      %v235 = vsel %vm181, %v176, 0.0
      %v236 = vadd.f32 %v234, %v235
      %v237 = vsel %vm181, %v177, 0.0
      %v238 = vadd.f32 %v236, %v237
      %v239 = vsel %vm181, %v178, 0.0
      %v240 = vadd.f32 %v238, %v239
      %v241 = vsel %vm181, %v179, 0.0
      %v242 = vadd.f32 %v240, %v241
      %v243 = vsel %vm181, %v180, 0.0
      %v244 = vadd.f32 %v242, %v243
      %v245 = vrot.slane %v244, 4
      %v246 = vadd.f32 %v244, %v245
      %v247 = vrot.slane %v246, 2
      %v248 = vadd.f32 %v246, %v247
      %v249 = vrot.slane %v248, 1
      %v250 = vadd.f32 %v248, %v249
      %vm251 = vcmask 57344
      %252 = vst.msk [vmem:[%s145] sm:$0x1] %vm251, %v250
      %v253 = vmul.f32 %v149, %v149
      %v254 = vmul.f32 %v150, %v150
      %v255 = vmul.f32 %v151, %v151
      %v256 = vmul.f32 %v152, %v152
      %v257 = vmul.f32 %v153, %v153
      %v258 = vmul.f32 %v154, %v154
      %v259 = vmul.f32 %v155, %v155
      %v260 = vmul.f32 %v156, %v156
      %v261 = vmul.f32 %v157, %v157
      %v262 = vmul.f32 %v158, %v158
      %v263 = vmul.f32 %v159, %v159
      %v264 = vmul.f32 %v160, %v160
      %v265 = vmul.f32 %v161, %v161
      %v266 = vmul.f32 %v162, %v162
      %v267 = vmul.f32 %v163, %v163
      %v268 = vmul.f32 %v164, %v164
      %v269 = vmul.f32 %v165, %v165
      %v270 = vmul.f32 %v166, %v166
      %v271 = vmul.f32 %v167, %v167
      %v272 = vmul.f32 %v168, %v168
      %v273 = vmul.f32 %v169, %v169
      %v274 = vmul.f32 %v170, %v170
      %v275 = vmul.f32 %v171, %v171
      %v276 = vmul.f32 %v172, %v172
      %v277 = vmul.f32 %v173, %v173
      %v278 = vmul.f32 %v174, %v174
      %v279 = vmul.f32 %v175, %v175
      %v280 = vmul.f32 %v176, %v176
      %v281 = vmul.f32 %v177, %v177
      %v282 = vmul.f32 %v178, %v178
      %v283 = vmul.f32 %v179, %v179
      %v284 = vmul.f32 %v180, %v180
      %v285 = vsel %vm181, %v253, 0.0
      %v286 = vsel %vm181, %v254, 0.0
      %v287 = vadd.f32 %v285, %v286
      %v288 = vsel %vm181, %v255, 0.0
      %v289 = vadd.f32 %v287, %v288
      %v290 = vsel %vm181, %v256, 0.0
      %v291 = vadd.f32 %v289, %v290
      %v292 = vsel %vm181, %v257, 0.0
      %v293 = vadd.f32 %v291, %v292
      %v294 = vsel %vm181, %v258, 0.0
      %v295 = vadd.f32 %v293, %v294
      %v296 = vsel %vm181, %v259, 0.0
      %v297 = vadd.f32 %v295, %v296
      %v298 = vsel %vm181, %v260, 0.0
      %v299 = vadd.f32 %v297, %v298
      %v300 = vsel %vm181, %v261, 0.0
      %v301 = vadd.f32 %v299, %v300
      %v302 = vsel %vm181, %v262, 0.0
      %v303 = vadd.f32 %v301, %v302
      %v304 = vsel %vm181, %v263, 0.0
      %v305 = vadd.f32 %v303, %v304
      %v306 = vsel %vm181, %v264, 0.0
      %v307 = vadd.f32 %v305, %v306
      %v308 = vsel %vm181, %v265, 0.0
      %v309 = vadd.f32 %v307, %v308
      %v310 = vsel %vm181, %v266, 0.0
      %v311 = vadd.f32 %v309, %v310
      %v312 = vsel %vm181, %v267, 0.0
      %v313 = vadd.f32 %v311, %v312
      %v314 = vsel %vm181, %v268, 0.0
      %v315 = vadd.f32 %v313, %v314
      %v316 = vsel %vm181, %v269, 0.0
      %v317 = vadd.f32 %v315, %v316
      %v318 = vsel %vm181, %v270, 0.0
      %v319 = vadd.f32 %v317, %v318
      %v320 = vsel %vm181, %v271, 0.0
      %v321 = vadd.f32 %v319, %v320
      %v322 = vsel %vm181, %v272, 0.0
      %v323 = vadd.f32 %v321, %v322
      %v324 = vsel %vm181, %v273, 0.0
      %v325 = vadd.f32 %v323, %v324
      %v326 = vsel %vm181, %v274, 0.0
      %v327 = vadd.f32 %v325, %v326
      %v328 = vsel %vm181, %v275, 0.0
      %v329 = vadd.f32 %v327, %v328
      %v330 = vsel %vm181, %v276, 0.0
      %v331 = vadd.f32 %v329, %v330
      %v332 = vsel %vm181, %v277, 0.0
      %v333 = vadd.f32 %v331, %v332
      %v334 = vsel %vm181, %v278, 0.0
      %v335 = vadd.f32 %v333, %v334
      %v336 = vsel %vm181, %v279, 0.0
      %v337 = vadd.f32 %v335, %v336
      %v338 = vsel %vm181, %v280, 0.0
      %v339 = vadd.f32 %v337, %v338
      %v340 = vsel %vm181, %v281, 0.0
      %v341 = vadd.f32 %v339, %v340
      %v342 = vsel %vm181, %v282, 0.0
      %v343 = vadd.f32 %v341, %v342
      %v344 = vsel %vm181, %v283, 0.0
      %v345 = vadd.f32 %v343, %v344
      %v346 = vsel %vm181, %v284, 0.0
      %v347 = vadd.f32 %v345, %v346
      %v348 = vrot.slane %v347, 4
      %v349 = vadd.f32 %v347, %v348
      %v350 = vrot.slane %v349, 2
      %v351 = vadd.f32 %v349, %v350
      %v352 = vrot.slane %v351, 1
      %v353 = vadd.f32 %v351, %v352
      %354 = vst.msk [vmem:[%s148] sm:$0x1] %vm251, %v353
      %p355 = scmp.lt.s32.totalorder %s14, 1
      %s356 = scalar_select %p355, %s14, 1
      %s357 = scalar_lea.vmem %s1, %s356
      %p358 = scmp.lt.s32.totalorder %s14, 1
      %s359 = scalar_select %p358, %s14, 1
      %s360 = scalar_lea.vmem %s2, %s359
      // Predicated region
      $region25: #{residual_block_forward.3} parent=23 // pred_check
        %p361 = pneg %p58
      $region26: #{residual_block_forward.3} parent=23 // pred_check_branch
        %363 = sbr.rel (%p361) target = $region28
      $region27: #{residual_block_forward.3} parent=23 // pred_region
        _
      $region28: #{residual_block_forward.3} parent=23 // pred_fallthru
        _
      // Predicated region
      $region29: #{residual_block_forward.3} parent=23 // pred_check
        %p364 = pneg %p84
      $region30: #{residual_block_forward.3} parent=23 // pred_check_branch
        %366 = sbr.rel (%p364) target = $region32
      $region31: #{residual_block_forward.3} parent=23 // pred_region
        _
      $region32: #{residual_block_forward.3} parent=23 // pred_fallthru
        _
    $region24: #{residual_block_forward.3} parent=5 // pred_fallthru
      _
    %p367 = scmp.le.s32.totalorder 2, %s9
    // Predicated region
    $region33: #{residual_block_forward.3} parent=5 // pred_check
      %p368 = pneg %p367
    $region34: #{residual_block_forward.3} parent=5 // pred_check_branch
      %370 = sbr.rel (%p368) target = $region36
    $region35: #{residual_block_forward.3} parent=5 // pred_region
      %s371 = ssub.s32 %s9, 2
      // Predicated region
      $region37: #{residual_block_forward.3} parent=35 // pred_check
        %p372 = pneg %p64
      $region38: #{residual_block_forward.3} parent=35 // pred_check_branch
        %374 = sbr.rel (%p372) target = $region40
      $region39: #{residual_block_forward.3} parent=35 // pred_region
        %p375 = scmp.lt.s32.totalorder %s15, 1
        %s376 = scalar_select %p375, %s15, 1
        %s377 = scalar_lea.vmem %s1, %s376
      $region40: #{residual_block_forward.3} parent=35 // pred_fallthru
        _
      // Predicated region
      $region41: #{residual_block_forward.3} parent=35 // pred_check
        %p378 = pneg %p90
      $region42: #{residual_block_forward.3} parent=35 // pred_check_branch
        %380 = sbr.rel (%p378) target = $region44
      $region43: #{residual_block_forward.3} parent=35 // pred_region
        %p381 = scmp.lt.s32.totalorder %s15, 1
        %s382 = scalar_select %p381, %s15, 1
        %s383 = scalar_lea.vmem %s2, %s382
      $region44: #{residual_block_forward.3} parent=35 // pred_fallthru
        _
    $region36: #{residual_block_forward.3} parent=5 // pred_fallthru
      _
  $region6: #{residual_block_forward.3} parent=0 // loop_footer
    %s13 = sadd.s32 1, %s9
  $region7: #{residual_block_forward.3} parent=0 // loop_footer_branch
    %8 = sbr.rel target = $region3
  $region8: #{residual_block_forward.3} parent=0 // loop_exit
    _

// kernel: residual_block_forward.4
$region0: #{residual_block_forward.4}
  #allocation0 [shape = 'u32[]', space=smem, size = 0x4, offset = 0x4, fixed_abs, tag = 'smem constant byte address 0x4 - core index']
  #allocation1 [shape = 'u32[144,128]{1,0:T(1,128)}', space=vmem, size = 0x12000, scoped, tag = 'internal scratch']
  #allocation2 [shape = 'f32[18,16,24]{2,1,0:T(8,128)}', space=vmem, size = 0x24000, scoped, tag = 'scratch operand']
  %s0 = inlined_call_operand.vmem [shape: f32[2,16,16,8], index: 0, kind: input, shape index: {}]
  %s1 = inlined_call_operand.vmem [shape: f32[1,8], index: 1, kind: input, shape index: {}]
  %s2 = inlined_call_operand.vmem [shape: f32[1,8], index: 2, kind: input, shape index: {}]
  %s3 = inlined_call_operand.vmem [shape: f32[3,24,8], index: 3, kind: input, shape index: {}]
  %s4 = inlined_call_operand.vmem [shape: f32[2,16,16,8], index: 4, kind: output, shape index: {0}]
  %s5 = inlined_call_operand.vmem [shape: f32[2,1,8], index: 5, kind: output, shape index: {1}]
  %s6 = inlined_call_operand.vmem [shape: f32[2,1,8], index: 6, kind: output, shape index: {2}]
  %7 = xla_tuple %s4, %s5, %s6
  %s8 = sld [smem:[#allocation0]]
  $region65: #{residual_block_forward.4} parent=0
    _
  %s10 = ssub.s32 1, %s8
  %s11 = scalar_select 0, %s10, %s8
  loop: start=0, step=1, limit=4
  $region2: #{residual_block_forward.4} parent=0 // loop_pre_header
    _
  $region3: #{residual_block_forward.4} parent=0 // loop_header
    %s13 = sphi 0, %s17
    %p14 = scmp.ge.s32.totalorder %s13, 4
    %s23 = sphi 0, %s25
    %s26 = sphi 0, %s23
    %s27 = sphi 0, %s26
    %s43 = sphi 0, %s27
    %s47 = sphi 0, %s47
    %s49 = sphi 0, %s47
    %s50 = sphi 0, %s49
    %s64 = sphi 0, %s50
    %s68 = sphi 0, %s68
    %s70 = sphi 0, %s68
    %s71 = sphi 0, %s70
    %s85 = sphi 0, %s71
    %s89 = sphi 0, %s89
    %s91 = sphi 0, %s89
    %s92 = sphi 0, %s91
    %s106 = sphi 0, %s92
    %s112 = sphi 0, %s114
    %s115 = sphi 0, %s112
    %s116 = sphi 0, %s115
    %s132 = sphi 0, %s116
    %s138 = sphi 0, %s140
    %s141 = sphi 0, %s138
    %s142 = sphi 0, %s141
    %s158 = sphi 0, %s142
    %s164 = sphi 0, %s166
    %s167 = sphi 0, %s164
    %s168 = sphi 0, %s167
    %s184 = sphi 0, %s168
  $region4: #{residual_block_forward.4} parent=0 // loop_header_branch
    %16 = sbr.rel (%p14) target = $region8
  $region5: #{residual_block_forward.4} parent=0 // loop_body
    %s18 = ssub.s32 %s13, 1
    %s19 = ssub.s32 %s13, 2
    %s20 = sadd.s32 %s13, 1
    %s21 = ssub.s32 %s13, %s20
    %p22 = scmp.eq.s32.totalorder %s21, 0
    %s24 = sadd.s32 %s23, 1
    %s25 = scalar_select %p22, %s23, %s24
    %p28 = pneg %p22
    %p29 = scmp.eq.s32.totalorder %s13, 1
    %p30 = por %p28, %p29
    %p31 = scmp.ne.s32.totalorder %s23, %s26
    %p32 = scmp.eq.s32.totalorder %s13, 0
    %p33 = por %p31, %p32
    %p34 = scmp.ne.s32.totalorder %s23, %s26
    %p35 = scmp.eq.s32.totalorder %s18, 1
    %p36 = por %p34, %p35
    %p37 = scmp.ne.s32.totalorder %s26, %s27
    %p38 = scmp.eq.s32.totalorder %s18, 0
    %p39 = por %p37, %p38
    %p40 = scmp.ne.s32.totalorder %s26, %s27
    %p41 = scmp.eq.s32.totalorder %s19, 1
    %p42 = por %p40, %p41
    %p44 = scmp.ne.s32.totalorder %s27, %s43
    %p45 = scmp.eq.s32.totalorder %s19, 0
    %p46 = por %p44, %p45
    %s48 = sadd.s32 %s47, 1
    %p51 = scmp.eq.s32.totalorder %s13, 1
    %p52 = scmp.ne.s32.totalorder %s47, %s49
    %p53 = scmp.eq.s32.totalorder %s13, 0
    %p54 = por %p52, %p53
    %p55 = scmp.ne.s32.totalorder %s47, %s49
    %p56 = scmp.eq.s32.totalorder %s18, 1
    %p57 = por %p55, %p56
    %p58 = scmp.ne.s32.totalorder %s49, %s50
    %p59 = scmp.eq.s32.totalorder %s18, 0
    %p60 = por %p58, %p59
    %p61 = scmp.ne.s32.totalorder %s49, %s50
    %p62 = scmp.eq.s32.totalorder %s19, 1
    %p63 = por %p61, %p62
    %p65 = scmp.ne.s32.totalorder %s50, %s64
    %p66 = scmp.eq.s32.totalorder %s19, 0
    %p67 = por %p65, %p66
    %s69 = sadd.s32 %s68, 1
    %p72 = scmp.eq.s32.totalorder %s13, 1
    %p73 = scmp.ne.s32.totalorder %s68, %s70
    %p74 = scmp.eq.s32.totalorder %s13, 0
    %p75 = por %p73, %p74
    %p76 = scmp.ne.s32.totalorder %s68, %s70
    %p77 = scmp.eq.s32.totalorder %s18, 1
    %p78 = por %p76, %p77
    %p79 = scmp.ne.s32.totalorder %s70, %s71
    %p80 = scmp.eq.s32.totalorder %s18, 0
    %p81 = por %p79, %p80
    %p82 = scmp.ne.s32.totalorder %s70, %s71
    %p83 = scmp.eq.s32.totalorder %s19, 1
    %p84 = por %p82, %p83
    %p86 = scmp.ne.s32.totalorder %s71, %s85
    %p87 = scmp.eq.s32.totalorder %s19, 0
    %p88 = por %p86, %p87
    %s90 = sadd.s32 %s89, 1
    %p93 = scmp.eq.s32.totalorder %s13, 1
    %p94 = scmp.ne.s32.totalorder %s89, %s91
    %p95 = scmp.eq.s32.totalorder %s13, 0
    %p96 = por %p94, %p95
    %p97 = scmp.ne.s32.totalorder %s89, %s91
    %p98 = scmp.eq.s32.totalorder %s18, 1
    %p99 = por %p97, %p98
    %p100 = scmp.ne.s32.totalorder %s91, %s92
    %p101 = scmp.eq.s32.totalorder %s18, 0
    %p102 = por %p100, %p101
    %p103 = scmp.ne.s32.totalorder %s91, %s92
    %p104 = scmp.eq.s32.totalorder %s19, 1
    %p105 = por %p103, %p104
    %p107 = scmp.ne.s32.totalorder %s92, %s106
    %p108 = scmp.eq.s32.totalorder %s19, 0
    %p109 = por %p107, %p108
    %s110 = ssub.s32 %s13, %s20
    %p111 = scmp.eq.s32.totalorder %s110, 0
    %s113 = sadd.s32 %s112, 1
    %s114 = scalar_select %p111, %s112, %s113
    %p117 = pneg %p111
    %p118 = scmp.eq.s32.totalorder %s13, 1
    %p119 = por %p117, %p118
    %p120 = scmp.ne.s32.totalorder %s112, %s115
    %p121 = scmp.eq.s32.totalorder %s13, 0
    %p122 = por %p120, %p121
    %p123 = scmp.ne.s32.totalorder %s112, %s115
    %p124 = scmp.eq.s32.totalorder %s18, 1
    %p125 = por %p123, %p124
    %p126 = scmp.ne.s32.totalorder %s115, %s116
    %p127 = scmp.eq.s32.totalorder %s18, 0
    %p128 = por %p126, %p127
    %p129 = scmp.ne.s32.totalorder %s115, %s116
    %p130 = scmp.eq.s32.totalorder %s19, 1
    %p131 = por %p129, %p130
    %p133 = scmp.ne.s32.totalorder %s116, %s132
    %p134 = scmp.eq.s32.totalorder %s19, 0
    %p135 = por %p133, %p134
    %s136 = ssub.s32 %s13, %s20
    %p137 = scmp.eq.s32.totalorder %s136, 0
    %s139 = sadd.s32 %s138, 1
    %s140 = scalar_select %p137, %s138, %s139
    %p143 = pneg %p137
    %p144 = scmp.eq.s32.totalorder %s13, 1
    %p145 = por %p143, %p144
    %p146 = scmp.ne.s32.totalorder %s138, %s141
    %p147 = scmp.eq.s32.totalorder %s13, 0
    %p148 = por %p146, %p147
    %p149 = scmp.ne.s32.totalorder %s138, %s141
    %p150 = scmp.eq.s32.totalorder %s18, 1
    %p151 = por %p149, %p150
    %p152 = scmp.ne.s32.totalorder %s141, %s142
    %p153 = scmp.eq.s32.totalorder %s18, 0
    %p154 = por %p152, %p153
    %p155 = scmp.ne.s32.totalorder %s141, %s142
    %p156 = scmp.eq.s32.totalorder %s19, 1
    %p157 = por %p155, %p156
    %p159 = scmp.ne.s32.totalorder %s142, %s158
    %p160 = scmp.eq.s32.totalorder %s19, 0
    %p161 = por %p159, %p160
    %s162 = ssub.s32 %s13, %s20
    %p163 = scmp.eq.s32.totalorder %s162, 0
    %s165 = sadd.s32 %s164, 1
    %s166 = scalar_select %p163, %s164, %s165
    %p169 = pneg %p163
    %p170 = scmp.eq.s32.totalorder %s13, 1
    %p171 = por %p169, %p170
    %p172 = scmp.ne.s32.totalorder %s164, %s167
    %p173 = scmp.eq.s32.totalorder %s13, 0
    %p174 = por %p172, %p173
    %p175 = scmp.ne.s32.totalorder %s164, %s167
    %p176 = scmp.eq.s32.totalorder %s18, 1
    %p177 = por %p175, %p176
    %p178 = scmp.ne.s32.totalorder %s167, %s168
    %p179 = scmp.eq.s32.totalorder %s18, 0
    %p180 = por %p178, %p179
    %p181 = scmp.ne.s32.totalorder %s167, %s168
    %p182 = scmp.eq.s32.totalorder %s19, 1
    %p183 = por %p181, %p182
    %p185 = scmp.ne.s32.totalorder %s168, %s184
    %p186 = scmp.eq.s32.totalorder %s19, 0
    %p187 = por %p185, %p186
    %p188 = scmp.le.s32.totalorder 1, %s13
    %p189 = scmp.lt.s32.totalorder %s13, 3
    %p190 = pnand %p188, %p189
    %p191 = pneg %p190
    // Predicated region
    $region9: #{residual_block_forward.4} parent=5 // pred_check
      _
    $region10: #{residual_block_forward.4} parent=5 // pred_check_branch
      %193 = sbr.rel (%p190) target = $region12
    $region11: #{residual_block_forward.4} parent=5 // pred_region
      %s194 = ssub.s32 %s13, 1
      // Predicated region
      $region13: #{residual_block_forward.4} parent=11 // pred_check
        %p195 = pneg %p60
      $region14: #{residual_block_forward.4} parent=11 // pred_check_branch
        %197 = sbr.rel (%p195) target = $region16
      $region15: #{residual_block_forward.4} parent=11 // pred_region
        _
      $region16: #{residual_block_forward.4} parent=11 // pred_fallthru
        _
      // Predicated region
      $region17: #{residual_block_forward.4} parent=11 // pred_check
        %p198 = pneg %p81
      $region18: #{residual_block_forward.4} parent=11 // pred_check_branch
        %200 = sbr.rel (%p198) target = $region20
      $region19: #{residual_block_forward.4} parent=11 // pred_region
        _
      $region20: #{residual_block_forward.4} parent=11 // pred_fallthru
        _
      // Predicated region
      $region21: #{residual_block_forward.4} parent=11 // pred_check
        %p201 = pneg %p102
      $region22: #{residual_block_forward.4} parent=11 // pred_check_branch
        %203 = sbr.rel (%p201) target = $region24
      $region23: #{residual_block_forward.4} parent=11 // pred_region
        _
      $region24: #{residual_block_forward.4} parent=11 // pred_fallthru
        _
    $region12: #{residual_block_forward.4} parent=5 // pred_fallthru
      _
    %p204 = scmp.lt.s32.totalorder %s13, 2
    // Predicated region
    $region25: #{residual_block_forward.4} parent=5 // pred_check
      %p205 = pneg %p204
    $region26: #{residual_block_forward.4} parent=5 // pred_check_branch
      %207 = sbr.rel (%p205) target = $region28
    $region27: #{residual_block_forward.4} parent=5 // pred_region
      // Predicated region
      $region29: #{residual_block_forward.4} parent=27 // pred_check
        %p208 = pneg %p33
      $region30: #{residual_block_forward.4} parent=27 // pred_check_branch
        %210 = sbr.rel (%p208) target = $region32
      $region31: #{residual_block_forward.4} parent=27 // pred_region
        %p211 = scmp.lt.s32.totalorder %s13, 1
        %s212 = scalar_select %p211, %s13, 1
        %s213 = smul.addr %s212, 32
        %s214 = smul.addr %s213, 8
        %s215 = scalar_lea.vmem %s0, %s214
      $region32: #{residual_block_forward.4} parent=27 // pred_fallthru
        _
    $region28: #{residual_block_forward.4} parent=5 // pred_fallthru
      _
    %p216 = scmp.le.s32.totalorder 1, %s13
    %p217 = scmp.lt.s32.totalorder %s13, 3
    %p218 = pnand %p216, %p217
    %p219 = pneg %p218
    // Predicated region
    $region33: #{residual_block_forward.4} parent=5 // pred_check
      _
    $region34: #{residual_block_forward.4} parent=5 // pred_check_branch
      %221 = sbr.rel (%p218) target = $region36
    $region35: #{residual_block_forward.4} parent=5 // pred_region
      %s222 = ssub.s32 %s13, 1
      %p223 = scmp.lt.s32.totalorder %s18, 1
      %s224 = scalar_select %p223, %s18, 1
      %s225 = smul.addr %s224, 32
      %s226 = smul.addr %s225, 8
      %s227 = scalar_lea.vmem %s0, %s226
      %p228 = pneg %p39
      %p229 = pneg %p36
      %p230 = pneg %p60
      %p231 = pneg %p57
      %p232 = pneg %p81
      %p233 = pneg %p78
      %p234 = pneg %p102
      %p235 = pneg %p99
      %p236 = pneg %p128
      %p237 = pneg %p125
      %p238 = scmp.lt.s32.totalorder %s18, 1
      %s239 = scalar_select %p238, %s18, 1
      %s240 = smul.addr %s239, 32
      %s241 = smul.addr %s240, 8
      %s242 = scalar_lea.vmem %s4, %s241
      %p243 = pneg %p154
      %p244 = pneg %p151
      %p245 = scmp.lt.s32.totalorder %s18, 1
      %s246 = scalar_select %p245, %s18, 1
      %s247 = scalar_lea.vmem %s5, %s246
      %p248 = pneg %p180
      %p249 = pneg %p177
      %p250 = scmp.lt.s32.totalorder %s18, 1
      %s251 = scalar_select %p250, %s18, 1
      %s252 = scalar_lea.vmem %s6, %s251
      %p253 = scmp.lt.s32.totalorder %s18, 1
      %s254 = scalar_select %p253, %s18, 1
      %s255 = smul.addr %s254, 32
      %s256 = smul.addr %s255, 8
      %s257 = scalar_lea.vmem %s0, %s256
      %p258 = scmp.lt.s32.totalorder %s18, 1
      %s259 = scalar_select %p258, %s18, 1
      %s260 = smul.addr %s259, 32
      %s261 = smul.addr %s260, 8
      %s262 = scalar_lea.vmem %s4, %s261
      %p263 = scmp.lt.s32.totalorder %s18, 1
      %s264 = scalar_select %p263, %s18, 1
      %s265 = scalar_lea.vmem %s5, %s264
      %p266 = scmp.lt.s32.totalorder %s18, 1
      %s267 = scalar_select %p266, %s18, 1
      %s268 = scalar_lea.vmem %s6, %s267
      %vm269 = vcmask 195584
      %270 = vst.msk [vmem:[#allocation2] sm:$0xff] %vm269, 0.0
      %271 = vst.msk [vmem:[#allocation2 + $0x8] sm:$0xff] %vm269, 0.0
      %s272 = scalar_lea.vmem [#allocation2], 272
      %273 = vst.msk [vmem:[%s272] sm:$0xff] %vm269, 0.0
      %274 = vst.msk [vmem:[%s272 + $0x8] sm:$0xff] %vm269, 0.0
      %v275 = vld [vmem:[%s257] sm:$0xff]
      %v276 = vld [vmem:[%s257 + $0x8] sm:$0xff]
      %v277 = vld [vmem:[%s257 + $0x10] sm:$0xff]
      %v278 = vld [vmem:[%s257 + $0x18] sm:$0xff]
      %v279 = vld [vmem:[%s257 + $0x20] sm:$0xff]
      %v280 = vld [vmem:[%s257 + $0x28] sm:$0xff]
      %v281 = vld [vmem:[%s257 + $0x30] sm:$0xff]
      %v282 = vld [vmem:[%s257 + $0x38] sm:$0xff]
      %v283 = vld [vmem:[%s257 + $0x40] sm:$0xff]
      %v284 = vld [vmem:[%s257 + $0x48] sm:$0xff]
      %v285 = vld [vmem:[%s257 + $0x50] sm:$0xff]
      %v286 = vld [vmem:[%s257 + $0x58] sm:$0xff]
      %v287 = vld [vmem:[%s257 + $0x60] sm:$0xff]
      %v288 = vld [vmem:[%s257 + $0x68] sm:$0xff]
      %v289 = vld [vmem:[%s257 + $0x70] sm:$0xff]
      %v290 = vld [vmem:[%s257 + $0x78] sm:$0xff]
      %v291 = vld [vmem:[%s257 + $0x80] sm:$0xff]
      %v292 = vld [vmem:[%s257 + $0x88] sm:$0xff]
      %v293 = vld [vmem:[%s257 + $0x90] sm:$0xff]
      %v294 = vld [vmem:[%s257 + $0x98] sm:$0xff]
      %v295 = vld [vmem:[%s257 + $0xa0] sm:$0xff]
      %v296 = vld [vmem:[%s257 + $0xa8] sm:$0xff]
      %v297 = vld [vmem:[%s257 + $0xb0] sm:$0xff]
      %v298 = vld [vmem:[%s257 + $0xb8] sm:$0xff]
      %v299 = vld [vmem:[%s257 + $0xc0] sm:$0xff]
      %v300 = vld [vmem:[%s257 + $0xc8] sm:$0xff]
      %v301 = vld [vmem:[%s257 + $0xd0] sm:$0xff]
      %v302 = vld [vmem:[%s257 + $0xd8] sm:$0xff]
      %v303 = vld [vmem:[%s257 + $0xe0] sm:$0xff]
      %v304 = vld [vmem:[%s257 + $0xe8] sm:$0xff]
      %v305 = vld [vmem:[%s257 + $0xf0] sm:$0xff]
      %v306 = vld [vmem:[%s257 + $0xf8] sm:$0xff]
      %v307 = vld [vmem:[%s1] sm:$0x1]
      %v308 = vld [vmem:[%s2] sm:$0x1]
      %v310 = vlaneseq
      %v311 = vshrl.u32 %v310, 7
      %v312 = vsub.s32 0, %v311
      %v313 = vrot.slane %v307, %v312
      %v315 = vmul.f32 %v275, %v313
      %v316 = vmul.f32 %v276, %v313
      %v317 = vmul.f32 %v277, %v313
      %v318 = vmul.f32 %v278, %v313
      %v319 = vmul.f32 %v279, %v313
      %v320 = vmul.f32 %v280, %v313
      %v321 = vmul.f32 %v281, %v313
      %v322 = vmul.f32 %v282, %v313
      %v323 = vmul.f32 %v283, %v313
      %v324 = vmul.f32 %v284, %v313
      %v325 = vmul.f32 %v285, %v313
      %v326 = vmul.f32 %v286, %v313
      %v327 = vmul.f32 %v287, %v313
      %v328 = vmul.f32 %v288, %v313
      %v329 = vmul.f32 %v289, %v313
      %v330 = vmul.f32 %v290, %v313
      %v331 = vmul.f32 %v291, %v313
      %v332 = vmul.f32 %v292, %v313
      %v333 = vmul.f32 %v293, %v313
      %v334 = vmul.f32 %v294, %v313
      %v335 = vmul.f32 %v295, %v313
      %v336 = vmul.f32 %v296, %v313
      %v337 = vmul.f32 %v297, %v313
      %v338 = vmul.f32 %v298, %v313
      %v339 = vmul.f32 %v299, %v313
      %v340 = vmul.f32 %v300, %v313
      %v341 = vmul.f32 %v301, %v313
      %v342 = vmul.f32 %v302, %v313
      %v343 = vmul.f32 %v303, %v313
      %v344 = vmul.f32 %v304, %v313
      %v345 = vmul.f32 %v305, %v313
      %v346 = vmul.f32 %v306, %v313
      %v348 = vlaneseq
      %v349 = vshrl.u32 %v348, 7
      %v350 = vsub.s32 0, %v349
      %v351 = vrot.slane %v308, %v350
      %v353 = vadd.f32 %v315, %v351
      %v354 = vadd.f32 %v316, %v351
      %v355 = vadd.f32 %v317, %v351
      %v356 = vadd.f32 %v318, %v351
      %v357 = vadd.f32 %v319, %v351
      %v358 = vadd.f32 %v320, %v351
      %v359 = vadd.f32 %v321, %v351
      %v360 = vadd.f32 %v322, %v351
      %v361 = vadd.f32 %v323, %v351
      %v362 = vadd.f32 %v324, %v351
      %v363 = vadd.f32 %v325, %v351
      %v364 = vadd.f32 %v326, %v351
      %v365 = vadd.f32 %v327, %v351
      %v366 = vadd.f32 %v328, %v351
      %v367 = vadd.f32 %v329, %v351
      %v368 = vadd.f32 %v330, %v351
      %v369 = vadd.f32 %v331, %v351
      %v370 = vadd.f32 %v332, %v351
      %v371 = vadd.f32 %v333, %v351
      %v372 = vadd.f32 %v334, %v351
      %v373 = vadd.f32 %v335, %v351
      %v374 = vadd.f32 %v336, %v351
      %v375 = vadd.f32 %v337, %v351
      %v376 = vadd.f32 %v338, %v351
      %v377 = vadd.f32 %v339, %v351
      %v378 = vadd.f32 %v340, %v351
      %v379 = vadd.f32 %v341, %v351
      %v380 = vadd.f32 %v342, %v351
      %v381 = vadd.f32 %v343, %v351
      %v382 = vadd.f32 %v344, %v351
      %v383 = vadd.f32 %v345, %v351
      %v384 = vadd.f32 %v346, %v351
      %v385 = vmax.f32 %v353, 0.0
      %v386 = vmax.f32 %v354, 0.0
      %v387 = vmax.f32 %v355, 0.0
      %v388 = vmax.f32 %v356, 0.0
      %v389 = vmax.f32 %v357, 0.0
      %v390 = vmax.f32 %v358, 0.0
      %v391 = vmax.f32 %v359, 0.0
      %v392 = vmax.f32 %v360, 0.0
      %v393 = vmax.f32 %v361, 0.0
      %v394 = vmax.f32 %v362, 0.0
      %v395 = vmax.f32 %v363, 0.0
      %v396 = vmax.f32 %v364, 0.0
      %v397 = vmax.f32 %v365, 0.0
      %v398 = vmax.f32 %v366, 0.0
      %v399 = vmax.f32 %v367, 0.0
      %v400 = vmax.f32 %v368, 0.0
      %v401 = vmax.f32 %v369, 0.0
      %v402 = vmax.f32 %v370, 0.0
      %v403 = vmax.f32 %v371, 0.0
      %v404 = vmax.f32 %v372, 0.0
      %v405 = vmax.f32 %v373, 0.0
      %v406 = vmax.f32 %v374, 0.0
      %v407 = vmax.f32 %v375, 0.0
      %v408 = vmax.f32 %v376, 0.0
      %v409 = vmax.f32 %v377, 0.0
      %v410 = vmax.f32 %v378, 0.0
      %v411 = vmax.f32 %v379, 0.0
      %v412 = vmax.f32 %v380, 0.0
      %v413 = vmax.f32 %v381, 0.0
      %v414 = vmax.f32 %v382, 0.0
      %v415 = vmax.f32 %v383, 0.0
      %v416 = vmax.f32 %v384, 0.0
      %v417 = vlaneseq
      %v418 = vshrl.u32 %v417, 7
      %v419 = vadd.s32 %v418, 8
      %v420 = vrot.slane %v385, 7
      %v421 = vrot.slane %v387, 7
      %v422 = vrot.slane %v389, 7
      %v423 = vrot.slane %v391, 7
      %v424 = vrot.slane %v393, 7
      %v425 = vrot.slane %v395, 7
      %v426 = vrot.slane %v397, 7
      %v427 = vrot.slane %v399, 7
      %v428 = vrot.slane %v401, 7
      %v429 = vrot.slane %v403, 7
      %v430 = vrot.slane %v405, 7
      %v431 = vrot.slane %v407, 7
      %v432 = vrot.slane %v409, 7
      %v433 = vrot.slane %v411, 7
      %v434 = vrot.slane %v413, 7
      %v435 = vrot.slane %v415, 7
      %v436 = vrot.slane %v386, 7
      %v437 = vrot.slane %v388, 7
      %v438 = vrot.slane %v390, 7
      %v439 = vrot.slane %v392, 7
      %v440 = vrot.slane %v394, 7
      %v441 = vrot.slane %v396, 7
      %v442 = vrot.slane %v398, 7
      %v443 = vrot.slane %v400, 7
      %v444 = vrot.slane %v402, 7
      %v445 = vrot.slane %v404, 7
      %v446 = vrot.slane %v406, 7
      %v447 = vrot.slane %v408, 7
      %v448 = vrot.slane %v410, 7
      %v449 = vrot.slane %v412, 7
      %v450 = vrot.slane %v414, 7
      %v451 = vrot.slane %v416, 7
      %vm452 = vcmp.lt.s32.totalorder %v418, 1
      %v453 = vsel %vm452, %v420, %v436
      %v454 = vsel %vm452, %v421, %v437
      %v455 = vsel %vm452, %v422, %v438
      %v456 = vsel %vm452, %v423, %v439
      %v457 = vsel %vm452, %v424, %v440
      %v458 = vsel %vm452, %v425, %v441
      %v459 = vsel %vm452, %v426, %v442
      %v460 = vsel %vm452, %v427, %v443
      %v461 = vsel %vm452, %v428, %v444
      %v462 = vsel %vm452, %v429, %v445
      %v463 = vsel %vm452, %v430, %v446
      %v464 = vsel %vm452, %v431, %v447
      %v465 = vsel %vm452, %v432, %v448
      %v466 = vsel %vm452, %v433, %v449
      %v467 = vsel %vm452, %v434, %v450
      %v468 = vsel %vm452, %v435, %v451
      %v469 = vsel %vm452, %v436, %v420
      %v470 = vsel %vm452, %v437, %v421
      %v471 = vsel %vm452, %v438, %v422
      %v472 = vsel %vm452, %v439, %v423
      %v473 = vsel %vm452, %v440, %v424
      %v474 = vsel %vm452, %v441, %v425
      %v475 = vsel %vm452, %v442, %v426
      %v476 = vsel %vm452, %v443, %v427
      %v477 = vsel %vm452, %v444, %v428
      %v478 = vsel %vm452, %v445, %v429
      %v479 = vsel %vm452, %v446, %v430
      %v480 = vsel %vm452, %v447, %v431
      %v481 = vsel %vm452, %v448, %v432
      %v482 = vsel %vm452, %v449, %v433
      %v483 = vsel %vm452, %v450, %v434
      %v484 = vsel %vm452, %v451, %v435
      %vm485 = vcmp.ge.s32.totalorder %v418, 1
      %vm486 = vcmp.ge.s32.totalorder %v419, 1
      %v487 = vsel %vm485, %v469, 0.0
      %v488 = vsel %vm486, %v453, 0.0
      %v489 = vsel %vm485, %v470, 0.0
      %v490 = vsel %vm486, %v454, 0.0
      %v491 = vsel %vm485, %v471, 0.0
      %v492 = vsel %vm486, %v455, 0.0
      %v493 = vsel %vm485, %v472, 0.0
      %v494 = vsel %vm486, %v456, 0.0
      %v495 = vsel %vm485, %v473, 0.0
      %v496 = vsel %vm486, %v457, 0.0
      %v497 = vsel %vm485, %v474, 0.0
      %v498 = vsel %vm486, %v458, 0.0
      %v499 = vsel %vm485, %v475, 0.0
      %v500 = vsel %vm486, %v459, 0.0
      %v501 = vsel %vm485, %v476, 0.0
      %v502 = vsel %vm486, %v460, 0.0
      %v503 = vsel %vm485, %v477, 0.0
      %v504 = vsel %vm486, %v461, 0.0
      %v505 = vsel %vm485, %v478, 0.0
      %v506 = vsel %vm486, %v462, 0.0
      %v507 = vsel %vm485, %v479, 0.0
      %v508 = vsel %vm486, %v463, 0.0
      %v509 = vsel %vm485, %v480, 0.0
      %v510 = vsel %vm486, %v464, 0.0
      %v511 = vsel %vm485, %v481, 0.0
      %v512 = vsel %vm486, %v465, 0.0
      %v513 = vsel %vm485, %v482, 0.0
      %v514 = vsel %vm486, %v466, 0.0
      %v515 = vsel %vm485, %v483, 0.0
      %v516 = vsel %vm486, %v467, 0.0
      %v517 = vsel %vm485, %v484, 0.0
      %v518 = vsel %vm486, %v468, 0.0
      %v519 = vrot.slane %v385, 1
      %v520 = vrot.slane %v387, 1
      %v521 = vrot.slane %v389, 1
      %v522 = vrot.slane %v391, 1
      %v523 = vrot.slane %v393, 1
      %v524 = vrot.slane %v395, 1
      %v525 = vrot.slane %v397, 1
      %v526 = vrot.slane %v399, 1
      %v527 = vrot.slane %v401, 1
      %v528 = vrot.slane %v403, 1
      %v529 = vrot.slane %v405, 1
      %v530 = vrot.slane %v407, 1
      %v531 = vrot.slane %v409, 1
      %v532 = vrot.slane %v411, 1
      %v533 = vrot.slane %v413, 1
      %v534 = vrot.slane %v415, 1
      %v535 = vrot.slane %v386, 1
      %v536 = vrot.slane %v388, 1
      %v537 = vrot.slane %v390, 1
      %v538 = vrot.slane %v392, 1
      %v539 = vrot.slane %v394, 1
      %v540 = vrot.slane %v396, 1
      %v541 = vrot.slane %v398, 1
      %v542 = vrot.slane %v400, 1
      %v543 = vrot.slane %v402, 1
      %v544 = vrot.slane %v404, 1
      %v545 = vrot.slane %v406, 1
      %v546 = vrot.slane %v408, 1
      %v547 = vrot.slane %v410, 1
      %v548 = vrot.slane %v412, 1
      %v549 = vrot.slane %v414, 1
      %v550 = vrot.slane %v416, 1
      %vm551 = vcmp.lt.s32.totalorder %v418, 7
      %v552 = vsel %vm551, %v519, %v535
      %v553 = vsel %vm551, %v520, %v536
      %v554 = vsel %vm551, %v521, %v537
      %v555 = vsel %vm551, %v522, %v538
      %v556 = vsel %vm551, %v523, %v539
      %v557 = vsel %vm551, %v524, %v540
      %v558 = vsel %vm551, %v525, %v541
      %v559 = vsel %vm551, %v526, %v542
      %v560 = vsel %vm551, %v527, %v543
      %v561 = vsel %vm551, %v528, %v544
      %v562 = vsel %vm551, %v529, %v545
      %v563 = vsel %vm551, %v530, %v546
      %v564 = vsel %vm551, %v531, %v547
      %v565 = vsel %vm551, %v532, %v548
      %v566 = vsel %vm551, %v533, %v549
      %v567 = vsel %vm551, %v534, %v550
      %v568 = vsel %vm551, %v535, %v519
      %v569 = vsel %vm551, %v536, %v520
      %v570 = vsel %vm551, %v537, %v521
      %v571 = vsel %vm551, %v538, %v522
      %v572 = vsel %vm551, %v539, %v523
      %v573 = vsel %vm551, %v540, %v524
      %v574 = vsel %vm551, %v541, %v525
      %v575 = vsel %vm551, %v542, %v526
      %v576 = vsel %vm551, %v543, %v527
      %v577 = vsel %vm551, %v544, %v528
      %v578 = vsel %vm551, %v545, %v529
      %v579 = vsel %vm551, %v546, %v530
      %v580 = vsel %vm551, %v547, %v531
      %v581 = vsel %vm551, %v548, %v532
      %v582 = vsel %vm551, %v549, %v533
      %v583 = vsel %vm551, %v550, %v534
      %vm584 = vcmp.lt.s32.totalorder %v418, 15
      %vm585 = vcmp.lt.s32.totalorder %v419, 15
      %v586 = vsel %vm584, %v552, 0.0
      %v587 = vsel %vm585, %v568, 0.0
      %v588 = vsel %vm584, %v553, 0.0
      %v589 = vsel %vm585, %v569, 0.0
      %v590 = vsel %vm584, %v554, 0.0
      %v591 = vsel %vm585, %v570, 0.0
      %v592 = vsel %vm584, %v555, 0.0
      %v593 = vsel %vm585, %v571, 0.0
      %v594 = vsel %vm584, %v556, 0.0
      %v595 = vsel %vm585, %v572, 0.0
      %v596 = vsel %vm584, %v557, 0.0
      %v597 = vsel %vm585, %v573, 0.0
      %v598 = vsel %vm584, %v558, 0.0
      %v599 = vsel %vm585, %v574, 0.0
      %v600 = vsel %vm584, %v559, 0.0
      %v601 = vsel %vm585, %v575, 0.0
      %v602 = vsel %vm584, %v560, 0.0
      %v603 = vsel %vm585, %v576, 0.0
      %v604 = vsel %vm584, %v561, 0.0
      %v605 = vsel %vm585, %v577, 0.0
      %v606 = vsel %vm584, %v562, 0.0
      %v607 = vsel %vm585, %v578, 0.0
      %v608 = vsel %vm584, %v563, 0.0
      %v609 = vsel %vm585, %v579, 0.0
      %v610 = vsel %vm584, %v564, 0.0
      %v611 = vsel %vm585, %v580, 0.0
      %v612 = vsel %vm584, %v565, 0.0
      %v613 = vsel %vm585, %v581, 0.0
      %v614 = vsel %vm584, %v566, 0.0
      %v615 = vsel %vm585, %v582, 0.0
      %v616 = vsel %vm584, %v567, 0.0
      %v617 = vsel %vm585, %v583, 0.0
      %650 = vrot.lane.b32.xlu0 %v385, 8
      %v651 = vpop.permute.xlu0 %650
      %652 = vrot.lane.b32.xlu0 %v386, 8
      %v653 = vpop.permute.xlu0 %652
      %654 = vrot.lane.b32.xlu0 %v387, 8
      %v655 = vpop.permute.xlu0 %654
      %656 = vrot.lane.b32.xlu0 %v388, 8
      %v657 = vpop.permute.xlu0 %656
      %658 = vrot.lane.b32.xlu0 %v389, 8
      %v659 = vpop.permute.xlu0 %658
      %660 = vrot.lane.b32.xlu0 %v390, 8
      %v661 = vpop.permute.xlu0 %660
      %662 = vrot.lane.b32.xlu0 %v391, 8
      %v663 = vpop.permute.xlu0 %662
      %664 = vrot.lane.b32.xlu0 %v392, 8
      %v665 = vpop.permute.xlu0 %664
      %666 = vrot.lane.b32.xlu0 %v393, 8
      %v667 = vpop.permute.xlu0 %666
      %668 = vrot.lane.b32.xlu0 %v394, 8
      %v669 = vpop.permute.xlu0 %668
      %670 = vrot.lane.b32.xlu0 %v395, 8
      %v671 = vpop.permute.xlu0 %670
      %672 = vrot.lane.b32.xlu0 %v396, 8
      %v673 = vpop.permute.xlu0 %672
      %674 = vrot.lane.b32.xlu0 %v397, 8
      %v675 = vpop.permute.xlu0 %674
      %676 = vrot.lane.b32.xlu0 %v398, 8
      %v677 = vpop.permute.xlu0 %676
      %678 = vrot.lane.b32.xlu0 %v399, 8
      %v679 = vpop.permute.xlu0 %678
      %680 = vrot.lane.b32.xlu0 %v400, 8
      %v681 = vpop.permute.xlu0 %680
      %682 = vrot.lane.b32.xlu0 %v401, 8
      %v683 = vpop.permute.xlu0 %682
      %684 = vrot.lane.b32.xlu0 %v402, 8
      %v685 = vpop.permute.xlu0 %684
      %686 = vrot.lane.b32.xlu0 %v403, 8
      %v687 = vpop.permute.xlu0 %686
      %688 = vrot.lane.b32.xlu0 %v404, 8
      %v689 = vpop.permute.xlu0 %688
      %690 = vrot.lane.b32.xlu0 %v405, 8
      %v691 = vpop.permute.xlu0 %690
      %692 = vrot.lane.b32.xlu0 %v406, 8
      %v693 = vpop.permute.xlu0 %692
      %694 = vrot.lane.b32.xlu0 %v407, 8
      %v695 = vpop.permute.xlu0 %694
      %696 = vrot.lane.b32.xlu0 %v408, 8
      %v697 = vpop.permute.xlu0 %696
      %698 = vrot.lane.b32.xlu0 %v409, 8
      %v699 = vpop.permute.xlu0 %698
      %700 = vrot.lane.b32.xlu0 %v410, 8
      %v701 = vpop.permute.xlu0 %700
      %702 = vrot.lane.b32.xlu0 %v411, 8
      %v703 = vpop.permute.xlu0 %702
      %704 = vrot.lane.b32.xlu0 %v412, 8
      %v705 = vpop.permute.xlu0 %704
      %706 = vrot.lane.b32.xlu0 %v413, 8
      %v707 = vpop.permute.xlu0 %706
      %708 = vrot.lane.b32.xlu0 %v414, 8
      %v709 = vpop.permute.xlu0 %708
      %710 = vrot.lane.b32.xlu0 %v415, 8
      %v711 = vpop.permute.xlu0 %710
      %712 = vrot.lane.b32.xlu0 %v416, 8
      %v713 = vpop.permute.xlu0 %712
      %778 = vrot.lane.b32.xlu0 %v586, 16
      %v779 = vpop.permute.xlu0 %778
      %780 = vrot.lane.b32.xlu0 %v587, 16
      %v781 = vpop.permute.xlu0 %780
      %782 = vrot.lane.b32.xlu0 %v588, 16
      %v783 = vpop.permute.xlu0 %782
      %784 = vrot.lane.b32.xlu0 %v589, 16
      %v785 = vpop.permute.xlu0 %784
      %786 = vrot.lane.b32.xlu0 %v590, 16
      %v787 = vpop.permute.xlu0 %786
      %788 = vrot.lane.b32.xlu0 %v591, 16
      %v789 = vpop.permute.xlu0 %788
      %790 = vrot.lane.b32.xlu0 %v592, 16
      %v791 = vpop.permute.xlu0 %790
      %792 = vrot.lane.b32.xlu0 %v593, 16
      %v793 = vpop.permute.xlu0 %792
      %794 = vrot.lane.b32.xlu0 %v594, 16
      %v795 = vpop.permute.xlu0 %794
      %796 = vrot.lane.b32.xlu0 %v595, 16
      %v797 = vpop.permute.xlu0 %796
      %798 = vrot.lane.b32.xlu0 %v596, 16
      %v799 = vpop.permute.xlu0 %798
      %800 = vrot.lane.b32.xlu0 %v597, 16
      %v801 = vpop.permute.xlu0 %800
      %802 = vrot.lane.b32.xlu0 %v598, 16
      %v803 = vpop.permute.xlu0 %802
      %804 = vrot.lane.b32.xlu0 %v599, 16
      %v805 = vpop.permute.xlu0 %804
      %806 = vrot.lane.b32.xlu0 %v600, 16
      %v807 = vpop.permute.xlu0 %806
      %808 = vrot.lane.b32.xlu0 %v601, 16
      %v809 = vpop.permute.xlu0 %808
      %810 = vrot.lane.b32.xlu0 %v602, 16
      %v811 = vpop.permute.xlu0 %810
      %812 = vrot.lane.b32.xlu0 %v603, 16
      %v813 = vpop.permute.xlu0 %812
      %814 = vrot.lane.b32.xlu0 %v604, 16
      %v815 = vpop.permute.xlu0 %814
      %816 = vrot.lane.b32.xlu0 %v605, 16
      %v817 = vpop.permute.xlu0 %816
      %818 = vrot.lane.b32.xlu0 %v606, 16
      %v819 = vpop.permute.xlu0 %818
      %820 = vrot.lane.b32.xlu0 %v607, 16
      %v821 = vpop.permute.xlu0 %820
      %822 = vrot.lane.b32.xlu0 %v608, 16
      %v823 = vpop.permute.xlu0 %822
      %824 = vrot.lane.b32.xlu0 %v609, 16
      %v825 = vpop.permute.xlu0 %824
      %826 = vrot.lane.b32.xlu0 %v610, 16
      %v827 = vpop.permute.xlu0 %826
      %828 = vrot.lane.b32.xlu0 %v611, 16
      %v829 = vpop.permute.xlu0 %828
      %830 = vrot.lane.b32.xlu0 %v612, 16
      %v831 = vpop.permute.xlu0 %830
      %832 = vrot.lane.b32.xlu0 %v613, 16
      %v833 = vpop.permute.xlu0 %832
      %834 = vrot.lane.b32.xlu0 %v614, 16
      %v835 = vpop.permute.xlu0 %834
      %836 = vrot.lane.b32.xlu0 %v615, 16
      %v837 = vpop.permute.xlu0 %836
      %838 = vrot.lane.b32.xlu0 %v616, 16
      %v839 = vpop.permute.xlu0 %838
      %840 = vrot.lane.b32.xlu0 %v617, 16
      %v841 = vpop.permute.xlu0 %840
      %vm874 = vcmask 64512
      %v875 = vsel %vm874, %v487, %v651
      %v876 = vsel %vm874, %v488, %v653
      %v877 = vsel %vm874, %v489, %v655
      %v878 = vsel %vm874, %v490, %v657
      %v879 = vsel %vm874, %v491, %v659
      %v880 = vsel %vm874, %v492, %v661
      %v881 = vsel %vm874, %v493, %v663
      %v882 = vsel %vm874, %v494, %v665
      %v883 = vsel %vm874, %v495, %v667
      %v884 = vsel %vm874, %v496, %v669
      %v885 = vsel %vm874, %v497, %v671
      %v886 = vsel %vm874, %v498, %v673
      %v887 = vsel %vm874, %v499, %v675
      %v888 = vsel %vm874, %v500, %v677
      %v889 = vsel %vm874, %v501, %v679
      %v890 = vsel %vm874, %v502, %v681
      %v891 = vsel %vm874, %v503, %v683
      %v892 = vsel %vm874, %v504, %v685
      %v893 = vsel %vm874, %v505, %v687
      %v894 = vsel %vm874, %v506, %v689
      %v895 = vsel %vm874, %v507, %v691
      %v896 = vsel %vm874, %v508, %v693
      %v897 = vsel %vm874, %v509, %v695
      %v898 = vsel %vm874, %v510, %v697
      %v899 = vsel %vm874, %v511, %v699
      %v900 = vsel %vm874, %v512, %v701
      %v901 = vsel %vm874, %v513, %v703
      %v902 = vsel %vm874, %v514, %v705
      %v903 = vsel %vm874, %v515, %v707
      %v904 = vsel %vm874, %v516, %v709
      %v905 = vsel %vm874, %v517, %v711
      %v906 = vsel %vm874, %v518, %v713
      %vm907 = vcmask 130048
      %v908 = vsel %vm907, %v875, %v779
      %v909 = vsel %vm907, %v876, %v781
      %v910 = vsel %vm907, %v877, %v783
      %v911 = vsel %vm907, %v878, %v785
      %v912 = vsel %vm907, %v879, %v787
      %v913 = vsel %vm907, %v880, %v789
      %v914 = vsel %vm907, %v881, %v791
      %v915 = vsel %vm907, %v882, %v793
      %v916 = vsel %vm907, %v883, %v795
      %v917 = vsel %vm907, %v884, %v797
      %v918 = vsel %vm907, %v885, %v799
      %v919 = vsel %vm907, %v886, %v801
      %v920 = vsel %vm907, %v887, %v803
      %v921 = vsel %vm907, %v888, %v805
      %v922 = vsel %vm907, %v889, %v807
      %v923 = vsel %vm907, %v890, %v809
      %v924 = vsel %vm907, %v891, %v811
      %v925 = vsel %vm907, %v892, %v813
      %v926 = vsel %vm907, %v893, %v815
      %v927 = vsel %vm907, %v894, %v817
      %v928 = vsel %vm907, %v895, %v819
      %v929 = vsel %vm907, %v896, %v821
      %v930 = vsel %vm907, %v897, %v823
      %v931 = vsel %vm907, %v898, %v825
      %v932 = vsel %vm907, %v899, %v827
      %v933 = vsel %vm907, %v900, %v829
      %v934 = vsel %vm907, %v901, %v831
      %v935 = vsel %vm907, %v902, %v833
      %v936 = vsel %vm907, %v903, %v835
      %v937 = vsel %vm907, %v904, %v837
      %v938 = vsel %vm907, %v905, %v839
      %v939 = vsel %vm907, %v906, %v841
      %s940 = scalar_lea.vmem [#allocation2], 16
      %941 = vst.msk [vmem:[%s940] sm:$0xff] %vm269, %v908
      %942 = vst.msk [vmem:[%s940 + $0x8] sm:$0xff] %vm269, %v909
      %943 = vst.msk [vmem:[%s940 + $0x10] sm:$0xff] %vm269, %v910
      %944 = vst.msk [vmem:[%s940 + $0x18] sm:$0xff] %vm269, %v911
      %945 = vst.msk [vmem:[%s940 + $0x20] sm:$0xff] %vm269, %v912
      %946 = vst.msk [vmem:[%s940 + $0x28] sm:$0xff] %vm269, %v913
      %947 = vst.msk [vmem:[%s940 + $0x30] sm:$0xff] %vm269, %v914
      %948 = vst.msk [vmem:[%s940 + $0x38] sm:$0xff] %vm269, %v915
      %949 = vst.msk [vmem:[%s940 + $0x40] sm:$0xff] %vm269, %v916
      %950 = vst.msk [vmem:[%s940 + $0x48] sm:$0xff] %vm269, %v917
      %951 = vst.msk [vmem:[%s940 + $0x50] sm:$0xff] %vm269, %v918
      %952 = vst.msk [vmem:[%s940 + $0x58] sm:$0xff] %vm269, %v919
      %953 = vst.msk [vmem:[%s940 + $0x60] sm:$0xff] %vm269, %v920
      %954 = vst.msk [vmem:[%s940 + $0x68] sm:$0xff] %vm269, %v921
      %955 = vst.msk [vmem:[%s940 + $0x70] sm:$0xff] %vm269, %v922
      %956 = vst.msk [vmem:[%s940 + $0x78] sm:$0xff] %vm269, %v923
      %957 = vst.msk [vmem:[%s940 + $0x80] sm:$0xff] %vm269, %v924
      %958 = vst.msk [vmem:[%s940 + $0x88] sm:$0xff] %vm269, %v925
      %959 = vst.msk [vmem:[%s940 + $0x90] sm:$0xff] %vm269, %v926
      %960 = vst.msk [vmem:[%s940 + $0x98] sm:$0xff] %vm269, %v927
      %961 = vst.msk [vmem:[%s940 + $0xa0] sm:$0xff] %vm269, %v928
      %962 = vst.msk [vmem:[%s940 + $0xa8] sm:$0xff] %vm269, %v929
      %963 = vst.msk [vmem:[%s940 + $0xb0] sm:$0xff] %vm269, %v930
      %964 = vst.msk [vmem:[%s940 + $0xb8] sm:$0xff] %vm269, %v931
      %965 = vst.msk [vmem:[%s940 + $0xc0] sm:$0xff] %vm269, %v932
      %966 = vst.msk [vmem:[%s940 + $0xc8] sm:$0xff] %vm269, %v933
      %967 = vst.msk [vmem:[%s940 + $0xd0] sm:$0xff] %vm269, %v934
      %968 = vst.msk [vmem:[%s940 + $0xd8] sm:$0xff] %vm269, %v935
      %969 = vst.msk [vmem:[%s940 + $0xe0] sm:$0xff] %vm269, %v936
      %970 = vst.msk [vmem:[%s940 + $0xe8] sm:$0xff] %vm269, %v937
      %971 = vst.msk [vmem:[%s940 + $0xf0] sm:$0xff] %vm269, %v938
      %972 = vst.msk [vmem:[%s940 + $0xf8] sm:$0xff] %vm269, %v939
      %v973 = vld [vmem:[#allocation2] sm:$0xff]
      %v974 = vld [vmem:[#allocation2 + $0x8] sm:$0xff]
      %v975 = vld [vmem:[#allocation2 + $0x10] sm:$0xff]
      %v976 = vld [vmem:[#allocation2 + $0x18] sm:$0xff]
      %v977 = vld [vmem:[#allocation2 + $0x20] sm:$0xff]
      %v978 = vld [vmem:[#allocation2 + $0x28] sm:$0xff]
      %v979 = vld [vmem:[#allocation2 + $0x30] sm:$0xff]
      %v980 = vld [vmem:[#allocation2 + $0x38] sm:$0xff]
      %v981 = vld [vmem:[#allocation2 + $0x40] sm:$0xff]
      %v982 = vld [vmem:[#allocation2 + $0x48] sm:$0xff]
      %v983 = vld [vmem:[#allocation2 + $0x50] sm:$0xff]
      %v984 = vld [vmem:[#allocation2 + $0x58] sm:$0xff]
      %v985 = vld [vmem:[#allocation2 + $0x60] sm:$0xff]
      %v986 = vld [vmem:[#allocation2 + $0x68] sm:$0xff]
      %v987 = vld [vmem:[#allocation2 + $0x70] sm:$0xff]
      %v988 = vld [vmem:[#allocation2 + $0x78] sm:$0xff]
      %v989 = vld [vmem:[#allocation2 + $0x80] sm:$0xff]
      %v990 = vld [vmem:[#allocation2 + $0x88] sm:$0xff]
      %v991 = vld [vmem:[#allocation2 + $0x90] sm:$0xff]
      %v992 = vld [vmem:[#allocation2 + $0x98] sm:$0xff]
      %v993 = vld [vmem:[#allocation2 + $0xa0] sm:$0xff]
      %v994 = vld [vmem:[#allocation2 + $0xa8] sm:$0xff]
      %v995 = vld [vmem:[#allocation2 + $0xb0] sm:$0xff]
      %v996 = vld [vmem:[#allocation2 + $0xb8] sm:$0xff]
      %v997 = vld [vmem:[#allocation2 + $0xc0] sm:$0xff]
      %v998 = vld [vmem:[#allocation2 + $0xc8] sm:$0xff]
      %v999 = vld [vmem:[#allocation2 + $0xd0] sm:$0xff]
      %v1000 = vld [vmem:[#allocation2 + $0xd8] sm:$0xff]
      %v1001 = vld [vmem:[#allocation2 + $0xe0] sm:$0xff]
      %v1002 = vld [vmem:[#allocation2 + $0xe8] sm:$0xff]
      %v1003 = vld [vmem:[#allocation2 + $0xf0] sm:$0xff]
      %v1004 = vld [vmem:[#allocation2 + $0xf8] sm:$0xff]
      %v1005 = vld [vmem:[%s3] sm:$0xff]
      %v1006 = vld [vmem:[%s3 + $0x8] sm:$0xff]
      %v1007 = vld [vmem:[%s3 + $0x10] sm:$0xff]
      %v1008 = vld [vmem:[%s940] sm:$0xff]
      %v1009 = vld [vmem:[%s940 + $0x8] sm:$0xff]
      %v1010 = vld [vmem:[%s940 + $0x10] sm:$0xff]
      %v1011 = vld [vmem:[%s940 + $0x18] sm:$0xff]
      %v1012 = vld [vmem:[%s940 + $0x20] sm:$0xff]
      %v1013 = vld [vmem:[%s940 + $0x28] sm:$0xff]
      %v1014 = vld [vmem:[%s940 + $0x30] sm:$0xff]
      %v1015 = vld [vmem:[%s940 + $0x38] sm:$0xff]
      %v1016 = vld [vmem:[%s940 + $0x40] sm:$0xff]
      %v1017 = vld [vmem:[%s940 + $0x48] sm:$0xff]
      %v1018 = vld [vmem:[%s940 + $0x50] sm:$0xff]
      %v1019 = vld [vmem:[%s940 + $0x58] sm:$0xff]
      %v1020 = vld [vmem:[%s940 + $0x60] sm:$0xff]
      %v1021 = vld [vmem:[%s940 + $0x68] sm:$0xff]
      %v1022 = vld [vmem:[%s940 + $0x70] sm:$0xff]
      %v1023 = vld [vmem:[%s940 + $0x78] sm:$0xff]
      %v1024 = vld [vmem:[%s940 + $0x80] sm:$0xff]
      %v1025 = vld [vmem:[%s940 + $0x88] sm:$0xff]
      %v1026 = vld [vmem:[%s940 + $0x90] sm:$0xff]
      %v1027 = vld [vmem:[%s940 + $0x98] sm:$0xff]
      %v1028 = vld [vmem:[%s940 + $0xa0] sm:$0xff]
      %v1029 = vld [vmem:[%s940 + $0xa8] sm:$0xff]
      %v1030 = vld [vmem:[%s940 + $0xb0] sm:$0xff]
      %v1031 = vld [vmem:[%s940 + $0xb8] sm:$0xff]
      %v1032 = vld [vmem:[%s940 + $0xc0] sm:$0xff]
      %v1033 = vld [vmem:[%s940 + $0xc8] sm:$0xff]
      %v1034 = vld [vmem:[%s940 + $0xd0] sm:$0xff]
      %v1035 = vld [vmem:[%s940 + $0xd8] sm:$0xff]
      %v1036 = vld [vmem:[%s940 + $0xe0] sm:$0xff]
      %v1037 = vld [vmem:[%s940 + $0xe8] sm:$0xff]
      %v1038 = vld [vmem:[%s940 + $0xf0] sm:$0xff]
      %v1039 = vld [vmem:[%s940 + $0xf8] sm:$0xff]
      %s1040 = scalar_lea.vmem %s3, 24
      %v1041 = vld [vmem:[%s1040] sm:$0xff]
      %v1042 = vld [vmem:[%s1040 + $0x8] sm:$0xff]
      %v1043 = vld [vmem:[%s1040 + $0x10] sm:$0xff]
      %v1045 = vsel %vm269, %v1008, 0
      %v1048 = vsel %vm269, %v1009, 0
      %v1051 = vsel %vm269, %v1010, 0
      %v1054 = vsel %vm269, %v1011, 0
      %v1057 = vsel %vm269, %v1012, 0
      %v1060 = vsel %vm269, %v1013, 0
      %v1063 = vsel %vm269, %v1014, 0
      %v1066 = vsel %vm269, %v1015, 0
      %v1069 = vsel %vm269, %v1016, 0
      %v1072 = vsel %vm269, %v1017, 0
      %v1075 = vsel %vm269, %v1018, 0
      %v1078 = vsel %vm269, %v1019, 0
      %v1081 = vsel %vm269, %v1020, 0
      %v1084 = vsel %vm269, %v1021, 0
      %v1087 = vsel %vm269, %v1022, 0
      %v1090 = vsel %vm269, %v1023, 0
      %v1093 = vsel %vm269, %v1024, 0
      %v1096 = vsel %vm269, %v1025, 0
      %v1099 = vsel %vm269, %v1026, 0
      %v1102 = vsel %vm269, %v1027, 0
      %v1105 = vsel %vm269, %v1028, 0
      %v1108 = vsel %vm269, %v1029, 0
      %v1111 = vsel %vm269, %v1030, 0
      %v1114 = vsel %vm269, %v1031, 0
      %v1117 = vsel %vm269, %v1032, 0
      %v1120 = vsel %vm269, %v1033, 0
      %v1123 = vsel %vm269, %v1034, 0
      %v1126 = vsel %vm269, %v1035, 0
      %v1129 = vsel %vm269, %v1036, 0
      %v1132 = vsel %vm269, %v1037, 0
      %v1135 = vsel %vm269, %v1038, 0
      %v1138 = vsel %vm269, %v1039, 0
      %1140 = vmatprep.subr.mxu0 0.0
      %1141 = vmatpush1.msra.mxu0 %v1041
      %1142 = vmatprep.subr.mxu0 0.0
      %1143 = vmatpush1.msra.mxu0 %v1042
      %1144 = vmatprep.subr.mxu0 0.0
      %1145 = vmatpush1.msra.mxu0 %v1043
      %1146 = vmatprep.subr.mxu0 0.0
      %1147 = vmatpush1.msra.mxu0 0.0
      %1148 = vmatprep.subr.mxu0 0.0
      %1149 = vmatpush1.msra.mxu0 0.0
      %1150 = vmatprep.subr.mxu0 0.0
      %1151 = vmatpush1.msra.mxu0 0.0
      %1152 = vmatprep.subr.mxu0 0.0
      %1153 = vmatpush1.msra.mxu0 0.0
      %1154 = vmatprep.subr.mxu0 0.0
      %1155 = vmatpush1.msra.mxu0 0.0
      %1156 = vmatprep.subr.mxu0 0.0
      %1157 = vmatpush1.msra.mxu0 0.0
      %1158 = vmatprep.subr.mxu0 0.0
      %1159 = vmatpush1.msra.mxu0 0.0
      %1160 = vmatprep.subr.mxu0 0.0
      %1161 = vmatpush1.msra.mxu0 0.0
      %1162 = vmatprep.subr.mxu0 0.0
      %1163 = vmatpush1.msra.mxu0 0.0
      %1164 = vmatprep.subr.mxu0 0.0
      %1165 = vmatpush1.msra.mxu0 0.0
      %1166 = vmatprep.subr.mxu0 0.0
      %1167 = vmatpush1.msra.mxu0 0.0
      %1168 = vmatprep.subr.mxu0 0.0
      %1169 = vmatpush1.msra.mxu0 0.0
      %1170 = vmatprep.subr.mxu0 0.0
      %1171 = vmatpush1.msra.mxu0 0.0
      %1172 = vmatprep.subr.mxu0 0.0
      %1173 = vmatpush1.msra.mxu0 0.0
      %1174 = vmatprep.subr.mxu0 0.0
      %1175 = vmatpush1.msra.mxu0 0.0
      %1176 = vmatprep.subr.mxu0 0.0
      %1177 = vmatpush1.msra.mxu0 0.0
      %1178 = vmatprep.subr.mxu0 0.0
      %1179 = vmatpush1.msra.mxu0 0.0
      %1180 = vmatprep.subr.mxu0 0.0
      %1181 = vmatpush1.msra.mxu0 0.0
      %1182 = vmatprep.subr.mxu0 0.0
      %1183 = vmatpush1.msra.mxu0 0.0
      %1184 = vmatprep.subr.mxu0 0.0
      %1185 = vmatpush1.msra.mxu0 0.0
      %1186 = vmatprep.subr.mxu0 0.0
      %1187 = vmatpush1.msra.mxu0 0.0
      %1188 = vmatprep.subr.mxu0 0.0
      %1189 = vmatpush1.msra.mxu0 0.0
      %1190 = vmatprep.subr.mxu0 0.0
      %1191 = vmatpush1.msra.mxu0 0.0
      %1192 = vmatprep.subr.mxu0 0.0
      %1193 = vmatpush1.msra.mxu0 0.0
      %1194 = vmatprep.subr.mxu0 0.0
      %1195 = vmatpush1.msra.mxu0 0.0
      %1196 = vmatprep.subr.mxu0 0.0
      %1197 = vmatpush1.msra.mxu0 0.0
      %1198 = vmatprep.subr.mxu0 0.0
      %1199 = vmatpush1.msra.mxu0 0.0
      %1200 = vmatprep.subr.mxu0 0.0
      %1201 = vmatpush1.msra.mxu0 0.0
      %1202 = vmatprep.subr.mxu0 0.0
      %1203 = vmatpush1.msra.mxu0 0.0
      %1204 = vmatprep.mubr.f32.mxu0 0.0
      %1205 = vmatmul.mubr.f32.gmra.mrb[0].mxu0 %v1045
      %v1206 = vpop.f32.mrb[0].mxu0
      %v1207 = vadd.f32 0.0, %v1206
      %v1208 = vpop.f32.mrb[0].mxu0
      %1209 = vmatprep.mubr.f32.mxu0 0.0
      %1210 = vmatmul.mubr.f32.gmra.mrb[0].mxu0 %v1048
      %v1211 = vpop.f32.mrb[0].mxu0
      %v1212 = vadd.f32 0.0, %v1211
      %v1213 = vpop.f32.mrb[0].mxu0
      %1214 = vmatprep.mubr.f32.mxu0 0.0
      %1215 = vmatmul.mubr.f32.gmra.mrb[0].mxu0 %v1051
      %v1216 = vpop.f32.mrb[0].mxu0
      %v1217 = vadd.f32 0.0, %v1216
      %v1218 = vpop.f32.mrb[0].mxu0
      %1219 = vmatprep.mubr.f32.mxu0 0.0
      %1220 = vmatmul.mubr.f32.gmra.mrb[0].mxu0 %v1054
      %v1221 = vpop.f32.mrb[0].mxu0
      %v1222 = vadd.f32 0.0, %v1221
      %v1223 = vpop.f32.mrb[0].mxu0
      %1224 = vmatprep.mubr.f32.mxu0 0.0
      %1225 = vmatmul.mubr.f32.gmra.mrb[0].mxu0 %v1057
      %v1226 = vpop.f32.mrb[0].mxu0
      %v1227 = vadd.f32 0.0, %v1226
      %v1228 = vpop.f32.mrb[0].mxu0
      %1229 = vmatprep.mubr.f32.mxu0 0.0
      %1230 = vmatmul.mubr.f32.gmra.mrb[0].mxu0 %v1060
      %v1231 = vpop.f32.mrb[0].mxu0
      %v1232 = vadd.f32 0.0, %v1231
      %v1233 = vpop.f32.mrb[0].mxu0
      %1234 = vmatprep.mubr.f32.mxu0 0.0
      %1235 = vmatmul.mubr.f32.gmra.mrb[0].mxu0 %v1063
      %v1236 = vpop.f32.mrb[0].mxu0
      %v1237 = vadd.f32 0.0, %v1236
      %v1238 = vpop.f32.mrb[0].mxu0
      %1239 = vmatprep.mubr.f32.mxu0 0.0
      %1240 = vmatmul.mubr.f32.gmra.mrb[0].mxu0 %v1066
      %v1241 = vpop.f32.mrb[0].mxu0
      %v1242 = vadd.f32 0.0, %v1241
      %v1243 = vpop.f32.mrb[0].mxu0
      %1244 = vmatprep.mubr.f32.mxu0 0.0
      %1245 = vmatmul.mubr.f32.gmra.mrb[0].mxu0 %v1069
      %v1246 = vpop.f32.mrb[0].mxu0
      %v1247 = vadd.f32 0.0, %v1246
      %v1248 = vpop.f32.mrb[0].mxu0
      %1249 = vmatprep.mubr.f32.mxu0 0.0
      %1250 = vmatmul.mubr.f32.gmra.mrb[0].mxu0 %v1072
      %v1251 = vpop.f32.mrb[0].mxu0
      %v1252 = vadd.f32 0.0, %v1251
      %v1253 = vpop.f32.mrb[0].mxu0
      %1254 = vmatprep.mubr.f32.mxu0 0.0
      %1255 = vmatmul.mubr.f32.gmra.mrb[0].mxu0 %v1075
      %v1256 = vpop.f32.mrb[0].mxu0
      %v1257 = vadd.f32 0.0, %v1256
      %v1258 = vpop.f32.mrb[0].mxu0
      %1259 = vmatprep.mubr.f32.mxu0 0.0
      %1260 = vmatmul.mubr.f32.gmra.mrb[0].mxu0 %v1078
      %v1261 = vpop.f32.mrb[0].mxu0
      %v1262 = vadd.f32 0.0, %v1261
      %v1263 = vpop.f32.mrb[0].mxu0
      %1264 = vmatprep.mubr.f32.mxu0 0.0
      %1265 = vmatmul.mubr.f32.gmra.mrb[0].mxu0 %v1081
      %v1266 = vpop.f32.mrb[0].mxu0
      %v1267 = vadd.f32 0.0, %v1266
      %v1268 = vpop.f32.mrb[0].mxu0
      %1269 = vmatprep.mubr.f32.mxu0 0.0
      %1270 = vmatmul.mubr.f32.gmra.mrb[0].mxu0 %v1084
      %v1271 = vpop.f32.mrb[0].mxu0
      %v1272 = vadd.f32 0.0, %v1271
      %v1273 = vpop.f32.mrb[0].mxu0
      %1274 = vmatprep.mubr.f32.mxu0 0.0
      %1275 = vmatmul.mubr.f32.gmra.mrb[0].mxu0 %v1087
      %v1276 = vpop.f32.mrb[0].mxu0
      %v1277 = vadd.f32 0.0, %v1276
      %v1278 = vpop.f32.mrb[0].mxu0
      %1279 = vmatprep.mubr.f32.mxu0 0.0
      %1280 = vmatmul.mubr.f32.gmra.mrb[0].mxu0 %v1090
      %v1281 = vpop.f32.mrb[0].mxu0
      %v1282 = vadd.f32 0.0, %v1281
      %v1283 = vpop.f32.mrb[0].mxu0
      %1284 = vmatprep.mubr.f32.mxu0 0.0
      %1285 = vmatmul.mubr.f32.gmra.mrb[0].mxu0 %v1093
      %v1286 = vpop.f32.mrb[0].mxu0
      %v1287 = vadd.f32 0.0, %v1286
      %v1288 = vpop.f32.mrb[0].mxu0
      %1289 = vmatprep.mubr.f32.mxu0 0.0
      %1290 = vmatmul.mubr.f32.gmra.mrb[0].mxu0 %v1096
      %v1291 = vpop.f32.mrb[0].mxu0
      %v1292 = vadd.f32 0.0, %v1291
      %v1293 = vpop.f32.mrb[0].mxu0
      %1294 = vmatprep.mubr.f32.mxu0 0.0
      %1295 = vmatmul.mubr.f32.gmra.mrb[0].mxu0 %v1099
      %v1296 = vpop.f32.mrb[0].mxu0
      %v1297 = vadd.f32 0.0, %v1296
      %v1298 = vpop.f32.mrb[0].mxu0
      %1299 = vmatprep.mubr.f32.mxu0 0.0
      %1300 = vmatmul.mubr.f32.gmra.mrb[0].mxu0 %v1102
      %v1301 = vpop.f32.mrb[0].mxu0
      %v1302 = vadd.f32 0.0, %v1301
      %v1303 = vpop.f32.mrb[0].mxu0
      %1304 = vmatprep.mubr.f32.mxu0 0.0
      %1305 = vmatmul.mubr.f32.gmra.mrb[0].mxu0 %v1105
      %v1306 = vpop.f32.mrb[0].mxu0
      %v1307 = vadd.f32 0.0, %v1306
      %v1308 = vpop.f32.mrb[0].mxu0
      %1309 = vmatprep.mubr.f32.mxu0 0.0
      %1310 = vmatmul.mubr.f32.gmra.mrb[0].mxu0 %v1108
      %v1311 = vpop.f32.mrb[0].mxu0
      %v1312 = vadd.f32 0.0, %v1311
      %v1313 = vpop.f32.mrb[0].mxu0
      %1314 = vmatprep.mubr.f32.mxu0 0.0
      %1315 = vmatmul.mubr.f32.gmra.mrb[0].mxu0 %v1111
      %v1316 = vpop.f32.mrb[0].mxu0
      %v1317 = vadd.f32 0.0, %v1316
      %v1318 = vpop.f32.mrb[0].mxu0
      %1319 = vmatprep.mubr.f32.mxu0 0.0
      %1320 = vmatmul.mubr.f32.gmra.mrb[0].mxu0 %v1114
      %v1321 = vpop.f32.mrb[0].mxu0
      %v1322 = vadd.f32 0.0, %v1321
      %v1323 = vpop.f32.mrb[0].mxu0
      %1324 = vmatprep.mubr.f32.mxu0 0.0
      %1325 = vmatmul.mubr.f32.gmra.mrb[0].mxu0 %v1117
      %v1326 = vpop.f32.mrb[0].mxu0
      %v1327 = vadd.f32 0.0, %v1326
      %v1328 = vpop.f32.mrb[0].mxu0
      %1329 = vmatprep.mubr.f32.mxu0 0.0
      %1330 = vmatmul.mubr.f32.gmra.mrb[0].mxu0 %v1120
      %v1331 = vpop.f32.mrb[0].mxu0
      %v1332 = vadd.f32 0.0, %v1331
      %v1333 = vpop.f32.mrb[0].mxu0
      %1334 = vmatprep.mubr.f32.mxu0 0.0
      %1335 = vmatmul.mubr.f32.gmra.mrb[0].mxu0 %v1123
      %v1336 = vpop.f32.mrb[0].mxu0
      %v1337 = vadd.f32 0.0, %v1336
      %v1338 = vpop.f32.mrb[0].mxu0
      %1339 = vmatprep.mubr.f32.mxu0 0.0
      %1340 = vmatmul.mubr.f32.gmra.mrb[0].mxu0 %v1126
      %v1341 = vpop.f32.mrb[0].mxu0
      %v1342 = vadd.f32 0.0, %v1341
      %v1343 = vpop.f32.mrb[0].mxu0
      %1344 = vmatprep.mubr.f32.mxu0 0.0
      %1345 = vmatmul.mubr.f32.gmra.mrb[0].mxu0 %v1129
      %v1346 = vpop.f32.mrb[0].mxu0
      %v1347 = vadd.f32 0.0, %v1346
      %v1348 = vpop.f32.mrb[0].mxu0
      %1349 = vmatprep.mubr.f32.mxu0 0.0
      %1350 = vmatmul.mubr.f32.gmra.mrb[0].mxu0 %v1132
      %v1351 = vpop.f32.mrb[0].mxu0
      %v1352 = vadd.f32 0.0, %v1351
      %v1353 = vpop.f32.mrb[0].mxu0
      %1354 = vmatprep.mubr.f32.mxu0 0.0
      %1355 = vmatmul.mubr.f32.gmra.mrb[0].mxu0 %v1135
      %v1356 = vpop.f32.mrb[0].mxu0
      %v1357 = vadd.f32 0.0, %v1356
      %v1358 = vpop.f32.mrb[0].mxu0
      %1359 = vmatprep.mubr.f32.mxu0 0.0
      %1360 = vmatmul.mubr.f32.gmra.mrb[0].mxu0 %v1138
      %v1361 = vpop.f32.mrb[0].mxu0
      %v1362 = vadd.f32 0.0, %v1361
      %v1363 = vpop.f32.mrb[0].mxu0
      %1364 = vdwg.mxu0
      %v1366 = vsel %vm269, %v973, 0
      %v1369 = vsel %vm269, %v974, 0
      %v1372 = vsel %vm269, %v975, 0
      %v1375 = vsel %vm269, %v976, 0
      %v1378 = vsel %vm269, %v977, 0
      %v1381 = vsel %vm269, %v978, 0
      %v1384 = vsel %vm269, %v979, 0
      %v1387 = vsel %vm269, %v980, 0
      %v1390 = vsel %vm269, %v981, 0
      %v1393 = vsel %vm269, %v982, 0
      %v1396 = vsel %vm269, %v983, 0
      %v1399 = vsel %vm269, %v984, 0
      %v1402 = vsel %vm269, %v985, 0
      %v1405 = vsel %vm269, %v986, 0
      %v1408 = vsel %vm269, %v987, 0
      %v1411 = vsel %vm269, %v988, 0
      %v1414 = vsel %vm269, %v989, 0
      %v1417 = vsel %vm269, %v990, 0
      %v1420 = vsel %vm269, %v991, 0
      %v1423 = vsel %vm269, %v992, 0
      %v1426 = vsel %vm269, %v993, 0
      %v1429 = vsel %vm269, %v994, 0
      %v1432 = vsel %vm269, %v995, 0
      %v1435 = vsel %vm269, %v996, 0
      %v1438 = vsel %vm269, %v997, 0
      %v1441 = vsel %vm269, %v998, 0
      %v1444 = vsel %vm269, %v999, 0
      %v1447 = vsel %vm269, %v1000, 0
      %v1450 = vsel %vm269, %v1001, 0
      %v1453 = vsel %vm269, %v1002, 0
      %v1456 = vsel %vm269, %v1003, 0
      %v1459 = vsel %vm269, %v1004, 0
      %1461 = vmatprep.subr.mxu0 0.0
      %1462 = vmatpush1.msra.mxu0 %v1005
      %1463 = vmatprep.subr.mxu0 0.0
      %1464 = vmatpush1.msra.mxu0 %v1006
      %1465 = vmatprep.subr.mxu0 0.0
      %1466 = vmatpush1.msra.mxu0 %v1007
      %1467 = vmatprep.subr.mxu0 0.0
      %1468 = vmatpush1.msra.mxu0 0.0
      %1469 = vmatprep.subr.mxu0 0.0
      %1470 = vmatpush1.msra.mxu0 0.0
      %1471 = vmatprep.subr.mxu0 0.0
      %1472 = vmatpush1.msra.mxu0 0.0
      %1473 = vmatprep.subr.mxu0 0.0
      %1474 = vmatpush1.msra.mxu0 0.0
      %1475 = vmatprep.subr.mxu0 0.0
      %1476 = vmatpush1.msra.mxu0 0.0
      %1477 = vmatprep.subr.mxu0 0.0
      %1478 = vmatpush1.msra.mxu0 0.0
      %1479 = vmatprep.subr.mxu0 0.0
      %1480 = vmatpush1.msra.mxu0 0.0
      %1481 = vmatprep.subr.mxu0 0.0
      %1482 = vmatpush1.msra.mxu0 0.0
      %1483 = vmatprep.subr.mxu0 0.0
      %1484 = vmatpush1.msra.mxu0 0.0
      %1485 = vmatprep.subr.mxu0 0.0
      %1486 = vmatpush1.msra.mxu0 0.0
      %1487 = vmatprep.subr.mxu0 0.0
      %1488 = vmatpush1.msra.mxu0 0.0
      %1489 = vmatprep.subr.mxu0 0.0
      %1490 = vmatpush1.msra.mxu0 0.0
      %1491 = vmatprep.subr.mxu0 0.0
      %1492 = vmatpush1.msra.mxu0 0.0
      %1493 = vmatprep.subr.mxu0 0.0
      %1494 = vmatpush1.msra.mxu0 0.0
      %1495 = vmatprep.subr.mxu0 0.0
      %1496 = vmatpush1.msra.mxu0 0.0
      %1497 = vmatprep.subr.mxu0 0.0
      %1498 = vmatpush1.msra.mxu0 0.0
      %1499 = vmatprep.subr.mxu0 0.0
      %1500 = vmatpush1.msra.mxu0 0.0
      %1501 = vmatprep.subr.mxu0 0.0
      %1502 = vmatpush1.msra.mxu0 0.0
      %1503 = vmatprep.subr.mxu0 0.0
      %1504 = vmatpush1.msra.mxu0 0.0
      %1505 = vmatprep.subr.mxu0 0.0
      %1506 = vmatpush1.msra.mxu0 0.0
      %1507 = vmatprep.subr.mxu0 0.0
      %1508 = vmatpush1.msra.mxu0 0.0
      %1509 = vmatprep.subr.mxu0 0.0
      %1510 = vmatpush1.msra.mxu0 0.0
      %1511 = vmatprep.subr.mxu0 0.0
      %1512 = vmatpush1.msra.mxu0 0.0
      %1513 = vmatprep.subr.mxu0 0.0
      %1514 = vmatpush1.msra.mxu0 0.0
      %1515 = vmatprep.subr.mxu0 0.0
      %1516 = vmatpush1.msra.mxu0 0.0
      %1517 = vmatprep.subr.mxu0 0.0
      %1518 = vmatpush1.msra.mxu0 0.0
      %1519 = vmatprep.subr.mxu0 0.0
      %1520 = vmatpush1.msra.mxu0 0.0
      %1521 = vmatprep.subr.mxu0 0.0
      %1522 = vmatpush1.msra.mxu0 0.0
      %1523 = vmatprep.subr.mxu0 0.0
      %1524 = vmatpush1.msra.mxu0 0.0
      %1525 = vmatprep.mubr.f32.mxu0 0.0
      %1526 = vmatmul.mubr.f32.gmra.mrb[0].mxu0 %v1366
      %v1527 = vpop.f32.mrb[0].mxu0
      %v1528 = vadd.f32 %v1207, %v1527
      %v1529 = vpop.f32.mrb[0].mxu0
      %1530 = vmatprep.mubr.f32.mxu0 0.0
      %1531 = vmatmul.mubr.f32.gmra.mrb[0].mxu0 %v1369
      %v1532 = vpop.f32.mrb[0].mxu0
      %v1533 = vadd.f32 %v1212, %v1532
      %v1534 = vpop.f32.mrb[0].mxu0
      %1535 = vmatprep.mubr.f32.mxu0 0.0
      %1536 = vmatmul.mubr.f32.gmra.mrb[0].mxu0 %v1372
      %v1537 = vpop.f32.mrb[0].mxu0
      %v1538 = vadd.f32 %v1217, %v1537
      %v1539 = vpop.f32.mrb[0].mxu0
      %1540 = vmatprep.mubr.f32.mxu0 0.0
      %1541 = vmatmul.mubr.f32.gmra.mrb[0].mxu0 %v1375
      %v1542 = vpop.f32.mrb[0].mxu0
      %v1543 = vadd.f32 %v1222, %v1542
      %v1544 = vpop.f32.mrb[0].mxu0
      %1545 = vmatprep.mubr.f32.mxu0 0.0
      %1546 = vmatmul.mubr.f32.gmra.mrb[0].mxu0 %v1378
      %v1547 = vpop.f32.mrb[0].mxu0
      %v1548 = vadd.f32 %v1227, %v1547
      %v1549 = vpop.f32.mrb[0].mxu0
      %1550 = vmatprep.mubr.f32.mxu0 0.0
      %1551 = vmatmul.mubr.f32.gmra.mrb[0].mxu0 %v1381
      %v1552 = vpop.f32.mrb[0].mxu0
      %v1553 = vadd.f32 %v1232, %v1552
      %v1554 = vpop.f32.mrb[0].mxu0
      %1555 = vmatprep.mubr.f32.mxu0 0.0
      %1556 = vmatmul.mubr.f32.gmra.mrb[0].mxu0 %v1384
      %v1557 = vpop.f32.mrb[0].mxu0
      %v1558 = vadd.f32 %v1237, %v1557
      %v1559 = vpop.f32.mrb[0].mxu0
      %1560 = vmatprep.mubr.f32.mxu0 0.0
      %1561 = vmatmul.mubr.f32.gmra.mrb[0].mxu0 %v1387
      %v1562 = vpop.f32.mrb[0].mxu0
      %v1563 = vadd.f32 %v1242, %v1562
      %v1564 = vpop.f32.mrb[0].mxu0
      %1565 = vmatprep.mubr.f32.mxu0 0.0
      %1566 = vmatmul.mubr.f32.gmra.mrb[0].mxu0 %v1390
      %v1567 = vpop.f32.mrb[0].mxu0
      %v1568 = vadd.f32 %v1247, %v1567
      %v1569 = vpop.f32.mrb[0].mxu0
      %1570 = vmatprep.mubr.f32.mxu0 0.0
      %1571 = vmatmul.mubr.f32.gmra.mrb[0].mxu0 %v1393
      %v1572 = vpop.f32.mrb[0].mxu0
      %v1573 = vadd.f32 %v1252, %v1572
      %v1574 = vpop.f32.mrb[0].mxu0
      %1575 = vmatprep.mubr.f32.mxu0 0.0
      %1576 = vmatmul.mubr.f32.gmra.mrb[0].mxu0 %v1396
      %v1577 = vpop.f32.mrb[0].mxu0
      %v1578 = vadd.f32 %v1257, %v1577
      %v1579 = vpop.f32.mrb[0].mxu0
      %1580 = vmatprep.mubr.f32.mxu0 0.0
      %1581 = vmatmul.mubr.f32.gmra.mrb[0].mxu0 %v1399
      %v1582 = vpop.f32.mrb[0].mxu0
      %v1583 = vadd.f32 %v1262, %v1582
      %v1584 = vpop.f32.mrb[0].mxu0
      %1585 = vmatprep.mubr.f32.mxu0 0.0
      %1586 = vmatmul.mubr.f32.gmra.mrb[0].mxu0 %v1402
      %v1587 = vpop.f32.mrb[0].mxu0
      %v1588 = vadd.f32 %v1267, %v1587
      %v1589 = vpop.f32.mrb[0].mxu0
      %1590 = vmatprep.mubr.f32.mxu0 0.0
      %1591 = vmatmul.mubr.f32.gmra.mrb[0].mxu0 %v1405
      %v1592 = vpop.f32.mrb[0].mxu0
      %v1593 = vadd.f32 %v1272, %v1592
      %v1594 = vpop.f32.mrb[0].mxu0
      %1595 = vmatprep.mubr.f32.mxu0 0.0
      %1596 = vmatmul.mubr.f32.gmra.mrb[0].mxu0 %v1408
      %v1597 = vpop.f32.mrb[0].mxu0
      %v1598 = vadd.f32 %v1277, %v1597
      %v1599 = vpop.f32.mrb[0].mxu0
      %1600 = vmatprep.mubr.f32.mxu0 0.0
      %1601 = vmatmul.mubr.f32.gmra.mrb[0].mxu0 %v1411
      %v1602 = vpop.f32.mrb[0].mxu0
      %v1603 = vadd.f32 %v1282, %v1602
      %v1604 = vpop.f32.mrb[0].mxu0
      %1605 = vmatprep.mubr.f32.mxu0 0.0
      %1606 = vmatmul.mubr.f32.gmra.mrb[0].mxu0 %v1414
      %v1607 = vpop.f32.mrb[0].mxu0
      %v1608 = vadd.f32 %v1287, %v1607
      %v1609 = vpop.f32.mrb[0].mxu0
      %1610 = vmatprep.mubr.f32.mxu0 0.0
      %1611 = vmatmul.mubr.f32.gmra.mrb[0].mxu0 %v1417
      %v1612 = vpop.f32.mrb[0].mxu0
      %v1613 = vadd.f32 %v1292, %v1612
      %v1614 = vpop.f32.mrb[0].mxu0
      %1615 = vmatprep.mubr.f32.mxu0 0.0
      %1616 = vmatmul.mubr.f32.gmra.mrb[0].mxu0 %v1420
      %v1617 = vpop.f32.mrb[0].mxu0
      %v1618 = vadd.f32 %v1297, %v1617
      %v1619 = vpop.f32.mrb[0].mxu0
      %1620 = vmatprep.mubr.f32.mxu0 0.0
      %1621 = vmatmul.mubr.f32.gmra.mrb[0].mxu0 %v1423
      %v1622 = vpop.f32.mrb[0].mxu0
      %v1623 = vadd.f32 %v1302, %v1622
      %v1624 = vpop.f32.mrb[0].mxu0
      %1625 = vmatprep.mubr.f32.mxu0 0.0
      %1626 = vmatmul.mubr.f32.gmra.mrb[0].mxu0 %v1426
      %v1627 = vpop.f32.mrb[0].mxu0
      %v1628 = vadd.f32 %v1307, %v1627
      %v1629 = vpop.f32.mrb[0].mxu0
      %1630 = vmatprep.mubr.f32.mxu0 0.0
      %1631 = vmatmul.mubr.f32.gmra.mrb[0].mxu0 %v1429
      %v1632 = vpop.f32.mrb[0].mxu0
      %v1633 = vadd.f32 %v1312, %v1632
      %v1634 = vpop.f32.mrb[0].mxu0
      %1635 = vmatprep.mubr.f32.mxu0 0.0
      %1636 = vmatmul.mubr.f32.gmra.mrb[0].mxu0 %v1432
      %v1637 = vpop.f32.mrb[0].mxu0
      %v1638 = vadd.f32 %v1317, %v1637
      %v1639 = vpop.f32.mrb[0].mxu0
      %1640 = vmatprep.mubr.f32.mxu0 0.0
      %1641 = vmatmul.mubr.f32.gmra.mrb[0].mxu0 %v1435
      %v1642 = vpop.f32.mrb[0].mxu0
      %v1643 = vadd.f32 %v1322, %v1642
      %v1644 = vpop.f32.mrb[0].mxu0
      %1645 = vmatprep.mubr.f32.mxu0 0.0
      %1646 = vmatmul.mubr.f32.gmra.mrb[0].mxu0 %v1438
      %v1647 = vpop.f32.mrb[0].mxu0
      %v1648 = vadd.f32 %v1327, %v1647
      %v1649 = vpop.f32.mrb[0].mxu0
      %1650 = vmatprep.mubr.f32.mxu0 0.0
      %1651 = vmatmul.mubr.f32.gmra.mrb[0].mxu0 %v1441
      %v1652 = vpop.f32.mrb[0].mxu0
      %v1653 = vadd.f32 %v1332, %v1652
      %v1654 = vpop.f32.mrb[0].mxu0
      %1655 = vmatprep.mubr.f32.mxu0 0.0
      %1656 = vmatmul.mubr.f32.gmra.mrb[0].mxu0 %v1444
      %v1657 = vpop.f32.mrb[0].mxu0
      %v1658 = vadd.f32 %v1337, %v1657
      %v1659 = vpop.f32.mrb[0].mxu0
      %1660 = vmatprep.mubr.f32.mxu0 0.0
      %1661 = vmatmul.mubr.f32.gmra.mrb[0].mxu0 %v1447
      %v1662 = vpop.f32.mrb[0].mxu0
      %v1663 = vadd.f32 %v1342, %v1662
      %v1664 = vpop.f32.mrb[0].mxu0
      %1665 = vmatprep.mubr.f32.mxu0 0.0
      %1666 = vmatmul.mubr.f32.gmra.mrb[0].mxu0 %v1450
      %v1667 = vpop.f32.mrb[0].mxu0
      %v1668 = vadd.f32 %v1347, %v1667
      %v1669 = vpop.f32.mrb[0].mxu0
      %1670 = vmatprep.mubr.f32.mxu0 0.0
      %1671 = vmatmul.mubr.f32.gmra.mrb[0].mxu0 %v1453
      %v1672 = vpop.f32.mrb[0].mxu0
      %v1673 = vadd.f32 %v1352, %v1672
      %v1674 = vpop.f32.mrb[0].mxu0
      %1675 = vmatprep.mubr.f32.mxu0 0.0
      %1676 = vmatmul.mubr.f32.gmra.mrb[0].mxu0 %v1456
      %v1677 = vpop.f32.mrb[0].mxu0
      %v1678 = vadd.f32 %v1357, %v1677
      %v1679 = vpop.f32.mrb[0].mxu0
      %1680 = vmatprep.mubr.f32.mxu0 0.0
      %1681 = vmatmul.mubr.f32.gmra.mrb[0].mxu0 %v1459
      %v1682 = vpop.f32.mrb[0].mxu0
      %v1683 = vadd.f32 %v1362, %v1682
      %v1684 = vpop.f32.mrb[0].mxu0
      %1685 = vdwg.mxu0
      %s1686 = scalar_lea.vmem [#allocation2], 32
      %v1687 = vld [vmem:[%s1686] sm:$0xff]
      %v1688 = vld [vmem:[%s1686 + $0x8] sm:$0xff]
      %v1689 = vld [vmem:[%s1686 + $0x10] sm:$0xff]
      %v1690 = vld [vmem:[%s1686 + $0x18] sm:$0xff]
      %v1691 = vld [vmem:[%s1686 + $0x20] sm:$0xff]
      %v1692 = vld [vmem:[%s1686 + $0x28] sm:$0xff]
      %v1693 = vld [vmem:[%s1686 + $0x30] sm:$0xff]
      %v1694 = vld [vmem:[%s1686 + $0x38] sm:$0xff]
      %v1695 = vld [vmem:[%s1686 + $0x40] sm:$0xff]
      %v1696 = vld [vmem:[%s1686 + $0x48] sm:$0xff]
      %v1697 = vld [vmem:[%s1686 + $0x50] sm:$0xff]
      %v1698 = vld [vmem:[%s1686 + $0x58] sm:$0xff]
      %v1699 = vld [vmem:[%s1686 + $0x60] sm:$0xff]
      %v1700 = vld [vmem:[%s1686 + $0x68] sm:$0xff]
      %v1701 = vld [vmem:[%s1686 + $0x70] sm:$0xff]
      %v1702 = vld [vmem:[%s1686 + $0x78] sm:$0xff]
      %v1703 = vld [vmem:[%s1686 + $0x80] sm:$0xff]
      %v1704 = vld [vmem:[%s1686 + $0x88] sm:$0xff]
      %v1705 = vld [vmem:[%s1686 + $0x90] sm:$0xff]
      %v1706 = vld [vmem:[%s1686 + $0x98] sm:$0xff]
      %v1707 = vld [vmem:[%s1686 + $0xa0] sm:$0xff]
      %v1708 = vld [vmem:[%s1686 + $0xa8] sm:$0xff]
      %v1709 = vld [vmem:[%s1686 + $0xb0] sm:$0xff]
      %v1710 = vld [vmem:[%s1686 + $0xb8] sm:$0xff]
      %v1711 = vld [vmem:[%s1686 + $0xc0] sm:$0xff]
      %v1712 = vld [vmem:[%s1686 + $0xc8] sm:$0xff]
      %v1713 = vld [vmem:[%s1686 + $0xd0] sm:$0xff]
      %v1714 = vld [vmem:[%s1686 + $0xd8] sm:$0xff]
      %v1715 = vld [vmem:[%s1686 + $0xe0] sm:$0xff]
      %v1716 = vld [vmem:[%s1686 + $0xe8] sm:$0xff]
      %v1717 = vld [vmem:[%s1686 + $0xf0] sm:$0xff]
      %v1718 = vld [vmem:[%s1686 + $0xf8] sm:$0xff]
      %s1719 = scalar_lea.vmem %s3, 48
      %v1720 = vld [vmem:[%s1719] sm:$0xff]
      %v1721 = vld [vmem:[%s1719 + $0x8] sm:$0xff]
      %v1722 = vld [vmem:[%s1719 + $0x10] sm:$0xff]
      %v1724 = vsel %vm269, %v1687, 0
      %v1727 = vsel %vm269, %v1688, 0
      %v1730 = vsel %vm269, %v1689, 0
      %v1733 = vsel %vm269, %v1690, 0
      %v1736 = vsel %vm269, %v1691, 0
      %v1739 = vsel %vm269, %v1692, 0
      %v1742 = vsel %vm269, %v1693, 0
      %v1745 = vsel %vm269, %v1694, 0
      %v1748 = vsel %vm269, %v1695, 0
      %v1751 = vsel %vm269, %v1696, 0
      %v1754 = vsel %vm269, %v1697, 0
      %v1757 = vsel %vm269, %v1698, 0
      %v1760 = vsel %vm269, %v1699, 0
      %v1763 = vsel %vm269, %v1700, 0
      %v1766 = vsel %vm269, %v1701, 0
      %v1769 = vsel %vm269, %v1702, 0
      %v1772 = vsel %vm269, %v1703, 0
      %v1775 = vsel %vm269, %v1704, 0
      %v1778 = vsel %vm269, %v1705, 0
      %v1781 = vsel %vm269, %v1706, 0
      %v1784 = vsel %vm269, %v1707, 0
      %v1787 = vsel %vm269, %v1708, 0
      %v1790 = vsel %vm269, %v1709, 0
      %v1793 = vsel %vm269, %v1710, 0
      %v1796 = vsel %vm269, %v1711, 0
      %v1799 = vsel %vm269, %v1712, 0
      %v1802 = vsel %vm269, %v1713, 0
      %v1805 = vsel %vm269, %v1714, 0
      %v1808 = vsel %vm269, %v1715, 0
      %v1811 = vsel %vm269, %v1716, 0
      %v1814 = vsel %vm269, %v1717, 0
      %v1817 = vsel %vm269, %v1718, 0
      %1819 = vmatprep.subr.mxu0 0.0
      %1820 = vmatpush1.msra.mxu0 %v1720
      %1821 = vmatprep.subr.mxu0 0.0
      %1822 = vmatpush1.msra.mxu0 %v1721
      %1823 = vmatprep.subr.mxu0 0.0
      %1824 = vmatpush1.msra.mxu0 %v1722
      %1825 = vmatprep.subr.mxu0 0.0
      %1826 = vmatpush1.msra.mxu0 0.0
      %1827 = vmatprep.subr.mxu0 0.0
      %1828 = vmatpush1.msra.mxu0 0.0
      %1829 = vmatprep.subr.mxu0 0.0
      %1830 = vmatpush1.msra.mxu0 0.0
      %1831 = vmatprep.subr.mxu0 0.0
      %1832 = vmatpush1.msra.mxu0 0.0
      %1833 = vmatprep.subr.mxu0 0.0
      %1834 = vmatpush1.msra.mxu0 0.0
      %1835 = vmatprep.subr.mxu0 0.0
      %1836 = vmatpush1.msra.mxu0 0.0
      %1837 = vmatprep.subr.mxu0 0.0
      %1838 = vmatpush1.msra.mxu0 0.0
      %1839 = vmatprep.subr.mxu0 0.0
      %1840 = vmatpush1.msra.mxu0 0.0
      %1841 = vmatprep.subr.mxu0 0.0
      %1842 = vmatpush1.msra.mxu0 0.0
      %1843 = vmatprep.subr.mxu0 0.0
      %1844 = vmatpush1.msra.mxu0 0.0
      %1845 = vmatprep.subr.mxu0 0.0
      %1846 = vmatpush1.msra.mxu0 0.0
      %1847 = vmatprep.subr.mxu0 0.0
      %1848 = vmatpush1.msra.mxu0 0.0
      %1849 = vmatprep.subr.mxu0 0.0
      %1850 = vmatpush1.msra.mxu0 0.0
      %1851 = vmatprep.subr.mxu0 0.0
      %1852 = vmatpush1.msra.mxu0 0.0
      %1853 = vmatprep.subr.mxu0 0.0
      %1854 = vmatpush1.msra.mxu0 0.0
      %1855 = vmatprep.subr.mxu0 0.0
      %1856 = vmatpush1.msra.mxu0 0.0
      %1857 = vmatprep.subr.mxu0 0.0
      %1858 = vmatpush1.msra.mxu0 0.0
      %1859 = vmatprep.subr.mxu0 0.0
      %1860 = vmatpush1.msra.mxu0 0.0
      %1861 = vmatprep.subr.mxu0 0.0
      %1862 = vmatpush1.msra.mxu0 0.0
      %1863 = vmatprep.subr.mxu0 0.0
      %1864 = vmatpush1.msra.mxu0 0.0
      %1865 = vmatprep.subr.mxu0 0.0
      %1866 = vmatpush1.msra.mxu0 0.0
      %1867 = vmatprep.subr.mxu0 0.0
      %1868 = vmatpush1.msra.mxu0 0.0
      %1869 = vmatprep.subr.mxu0 0.0
      %1870 = vmatpush1.msra.mxu0 0.0
      %1871 = vmatprep.subr.mxu0 0.0
      %1872 = vmatpush1.msra.mxu0 0.0
      %1873 = vmatprep.subr.mxu0 0.0
      %1874 = vmatpush1.msra.mxu0 0.0
      %1875 = vmatprep.subr.mxu0 0.0
      %1876 = vmatpush1.msra.mxu0 0.0
      %1877 = vmatprep.subr.mxu0 0.0
      %1878 = vmatpush1.msra.mxu0 0.0
      %1879 = vmatprep.subr.mxu0 0.0
      %1880 = vmatpush1.msra.mxu0 0.0
      %1881 = vmatprep.subr.mxu0 0.0
      %1882 = vmatpush1.msra.mxu0 0.0
      %1883 = vmatprep.mubr.f32.mxu0 0.0
      %1884 = vmatmul.mubr.f32.gmra.mrb[0].mxu0 %v1724
      %v1885 = vpop.f32.mrb[0].mxu0
      %v1886 = vadd.f32 0.0, %v1885
      %v1887 = vpop.f32.mrb[0].mxu0
      %1888 = vmatprep.mubr.f32.mxu0 0.0
      %1889 = vmatmul.mubr.f32.gmra.mrb[0].mxu0 %v1727
      %v1890 = vpop.f32.mrb[0].mxu0
      %v1891 = vadd.f32 0.0, %v1890
      %v1892 = vpop.f32.mrb[0].mxu0
      %1893 = vmatprep.mubr.f32.mxu0 0.0
      %1894 = vmatmul.mubr.f32.gmra.mrb[0].mxu0 %v1730
      %v1895 = vpop.f32.mrb[0].mxu0
      %v1896 = vadd.f32 0.0, %v1895
      %v1897 = vpop.f32.mrb[0].mxu0
      %1898 = vmatprep.mubr.f32.mxu0 0.0
      %1899 = vmatmul.mubr.f32.gmra.mrb[0].mxu0 %v1733
      %v1900 = vpop.f32.mrb[0].mxu0
      %v1901 = vadd.f32 0.0, %v1900
      %v1902 = vpop.f32.mrb[0].mxu0
      %1903 = vmatprep.mubr.f32.mxu0 0.0
      %1904 = vmatmul.mubr.f32.gmra.mrb[0].mxu0 %v1736
      %v1905 = vpop.f32.mrb[0].mxu0
      %v1906 = vadd.f32 0.0, %v1905
      %v1907 = vpop.f32.mrb[0].mxu0
      %1908 = vmatprep.mubr.f32.mxu0 0.0
      %1909 = vmatmul.mubr.f32.gmra.mrb[0].mxu0 %v1739
      %v1910 = vpop.f32.mrb[0].mxu0
      %v1911 = vadd.f32 0.0, %v1910
      %v1912 = vpop.f32.mrb[0].mxu0
      %1913 = vmatprep.mubr.f32.mxu0 0.0
      %1914 = vmatmul.mubr.f32.gmra.mrb[0].mxu0 %v1742
      %v1915 = vpop.f32.mrb[0].mxu0
      %v1916 = vadd.f32 0.0, %v1915
      %v1917 = vpop.f32.mrb[0].mxu0
      %1918 = vmatprep.mubr.f32.mxu0 0.0
      %1919 = vmatmul.mubr.f32.gmra.mrb[0].mxu0 %v1745
      %v1920 = vpop.f32.mrb[0].mxu0
      %v1921 = vadd.f32 0.0, %v1920
      %v1922 = vpop.f32.mrb[0].mxu0
      %1923 = vmatprep.mubr.f32.mxu0 0.0
      %1924 = vmatmul.mubr.f32.gmra.mrb[0].mxu0 %v1748
      %v1925 = vpop.f32.mrb[0].mxu0
      %v1926 = vadd.f32 0.0, %v1925
      %v1927 = vpop.f32.mrb[0].mxu0
      %1928 = vmatprep.mubr.f32.mxu0 0.0
      %1929 = vmatmul.mubr.f32.gmra.mrb[0].mxu0 %v1751
      %v1930 = vpop.f32.mrb[0].mxu0
      %v1931 = vadd.f32 0.0, %v1930
      %v1932 = vpop.f32.mrb[0].mxu0
      %1933 = vmatprep.mubr.f32.mxu0 0.0
      %1934 = vmatmul.mubr.f32.gmra.mrb[0].mxu0 %v1754
      %v1935 = vpop.f32.mrb[0].mxu0
      %v1936 = vadd.f32 0.0, %v1935
      %v1937 = vpop.f32.mrb[0].mxu0
      %1938 = vmatprep.mubr.f32.mxu0 0.0
      %1939 = vmatmul.mubr.f32.gmra.mrb[0].mxu0 %v1757
      %v1940 = vpop.f32.mrb[0].mxu0
      %v1941 = vadd.f32 0.0, %v1940
      %v1942 = vpop.f32.mrb[0].mxu0
      %1943 = vmatprep.mubr.f32.mxu0 0.0
      %1944 = vmatmul.mubr.f32.gmra.mrb[0].mxu0 %v1760
      %v1945 = vpop.f32.mrb[0].mxu0
      %v1946 = vadd.f32 0.0, %v1945
      %v1947 = vpop.f32.mrb[0].mxu0
      %1948 = vmatprep.mubr.f32.mxu0 0.0
      %1949 = vmatmul.mubr.f32.gmra.mrb[0].mxu0 %v1763
      %v1950 = vpop.f32.mrb[0].mxu0
      %v1951 = vadd.f32 0.0, %v1950
      %v1952 = vpop.f32.mrb[0].mxu0
      %1953 = vmatprep.mubr.f32.mxu0 0.0
      %1954 = vmatmul.mubr.f32.gmra.mrb[0].mxu0 %v1766
      %v1955 = vpop.f32.mrb[0].mxu0
      %v1956 = vadd.f32 0.0, %v1955
      %v1957 = vpop.f32.mrb[0].mxu0
      %1958 = vmatprep.mubr.f32.mxu0 0.0
      %1959 = vmatmul.mubr.f32.gmra.mrb[0].mxu0 %v1769
      %v1960 = vpop.f32.mrb[0].mxu0
      %v1961 = vadd.f32 0.0, %v1960
      %v1962 = vpop.f32.mrb[0].mxu0
      %1963 = vmatprep.mubr.f32.mxu0 0.0
      %1964 = vmatmul.mubr.f32.gmra.mrb[0].mxu0 %v1772
      %v1965 = vpop.f32.mrb[0].mxu0
      %v1966 = vadd.f32 0.0, %v1965
      %v1967 = vpop.f32.mrb[0].mxu0
      %1968 = vmatprep.mubr.f32.mxu0 0.0
      %1969 = vmatmul.mubr.f32.gmra.mrb[0].mxu0 %v1775
      %v1970 = vpop.f32.mrb[0].mxu0
      %v1971 = vadd.f32 0.0, %v1970
      %v1972 = vpop.f32.mrb[0].mxu0
      %1973 = vmatprep.mubr.f32.mxu0 0.0
      %1974 = vmatmul.mubr.f32.gmra.mrb[0].mxu0 %v1778
      %v1975 = vpop.f32.mrb[0].mxu0
      %v1976 = vadd.f32 0.0, %v1975
      %v1977 = vpop.f32.mrb[0].mxu0
      %1978 = vmatprep.mubr.f32.mxu0 0.0
      %1979 = vmatmul.mubr.f32.gmra.mrb[0].mxu0 %v1781
      %v1980 = vpop.f32.mrb[0].mxu0
      %v1981 = vadd.f32 0.0, %v1980
      %v1982 = vpop.f32.mrb[0].mxu0
      %1983 = vmatprep.mubr.f32.mxu0 0.0
      %1984 = vmatmul.mubr.f32.gmra.mrb[0].mxu0 %v1784
      %v1985 = vpop.f32.mrb[0].mxu0
      %v1986 = vadd.f32 0.0, %v1985
      %v1987 = vpop.f32.mrb[0].mxu0
      %1988 = vmatprep.mubr.f32.mxu0 0.0
      %1989 = vmatmul.mubr.f32.gmra.mrb[0].mxu0 %v1787
      %v1990 = vpop.f32.mrb[0].mxu0
      %v1991 = vadd.f32 0.0, %v1990
      %v1992 = vpop.f32.mrb[0].mxu0
      %1993 = vmatprep.mubr.f32.mxu0 0.0
      %1994 = vmatmul.mubr.f32.gmra.mrb[0].mxu0 %v1790
      %v1995 = vpop.f32.mrb[0].mxu0
      %v1996 = vadd.f32 0.0, %v1995
      %v1997 = vpop.f32.mrb[0].mxu0
      %1998 = vmatprep.mubr.f32.mxu0 0.0
      %1999 = vmatmul.mubr.f32.gmra.mrb[0].mxu0 %v1793
      %v2000 = vpop.f32.mrb[0].mxu0
      %v2001 = vadd.f32 0.0, %v2000
      %v2002 = vpop.f32.mrb[0].mxu0
      %2003 = vmatprep.mubr.f32.mxu0 0.0
      %2004 = vmatmul.mubr.f32.gmra.mrb[0].mxu0 %v1796
      %v2005 = vpop.f32.mrb[0].mxu0
      %v2006 = vadd.f32 0.0, %v2005
      %v2007 = vpop.f32.mrb[0].mxu0
      %2008 = vmatprep.mubr.f32.mxu0 0.0
      %2009 = vmatmul.mubr.f32.gmra.mrb[0].mxu0 %v1799
      %v2010 = vpop.f32.mrb[0].mxu0
      %v2011 = vadd.f32 0.0, %v2010
      %v2012 = vpop.f32.mrb[0].mxu0
      %2013 = vmatprep.mubr.f32.mxu0 0.0
      %2014 = vmatmul.mubr.f32.gmra.mrb[0].mxu0 %v1802
      %v2015 = vpop.f32.mrb[0].mxu0
      %v2016 = vadd.f32 0.0, %v2015
      %v2017 = vpop.f32.mrb[0].mxu0
      %2018 = vmatprep.mubr.f32.mxu0 0.0
      %2019 = vmatmul.mubr.f32.gmra.mrb[0].mxu0 %v1805
      %v2020 = vpop.f32.mrb[0].mxu0
      %v2021 = vadd.f32 0.0, %v2020
      %v2022 = vpop.f32.mrb[0].mxu0
      %2023 = vmatprep.mubr.f32.mxu0 0.0
      %2024 = vmatmul.mubr.f32.gmra.mrb[0].mxu0 %v1808
      %v2025 = vpop.f32.mrb[0].mxu0
      %v2026 = vadd.f32 0.0, %v2025
      %v2027 = vpop.f32.mrb[0].mxu0
      %2028 = vmatprep.mubr.f32.mxu0 0.0
      %2029 = vmatmul.mubr.f32.gmra.mrb[0].mxu0 %v1811
      %v2030 = vpop.f32.mrb[0].mxu0
      %v2031 = vadd.f32 0.0, %v2030
      %v2032 = vpop.f32.mrb[0].mxu0
      %2033 = vmatprep.mubr.f32.mxu0 0.0
      %2034 = vmatmul.mubr.f32.gmra.mrb[0].mxu0 %v1814
      %v2035 = vpop.f32.mrb[0].mxu0
      %v2036 = vadd.f32 0.0, %v2035
      %v2037 = vpop.f32.mrb[0].mxu0
      %2038 = vmatprep.mubr.f32.mxu0 0.0
      %2039 = vmatmul.mubr.f32.gmra.mrb[0].mxu0 %v1817
      %v2040 = vpop.f32.mrb[0].mxu0
      %v2041 = vadd.f32 0.0, %v2040
      %v2042 = vpop.f32.mrb[0].mxu0
      %2043 = vdwg.mxu0
      %v2044 = vadd.f32 %v1528, %v1886
      %v2045 = vadd.f32 %v1533, %v1891
      %v2046 = vadd.f32 %v1538, %v1896
      %v2047 = vadd.f32 %v1543, %v1901
      %v2048 = vadd.f32 %v1548, %v1906
      %v2049 = vadd.f32 %v1553, %v1911
      %v2050 = vadd.f32 %v1558, %v1916
      %v2051 = vadd.f32 %v1563, %v1921
      %v2052 = vadd.f32 %v1568, %v1926
      %v2053 = vadd.f32 %v1573, %v1931
      %v2054 = vadd.f32 %v1578, %v1936
      %v2055 = vadd.f32 %v1583, %v1941
      %v2056 = vadd.f32 %v1588, %v1946
      %v2057 = vadd.f32 %v1593, %v1951
      %v2058 = vadd.f32 %v1598, %v1956
      %v2059 = vadd.f32 %v1603, %v1961
      %v2060 = vadd.f32 %v1608, %v1966
      %v2061 = vadd.f32 %v1613, %v1971
      %v2062 = vadd.f32 %v1618, %v1976
      %v2063 = vadd.f32 %v1623, %v1981
      %v2064 = vadd.f32 %v1628, %v1986
      %v2065 = vadd.f32 %v1633, %v1991
      %v2066 = vadd.f32 %v1638, %v1996
      %v2067 = vadd.f32 %v1643, %v2001
      %v2068 = vadd.f32 %v1648, %v2006
      %v2069 = vadd.f32 %v1653, %v2011
      %v2070 = vadd.f32 %v1658, %v2016
      %v2071 = vadd.f32 %v1663, %v2021
      %v2072 = vadd.f32 %v1668, %v2026
      %v2073 = vadd.f32 %v1673, %v2031
      %v2074 = vadd.f32 %v1678, %v2036
      %v2075 = vadd.f32 %v1683, %v2041
      %v2076 = vsel %vm874, %v2044, 0.0
      %v2077 = vsel %vm874, %v2045, 0.0
      %v2078 = vadd.f32 %v2076, %v2077
      %v2079 = vsel %vm874, %v2046, 0.0
      %v2080 = vadd.f32 %v2078, %v2079
      %v2081 = vsel %vm874, %v2047, 0.0
      %v2082 = vadd.f32 %v2080, %v2081
      %v2083 = vsel %vm874, %v2048, 0.0
      %v2084 = vadd.f32 %v2082, %v2083
      %v2085 = vsel %vm874, %v2049, 0.0
      %v2086 = vadd.f32 %v2084, %v2085
      %v2087 = vsel %vm874, %v2050, 0.0
      %v2088 = vadd.f32 %v2086, %v2087
      %v2089 = vsel %vm874, %v2051, 0.0
      %v2090 = vadd.f32 %v2088, %v2089
      %v2091 = vsel %vm874, %v2052, 0.0
      %v2092 = vadd.f32 %v2090, %v2091
      %v2093 = vsel %vm874, %v2053, 0.0
      %v2094 = vadd.f32 %v2092, %v2093
      %v2095 = vsel %vm874, %v2054, 0.0
      %v2096 = vadd.f32 %v2094, %v2095
      %v2097 = vsel %vm874, %v2055, 0.0
      %v2098 = vadd.f32 %v2096, %v2097
      %v2099 = vsel %vm874, %v2056, 0.0
      %v2100 = vadd.f32 %v2098, %v2099
      %v2101 = vsel %vm874, %v2057, 0.0
      %v2102 = vadd.f32 %v2100, %v2101
      %v2103 = vsel %vm874, %v2058, 0.0
      %v2104 = vadd.f32 %v2102, %v2103
      %v2105 = vsel %vm874, %v2059, 0.0
      %v2106 = vadd.f32 %v2104, %v2105
      %v2107 = vsel %vm874, %v2060, 0.0
      %v2108 = vadd.f32 %v2106, %v2107
      %v2109 = vsel %vm874, %v2061, 0.0
      %v2110 = vadd.f32 %v2108, %v2109
      %v2111 = vsel %vm874, %v2062, 0.0
      %v2112 = vadd.f32 %v2110, %v2111
      %v2113 = vsel %vm874, %v2063, 0.0
      %v2114 = vadd.f32 %v2112, %v2113
      %v2115 = vsel %vm874, %v2064, 0.0
      %v2116 = vadd.f32 %v2114, %v2115
      %v2117 = vsel %vm874, %v2065, 0.0
      %v2118 = vadd.f32 %v2116, %v2117
      %v2119 = vsel %vm874, %v2066, 0.0
      %v2120 = vadd.f32 %v2118, %v2119
      %v2121 = vsel %vm874, %v2067, 0.0
      %v2122 = vadd.f32 %v2120, %v2121
      %v2123 = vsel %vm874, %v2068, 0.0
      %v2124 = vadd.f32 %v2122, %v2123
      %v2125 = vsel %vm874, %v2069, 0.0
      %v2126 = vadd.f32 %v2124, %v2125
      %v2127 = vsel %vm874, %v2070, 0.0
      %v2128 = vadd.f32 %v2126, %v2127
      %v2129 = vsel %vm874, %v2071, 0.0
      %v2130 = vadd.f32 %v2128, %v2129
      %v2131 = vsel %vm874, %v2072, 0.0
      %v2132 = vadd.f32 %v2130, %v2131
      %v2133 = vsel %vm874, %v2073, 0.0
      %v2134 = vadd.f32 %v2132, %v2133
      %v2135 = vsel %vm874, %v2074, 0.0
      %v2136 = vadd.f32 %v2134, %v2135
      %v2137 = vsel %vm874, %v2075, 0.0
      %v2138 = vadd.f32 %v2136, %v2137
      %v2139 = vrot.slane %v2138, 4
      %v2140 = vadd.f32 %v2138, %v2139
      %v2141 = vrot.slane %v2140, 2
      %v2142 = vadd.f32 %v2140, %v2141
      %v2143 = vrot.slane %v2142, 1
      %v2144 = vadd.f32 %v2142, %v2143
      %vm2145 = vcmask 57344
      %2146 = vst.msk [vmem:[%s265] sm:$0x1] %vm2145, %v2144
      %v2147 = vmul.f32 %v2044, %v2044
      %v2148 = vmul.f32 %v2045, %v2045
      %v2149 = vmul.f32 %v2046, %v2046
      %v2150 = vmul.f32 %v2047, %v2047
      %v2151 = vmul.f32 %v2048, %v2048
      %v2152 = vmul.f32 %v2049, %v2049
      %v2153 = vmul.f32 %v2050, %v2050
      %v2154 = vmul.f32 %v2051, %v2051
      %v2155 = vmul.f32 %v2052, %v2052
      %v2156 = vmul.f32 %v2053, %v2053
      %v2157 = vmul.f32 %v2054, %v2054
      %v2158 = vmul.f32 %v2055, %v2055
      %v2159 = vmul.f32 %v2056, %v2056
      %v2160 = vmul.f32 %v2057, %v2057
      %v2161 = vmul.f32 %v2058, %v2058
      %v2162 = vmul.f32 %v2059, %v2059
      %v2163 = vmul.f32 %v2060, %v2060
      %v2164 = vmul.f32 %v2061, %v2061
      %v2165 = vmul.f32 %v2062, %v2062
      %v2166 = vmul.f32 %v2063, %v2063
      %v2167 = vmul.f32 %v2064, %v2064
      %v2168 = vmul.f32 %v2065, %v2065
      %v2169 = vmul.f32 %v2066, %v2066
      %v2170 = vmul.f32 %v2067, %v2067
      %v2171 = vmul.f32 %v2068, %v2068
      %v2172 = vmul.f32 %v2069, %v2069
      %v2173 = vmul.f32 %v2070, %v2070
      %v2174 = vmul.f32 %v2071, %v2071
      %v2175 = vmul.f32 %v2072, %v2072
      %v2176 = vmul.f32 %v2073, %v2073
      %v2177 = vmul.f32 %v2074, %v2074
      %v2178 = vmul.f32 %v2075, %v2075
      %v2179 = vsel %vm874, %v2147, 0.0
      %v2180 = vsel %vm874, %v2148, 0.0
      %v2181 = vadd.f32 %v2179, %v2180
      %v2182 = vsel %vm874, %v2149, 0.0
      %v2183 = vadd.f32 %v2181, %v2182
      %v2184 = vsel %vm874, %v2150, 0.0
      %v2185 = vadd.f32 %v2183, %v2184
      %v2186 = vsel %vm874, %v2151, 0.0
      %v2187 = vadd.f32 %v2185, %v2186
      %v2188 = vsel %vm874, %v2152, 0.0
      %v2189 = vadd.f32 %v2187, %v2188
      %v2190 = vsel %vm874, %v2153, 0.0
      %v2191 = vadd.f32 %v2189, %v2190
      %v2192 = vsel %vm874, %v2154, 0.0
      %v2193 = vadd.f32 %v2191, %v2192
      %v2194 = vsel %vm874, %v2155, 0.0
      %v2195 = vadd.f32 %v2193, %v2194
      %v2196 = vsel %vm874, %v2156, 0.0
      %v2197 = vadd.f32 %v2195, %v2196
      %v2198 = vsel %vm874, %v2157, 0.0
      %v2199 = vadd.f32 %v2197, %v2198
      %v2200 = vsel %vm874, %v2158, 0.0
      %v2201 = vadd.f32 %v2199, %v2200
      %v2202 = vsel %vm874, %v2159, 0.0
      %v2203 = vadd.f32 %v2201, %v2202
      %v2204 = vsel %vm874, %v2160, 0.0
      %v2205 = vadd.f32 %v2203, %v2204
      %v2206 = vsel %vm874, %v2161, 0.0
      %v2207 = vadd.f32 %v2205, %v2206
      %v2208 = vsel %vm874, %v2162, 0.0
      %v2209 = vadd.f32 %v2207, %v2208
      %v2210 = vsel %vm874, %v2163, 0.0
      %v2211 = vadd.f32 %v2209, %v2210
      %v2212 = vsel %vm874, %v2164, 0.0
      %v2213 = vadd.f32 %v2211, %v2212
      %v2214 = vsel %vm874, %v2165, 0.0
      %v2215 = vadd.f32 %v2213, %v2214
      %v2216 = vsel %vm874, %v2166, 0.0
      %v2217 = vadd.f32 %v2215, %v2216
      %v2218 = vsel %vm874, %v2167, 0.0
      %v2219 = vadd.f32 %v2217, %v2218
      %v2220 = vsel %vm874, %v2168, 0.0
      %v2221 = vadd.f32 %v2219, %v2220
      %v2222 = vsel %vm874, %v2169, 0.0
      %v2223 = vadd.f32 %v2221, %v2222
      %v2224 = vsel %vm874, %v2170, 0.0
      %v2225 = vadd.f32 %v2223, %v2224
      %v2226 = vsel %vm874, %v2171, 0.0
      %v2227 = vadd.f32 %v2225, %v2226
      %v2228 = vsel %vm874, %v2172, 0.0
      %v2229 = vadd.f32 %v2227, %v2228
      %v2230 = vsel %vm874, %v2173, 0.0
      %v2231 = vadd.f32 %v2229, %v2230
      %v2232 = vsel %vm874, %v2174, 0.0
      %v2233 = vadd.f32 %v2231, %v2232
      %v2234 = vsel %vm874, %v2175, 0.0
      %v2235 = vadd.f32 %v2233, %v2234
      %v2236 = vsel %vm874, %v2176, 0.0
      %v2237 = vadd.f32 %v2235, %v2236
      %v2238 = vsel %vm874, %v2177, 0.0
      %v2239 = vadd.f32 %v2237, %v2238
      %v2240 = vsel %vm874, %v2178, 0.0
      %v2241 = vadd.f32 %v2239, %v2240
      %v2242 = vrot.slane %v2241, 4
      %v2243 = vadd.f32 %v2241, %v2242
      %v2244 = vrot.slane %v2243, 2
      %v2245 = vadd.f32 %v2243, %v2244
      %v2246 = vrot.slane %v2245, 1
      %v2247 = vadd.f32 %v2245, %v2246
      %2248 = vst.msk [vmem:[%s268] sm:$0x1] %vm2145, %v2247
      %2249 = vst.msk [vmem:[%s262] sm:$0xff] %vm874, %v2044
      %2250 = vst.msk [vmem:[%s262 + $0x8] sm:$0xff] %vm874, %v2045
      %2251 = vst.msk [vmem:[%s262 + $0x10] sm:$0xff] %vm874, %v2046
      %2252 = vst.msk [vmem:[%s262 + $0x18] sm:$0xff] %vm874, %v2047
      %2253 = vst.msk [vmem:[%s262 + $0x20] sm:$0xff] %vm874, %v2048
      %2254 = vst.msk [vmem:[%s262 + $0x28] sm:$0xff] %vm874, %v2049
      %2255 = vst.msk [vmem:[%s262 + $0x30] sm:$0xff] %vm874, %v2050
      %2256 = vst.msk [vmem:[%s262 + $0x38] sm:$0xff] %vm874, %v2051
      %2257 = vst.msk [vmem:[%s262 + $0x40] sm:$0xff] %vm874, %v2052
      %2258 = vst.msk [vmem:[%s262 + $0x48] sm:$0xff] %vm874, %v2053
      %2259 = vst.msk [vmem:[%s262 + $0x50] sm:$0xff] %vm874, %v2054
      %2260 = vst.msk [vmem:[%s262 + $0x58] sm:$0xff] %vm874, %v2055
      %2261 = vst.msk [vmem:[%s262 + $0x60] sm:$0xff] %vm874, %v2056
      %2262 = vst.msk [vmem:[%s262 + $0x68] sm:$0xff] %vm874, %v2057
      %2263 = vst.msk [vmem:[%s262 + $0x70] sm:$0xff] %vm874, %v2058
      %2264 = vst.msk [vmem:[%s262 + $0x78] sm:$0xff] %vm874, %v2059
      %2265 = vst.msk [vmem:[%s262 + $0x80] sm:$0xff] %vm874, %v2060
      %2266 = vst.msk [vmem:[%s262 + $0x88] sm:$0xff] %vm874, %v2061
      %2267 = vst.msk [vmem:[%s262 + $0x90] sm:$0xff] %vm874, %v2062
      %2268 = vst.msk [vmem:[%s262 + $0x98] sm:$0xff] %vm874, %v2063
      %2269 = vst.msk [vmem:[%s262 + $0xa0] sm:$0xff] %vm874, %v2064
      %2270 = vst.msk [vmem:[%s262 + $0xa8] sm:$0xff] %vm874, %v2065
      %2271 = vst.msk [vmem:[%s262 + $0xb0] sm:$0xff] %vm874, %v2066
      %2272 = vst.msk [vmem:[%s262 + $0xb8] sm:$0xff] %vm874, %v2067
      %2273 = vst.msk [vmem:[%s262 + $0xc0] sm:$0xff] %vm874, %v2068
      %2274 = vst.msk [vmem:[%s262 + $0xc8] sm:$0xff] %vm874, %v2069
      %2275 = vst.msk [vmem:[%s262 + $0xd0] sm:$0xff] %vm874, %v2070
      %2276 = vst.msk [vmem:[%s262 + $0xd8] sm:$0xff] %vm874, %v2071
      %2277 = vst.msk [vmem:[%s262 + $0xe0] sm:$0xff] %vm874, %v2072
      %2278 = vst.msk [vmem:[%s262 + $0xe8] sm:$0xff] %vm874, %v2073
      %2279 = vst.msk [vmem:[%s262 + $0xf0] sm:$0xff] %vm874, %v2074
      %2280 = vst.msk [vmem:[%s262 + $0xf8] sm:$0xff] %vm874, %v2075
      %p2281 = scmp.lt.s32.totalorder %s18, 1
      %s2282 = scalar_select %p2281, %s18, 1
      %s2283 = smul.addr %s2282, 32
      %s2284 = smul.addr %s2283, 8
      %s2285 = scalar_lea.vmem %s4, %s2284
      %p2286 = scmp.lt.s32.totalorder %s18, 1
      %s2287 = scalar_select %p2286, %s18, 1
      %s2288 = scalar_lea.vmem %s5, %s2287
      %p2289 = scmp.lt.s32.totalorder %s18, 1
      %s2290 = scalar_select %p2289, %s18, 1
      %s2291 = scalar_lea.vmem %s6, %s2290
      // Predicated region
      $region37: #{residual_block_forward.4} parent=35 // pred_check
        %p2292 = pneg %p125
      $region38: #{residual_block_forward.4} parent=35 // pred_check_branch
        %2294 = sbr.rel (%p2292) target = $region40
      $region39: #{residual_block_forward.4} parent=35 // pred_region
        _
      $region40: #{residual_block_forward.4} parent=35 // pred_fallthru
        _
      // Predicated region
      $region41: #{residual_block_forward.4} parent=35 // pred_check
        %p2295 = pneg %p151
      $region42: #{residual_block_forward.4} parent=35 // pred_check_branch
        %2297 = sbr.rel (%p2295) target = $region44
      $region43: #{residual_block_forward.4} parent=35 // pred_region
        _
      $region44: #{residual_block_forward.4} parent=35 // pred_fallthru
        _
      // Predicated region
      $region45: #{residual_block_forward.4} parent=35 // pred_check
        %p2298 = pneg %p177
      $region46: #{residual_block_forward.4} parent=35 // pred_check_branch
        %2300 = sbr.rel (%p2298) target = $region48
      $region47: #{residual_block_forward.4} parent=35 // pred_region
        _
      $region48: #{residual_block_forward.4} parent=35 // pred_fallthru
        _
    $region36: #{residual_block_forward.4} parent=5 // pred_fallthru
      _
    %p2301 = scmp.le.s32.totalorder 2, %s13
    // Predicated region
    $region49: #{residual_block_forward.4} parent=5 // pred_check
      %p2302 = pneg %p2301
    $region50: #{residual_block_forward.4} parent=5 // pred_check_branch
      %2304 = sbr.rel (%p2302) target = $region52
    $region51: #{residual_block_forward.4} parent=5 // pred_region
      %s2305 = ssub.s32 %s13, 2
      // Predicated region
      $region53: #{residual_block_forward.4} parent=51 // pred_check
        %p2306 = pneg %p131
      $region54: #{residual_block_forward.4} parent=51 // pred_check_branch
        %2308 = sbr.rel (%p2306) target = $region56
      $region55: #{residual_block_forward.4} parent=51 // pred_region
        %p2309 = scmp.lt.s32.totalorder %s19, 1
        %s2310 = scalar_select %p2309, %s19, 1
        %s2311 = smul.addr %s2310, 32
        %s2312 = smul.addr %s2311, 8
        %s2313 = scalar_lea.vmem %s4, %s2312
      $region56: #{residual_block_forward.4} parent=51 // pred_fallthru
        _
      // Predicated region
      $region57: #{residual_block_forward.4} parent=51 // pred_check
        %p2314 = pneg %p157
      $region58: #{residual_block_forward.4} parent=51 // pred_check_branch
        %2316 = sbr.rel (%p2314) target = $region60
      $region59: #{residual_block_forward.4} parent=51 // pred_region
        %p2317 = scmp.lt.s32.totalorder %s19, 1
        %s2318 = scalar_select %p2317, %s19, 1
        %s2319 = scalar_lea.vmem %s5, %s2318
      $region60: #{residual_block_forward.4} parent=51 // pred_fallthru
        _
      // Predicated region
      $region61: #{residual_block_forward.4} parent=51 // pred_check
        %p2320 = pneg %p183
      $region62: #{residual_block_forward.4} parent=51 // pred_check_branch
        %2322 = sbr.rel (%p2320) target = $region64
      $region63: #{residual_block_forward.4} parent=51 // pred_region
        %p2323 = scmp.lt.s32.totalorder %s19, 1
        %s2324 = scalar_select %p2323, %s19, 1
        %s2325 = scalar_lea.vmem %s6, %s2324
      $region64: #{residual_block_forward.4} parent=51 // pred_fallthru
        _
    $region52: #{residual_block_forward.4} parent=5 // pred_fallthru
      _
  $region6: #{residual_block_forward.4} parent=0 // loop_footer
    %s17 = sadd.s32 1, %s13
  $region7: #{residual_block_forward.4} parent=0 // loop_footer_branch
    %12 = sbr.rel target = $region3
  $region8: #{residual_block_forward.4} parent=0 // loop_exit
    _

// kernel: residual_block_forward.5
$region0: #{residual_block_forward.5}
  #allocation0 [shape = 'u32[]', space=smem, size = 0x4, offset = 0x4, fixed_abs, tag = 'smem constant byte address 0x4 - core index']
  #allocation1 [shape = 'u32[144,128]{1,0:T(1,128)}', space=vmem, size = 0x12000, scoped, tag = 'internal scratch']
  #allocation2 [shape = 'f32[18,16,24]{2,1,0:T(8,128)}', space=vmem, size = 0x24000, scoped, tag = 'scratch operand']
  %s0 = inlined_call_operand.vmem [shape: f32[2,16,16,8], index: 0, kind: input, shape index: {}]
  %s1 = inlined_call_operand.vmem [shape: f32[1,8], index: 1, kind: input, shape index: {}]
  %s2 = inlined_call_operand.vmem [shape: f32[1,8], index: 2, kind: input, shape index: {}]
  %s3 = inlined_call_operand.vmem [shape: f32[3,24,8], index: 3, kind: input, shape index: {}]
  %s4 = inlined_call_operand.vmem [shape: f32[1,8], index: 4, kind: input, shape index: {}]
  %s5 = inlined_call_operand.vmem [shape: f32[2,16,16,8], index: 5, kind: input, shape index: {}]
  %s6 = inlined_call_operand.vmem [shape: f32[2,16,16,8], index: 6, kind: output, shape index: {}]
  %s7 = sld [smem:[#allocation0]]
  $region57: #{residual_block_forward.5} parent=0
    _
  %s9 = ssub.s32 1, %s7
  %s10 = scalar_select 0, %s9, %s7
  loop: start=0, step=1, limit=4
  $region2: #{residual_block_forward.5} parent=0 // loop_pre_header
    _
  $region3: #{residual_block_forward.5} parent=0 // loop_header
    %s12 = sphi 0, %s16
    %p13 = scmp.ge.s32.totalorder %s12, 4
    %s22 = sphi 0, %s24
    %s25 = sphi 0, %s22
    %s26 = sphi 0, %s25
    %s42 = sphi 0, %s26
    %s46 = sphi 0, %s46
    %s48 = sphi 0, %s46
    %s49 = sphi 0, %s48
    %s63 = sphi 0, %s49
    %s67 = sphi 0, %s67
    %s69 = sphi 0, %s67
    %s70 = sphi 0, %s69
    %s84 = sphi 0, %s70
    %s88 = sphi 0, %s88
    %s90 = sphi 0, %s88
    %s91 = sphi 0, %s90
    %s105 = sphi 0, %s91
    %s109 = sphi 0, %s109
    %s111 = sphi 0, %s109
    %s112 = sphi 0, %s111
    %s126 = sphi 0, %s112
    %s132 = sphi 0, %s134
    %s135 = sphi 0, %s132
    %s136 = sphi 0, %s135
    %s152 = sphi 0, %s136
    %s158 = sphi 0, %s160
    %s161 = sphi 0, %s158
    %s162 = sphi 0, %s161
    %s178 = sphi 0, %s162
  $region4: #{residual_block_forward.5} parent=0 // loop_header_branch
    %15 = sbr.rel (%p13) target = $region8
  $region5: #{residual_block_forward.5} parent=0 // loop_body
    %s17 = ssub.s32 %s12, 1
    %s18 = ssub.s32 %s12, 2
    %s19 = sadd.s32 %s12, 1
    %s20 = ssub.s32 %s12, %s19
    %p21 = scmp.eq.s32.totalorder %s20, 0
    %s23 = sadd.s32 %s22, 1
    %s24 = scalar_select %p21, %s22, %s23
    %p27 = pneg %p21
    %p28 = scmp.eq.s32.totalorder %s12, 1
    %p29 = por %p27, %p28
    %p30 = scmp.ne.s32.totalorder %s22, %s25
    %p31 = scmp.eq.s32.totalorder %s12, 0
    %p32 = por %p30, %p31
    %p33 = scmp.ne.s32.totalorder %s22, %s25
    %p34 = scmp.eq.s32.totalorder %s17, 1
    %p35 = por %p33, %p34
    %p36 = scmp.ne.s32.totalorder %s25, %s26
    %p37 = scmp.eq.s32.totalorder %s17, 0
    %p38 = por %p36, %p37
    %p39 = scmp.ne.s32.totalorder %s25, %s26
    %p40 = scmp.eq.s32.totalorder %s18, 1
    %p41 = por %p39, %p40
    %p43 = scmp.ne.s32.totalorder %s26, %s42
    %p44 = scmp.eq.s32.totalorder %s18, 0
    %p45 = por %p43, %p44
    %s47 = sadd.s32 %s46, 1
    %p50 = scmp.eq.s32.totalorder %s12, 1
    %p51 = scmp.ne.s32.totalorder %s46, %s48
    %p52 = scmp.eq.s32.totalorder %s12, 0
    %p53 = por %p51, %p52
    %p54 = scmp.ne.s32.totalorder %s46, %s48
    %p55 = scmp.eq.s32.totalorder %s17, 1
    %p56 = por %p54, %p55
    %p57 = scmp.ne.s32.totalorder %s48, %s49
    %p58 = scmp.eq.s32.totalorder %s17, 0
    %p59 = por %p57, %p58
    %p60 = scmp.ne.s32.totalorder %s48, %s49
    %p61 = scmp.eq.s32.totalorder %s18, 1
    %p62 = por %p60, %p61
    %p64 = scmp.ne.s32.totalorder %s49, %s63
    %p65 = scmp.eq.s32.totalorder %s18, 0
    %p66 = por %p64, %p65
    %s68 = sadd.s32 %s67, 1
    %p71 = scmp.eq.s32.totalorder %s12, 1
    %p72 = scmp.ne.s32.totalorder %s67, %s69
    %p73 = scmp.eq.s32.totalorder %s12, 0
    %p74 = por %p72, %p73
    %p75 = scmp.ne.s32.totalorder %s67, %s69
    %p76 = scmp.eq.s32.totalorder %s17, 1
    %p77 = por %p75, %p76
    %p78 = scmp.ne.s32.totalorder %s69, %s70
    %p79 = scmp.eq.s32.totalorder %s17, 0
    %p80 = por %p78, %p79
    %p81 = scmp.ne.s32.totalorder %s69, %s70
    %p82 = scmp.eq.s32.totalorder %s18, 1
    %p83 = por %p81, %p82
    %p85 = scmp.ne.s32.totalorder %s70, %s84
    %p86 = scmp.eq.s32.totalorder %s18, 0
    %p87 = por %p85, %p86
    %s89 = sadd.s32 %s88, 1
    %p92 = scmp.eq.s32.totalorder %s12, 1
    %p93 = scmp.ne.s32.totalorder %s88, %s90
    %p94 = scmp.eq.s32.totalorder %s12, 0
    %p95 = por %p93, %p94
    %p96 = scmp.ne.s32.totalorder %s88, %s90
    %p97 = scmp.eq.s32.totalorder %s17, 1
    %p98 = por %p96, %p97
    %p99 = scmp.ne.s32.totalorder %s90, %s91
    %p100 = scmp.eq.s32.totalorder %s17, 0
    %p101 = por %p99, %p100
    %p102 = scmp.ne.s32.totalorder %s90, %s91
    %p103 = scmp.eq.s32.totalorder %s18, 1
    %p104 = por %p102, %p103
    %p106 = scmp.ne.s32.totalorder %s91, %s105
    %p107 = scmp.eq.s32.totalorder %s18, 0
    %p108 = por %p106, %p107
    %s110 = sadd.s32 %s109, 1
    %p113 = scmp.eq.s32.totalorder %s12, 1
    %p114 = scmp.ne.s32.totalorder %s109, %s111
    %p115 = scmp.eq.s32.totalorder %s12, 0
    %p116 = por %p114, %p115
    %p117 = scmp.ne.s32.totalorder %s109, %s111
    %p118 = scmp.eq.s32.totalorder %s17, 1
    %p119 = por %p117, %p118
    %p120 = scmp.ne.s32.totalorder %s111, %s112
    %p121 = scmp.eq.s32.totalorder %s17, 0
    %p122 = por %p120, %p121
    %p123 = scmp.ne.s32.totalorder %s111, %s112
    %p124 = scmp.eq.s32.totalorder %s18, 1
    %p125 = por %p123, %p124
    %p127 = scmp.ne.s32.totalorder %s112, %s126
    %p128 = scmp.eq.s32.totalorder %s18, 0
    %p129 = por %p127, %p128
    %s130 = ssub.s32 %s12, %s19
    %p131 = scmp.eq.s32.totalorder %s130, 0
    %s133 = sadd.s32 %s132, 1
    %s134 = scalar_select %p131, %s132, %s133
    %p137 = pneg %p131
    %p138 = scmp.eq.s32.totalorder %s12, 1
    %p139 = por %p137, %p138
    %p140 = scmp.ne.s32.totalorder %s132, %s135
    %p141 = scmp.eq.s32.totalorder %s12, 0
    %p142 = por %p140, %p141
    %p143 = scmp.ne.s32.totalorder %s132, %s135
    %p144 = scmp.eq.s32.totalorder %s17, 1
    %p145 = por %p143, %p144
    %p146 = scmp.ne.s32.totalorder %s135, %s136
    %p147 = scmp.eq.s32.totalorder %s17, 0
    %p148 = por %p146, %p147
    %p149 = scmp.ne.s32.totalorder %s135, %s136
    %p150 = scmp.eq.s32.totalorder %s18, 1
    %p151 = por %p149, %p150
    %p153 = scmp.ne.s32.totalorder %s136, %s152
    %p154 = scmp.eq.s32.totalorder %s18, 0
    %p155 = por %p153, %p154
    %s156 = ssub.s32 %s12, %s19
    %p157 = scmp.eq.s32.totalorder %s156, 0
    %s159 = sadd.s32 %s158, 1
    %s160 = scalar_select %p157, %s158, %s159
    %p163 = pneg %p157
    %p164 = scmp.eq.s32.totalorder %s12, 1
    %p165 = por %p163, %p164
    %p166 = scmp.ne.s32.totalorder %s158, %s161
    %p167 = scmp.eq.s32.totalorder %s12, 0
    %p168 = por %p166, %p167
    %p169 = scmp.ne.s32.totalorder %s158, %s161
    %p170 = scmp.eq.s32.totalorder %s17, 1
    %p171 = por %p169, %p170
    %p172 = scmp.ne.s32.totalorder %s161, %s162
    %p173 = scmp.eq.s32.totalorder %s17, 0
    %p174 = por %p172, %p173
    %p175 = scmp.ne.s32.totalorder %s161, %s162
    %p176 = scmp.eq.s32.totalorder %s18, 1
    %p177 = por %p175, %p176
    %p179 = scmp.ne.s32.totalorder %s162, %s178
    %p180 = scmp.eq.s32.totalorder %s18, 0
    %p181 = por %p179, %p180
    %p182 = scmp.le.s32.totalorder 1, %s12
    %p183 = scmp.lt.s32.totalorder %s12, 3
    %p184 = pnand %p182, %p183
    %p185 = pneg %p184
    // Predicated region
    $region9: #{residual_block_forward.5} parent=5 // pred_check
      _
    $region10: #{residual_block_forward.5} parent=5 // pred_check_branch
      %187 = sbr.rel (%p184) target = $region12
    $region11: #{residual_block_forward.5} parent=5 // pred_region
      %s188 = ssub.s32 %s12, 1
      // Predicated region
      $region13: #{residual_block_forward.5} parent=11 // pred_check
        %p189 = pneg %p59
      $region14: #{residual_block_forward.5} parent=11 // pred_check_branch
        %191 = sbr.rel (%p189) target = $region16
      $region15: #{residual_block_forward.5} parent=11 // pred_region
        _
      $region16: #{residual_block_forward.5} parent=11 // pred_fallthru
        _
      // Predicated region
      $region17: #{residual_block_forward.5} parent=11 // pred_check
        %p192 = pneg %p80
      $region18: #{residual_block_forward.5} parent=11 // pred_check_branch
        %194 = sbr.rel (%p192) target = $region20
      $region19: #{residual_block_forward.5} parent=11 // pred_region
        _
      $region20: #{residual_block_forward.5} parent=11 // pred_fallthru
        _
      // Predicated region
      $region21: #{residual_block_forward.5} parent=11 // pred_check
        %p195 = pneg %p101
      $region22: #{residual_block_forward.5} parent=11 // pred_check_branch
        %197 = sbr.rel (%p195) target = $region24
      $region23: #{residual_block_forward.5} parent=11 // pred_region
        _
      $region24: #{residual_block_forward.5} parent=11 // pred_fallthru
        _
      // Predicated region
      $region25: #{residual_block_forward.5} parent=11 // pred_check
        %p198 = pneg %p122
      $region26: #{residual_block_forward.5} parent=11 // pred_check_branch
        %200 = sbr.rel (%p198) target = $region28
      $region27: #{residual_block_forward.5} parent=11 // pred_region
        _
      $region28: #{residual_block_forward.5} parent=11 // pred_fallthru
        _
    $region12: #{residual_block_forward.5} parent=5 // pred_fallthru
      _
    %p201 = scmp.lt.s32.totalorder %s12, 2
    // Predicated region
    $region29: #{residual_block_forward.5} parent=5 // pred_check
      %p202 = pneg %p201
    $region30: #{residual_block_forward.5} parent=5 // pred_check_branch
      %204 = sbr.rel (%p202) target = $region32
    $region31: #{residual_block_forward.5} parent=5 // pred_region
      // Predicated region
      $region33: #{residual_block_forward.5} parent=31 // pred_check
        %p205 = pneg %p32
      $region34: #{residual_block_forward.5} parent=31 // pred_check_branch
        %207 = sbr.rel (%p205) target = $region36
      $region35: #{residual_block_forward.5} parent=31 // pred_region
        %p208 = scmp.lt.s32.totalorder %s12, 1
        %s209 = scalar_select %p208, %s12, 1
        %s210 = smul.addr %s209, 32
        %s211 = smul.addr %s210, 8
        %s212 = scalar_lea.vmem %s0, %s211
      $region36: #{residual_block_forward.5} parent=31 // pred_fallthru
        _
      // Predicated region
      $region37: #{residual_block_forward.5} parent=31 // pred_check
        %p213 = pneg %p142
      $region38: #{residual_block_forward.5} parent=31 // pred_check_branch
        %215 = sbr.rel (%p213) target = $region40
      $region39: #{residual_block_forward.5} parent=31 // pred_region
        %p216 = scmp.lt.s32.totalorder %s12, 1
        %s217 = scalar_select %p216, %s12, 1
        %s218 = smul.addr %s217, 32
        %s219 = smul.addr %s218, 8
        %s220 = scalar_lea.vmem %s5, %s219
      $region40: #{residual_block_forward.5} parent=31 // pred_fallthru
        _
    $region32: #{residual_block_forward.5} parent=5 // pred_fallthru
      _
    %p221 = scmp.le.s32.totalorder 1, %s12
    %p222 = scmp.lt.s32.totalorder %s12, 3
    %p223 = pnand %p221, %p222
    %p224 = pneg %p223
    // Predicated region
    $region41: #{residual_block_forward.5} parent=5 // pred_check
      _
    $region42: #{residual_block_forward.5} parent=5 // pred_check_branch
      %226 = sbr.rel (%p223) target = $region44
    $region43: #{residual_block_forward.5} parent=5 // pred_region
      %s227 = ssub.s32 %s12, 1
      %p228 = scmp.lt.s32.totalorder %s17, 1
      %s229 = scalar_select %p228, %s17, 1
      %s230 = smul.addr %s229, 32
      %s231 = smul.addr %s230, 8
      %s232 = scalar_lea.vmem %s0, %s231
      %p233 = pneg %p38
      %p234 = pneg %p35
      %p235 = pneg %p59
      %p236 = pneg %p56
      %p237 = pneg %p80
      %p238 = pneg %p77
      %p239 = pneg %p101
      %p240 = pneg %p98
      %p241 = pneg %p122
      %p242 = pneg %p119
      %p243 = scmp.lt.s32.totalorder %s17, 1
      %s244 = scalar_select %p243, %s17, 1
      %s245 = smul.addr %s244, 32
      %s246 = smul.addr %s245, 8
      %s247 = scalar_lea.vmem %s5, %s246
      %p248 = pneg %p148
      %p249 = pneg %p145
      %p250 = pneg %p174
      %p251 = pneg %p171
      %p252 = scmp.lt.s32.totalorder %s17, 1
      %s253 = scalar_select %p252, %s17, 1
      %s254 = smul.addr %s253, 32
      %s255 = smul.addr %s254, 8
      %s256 = scalar_lea.vmem %s6, %s255
      %p257 = scmp.lt.s32.totalorder %s17, 1
      %s258 = scalar_select %p257, %s17, 1
      %s259 = smul.addr %s258, 32
      %s260 = smul.addr %s259, 8
      %s261 = scalar_lea.vmem %s0, %s260
      %p262 = scmp.lt.s32.totalorder %s17, 1
      %s263 = scalar_select %p262, %s17, 1
      %s264 = smul.addr %s263, 32
      %s265 = smul.addr %s264, 8
      %s266 = scalar_lea.vmem %s5, %s265
      %p267 = scmp.lt.s32.totalorder %s17, 1
      %s268 = scalar_select %p267, %s17, 1
      %s269 = smul.addr %s268, 32
      %s270 = smul.addr %s269, 8
      %s271 = scalar_lea.vmem %s6, %s270
      %vm272 = vcmask 195584
      %273 = vst.msk [vmem:[#allocation2] sm:$0xff] %vm272, 0.0
      %274 = vst.msk [vmem:[#allocation2 + $0x8] sm:$0xff] %vm272, 0.0
      %s275 = scalar_lea.vmem [#allocation2], 272
      %276 = vst.msk [vmem:[%s275] sm:$0xff] %vm272, 0.0
      %277 = vst.msk [vmem:[%s275 + $0x8] sm:$0xff] %vm272, 0.0
      %v278 = vld [vmem:[%s261] sm:$0xff]
      %v279 = vld [vmem:[%s261 + $0x8] sm:$0xff]
      %v280 = vld [vmem:[%s261 + $0x10] sm:$0xff]
      %v281 = vld [vmem:[%s261 + $0x18] sm:$0xff]
      %v282 = vld [vmem:[%s261 + $0x20] sm:$0xff]
      %v283 = vld [vmem:[%s261 + $0x28] sm:$0xff]
      %v284 = vld [vmem:[%s261 + $0x30] sm:$0xff]
      %v285 = vld [vmem:[%s261 + $0x38] sm:$0xff]
      %v286 = vld [vmem:[%s261 + $0x40] sm:$0xff]
      %v287 = vld [vmem:[%s261 + $0x48] sm:$0xff]
      %v288 = vld [vmem:[%s261 + $0x50] sm:$0xff]
      %v289 = vld [vmem:[%s261 + $0x58] sm:$0xff]
      %v290 = vld [vmem:[%s261 + $0x60] sm:$0xff]
      %v291 = vld [vmem:[%s261 + $0x68] sm:$0xff]
      %v292 = vld [vmem:[%s261 + $0x70] sm:$0xff]
      %v293 = vld [vmem:[%s261 + $0x78] sm:$0xff]
      %v294 = vld [vmem:[%s261 + $0x80] sm:$0xff]
      %v295 = vld [vmem:[%s261 + $0x88] sm:$0xff]
      %v296 = vld [vmem:[%s261 + $0x90] sm:$0xff]
      %v297 = vld [vmem:[%s261 + $0x98] sm:$0xff]
      %v298 = vld [vmem:[%s261 + $0xa0] sm:$0xff]
      %v299 = vld [vmem:[%s261 + $0xa8] sm:$0xff]
      %v300 = vld [vmem:[%s261 + $0xb0] sm:$0xff]
      %v301 = vld [vmem:[%s261 + $0xb8] sm:$0xff]
      %v302 = vld [vmem:[%s261 + $0xc0] sm:$0xff]
      %v303 = vld [vmem:[%s261 + $0xc8] sm:$0xff]
      %v304 = vld [vmem:[%s261 + $0xd0] sm:$0xff]
      %v305 = vld [vmem:[%s261 + $0xd8] sm:$0xff]
      %v306 = vld [vmem:[%s261 + $0xe0] sm:$0xff]
      %v307 = vld [vmem:[%s261 + $0xe8] sm:$0xff]
      %v308 = vld [vmem:[%s261 + $0xf0] sm:$0xff]
      %v309 = vld [vmem:[%s261 + $0xf8] sm:$0xff]
      %v310 = vld [vmem:[%s1] sm:$0x1]
      %v311 = vld [vmem:[%s2] sm:$0x1]
      %v313 = vlaneseq
      %v314 = vshrl.u32 %v313, 7
      %v315 = vsub.s32 0, %v314
      %v316 = vrot.slane %v310, %v315
      %v318 = vmul.f32 %v278, %v316
      %v319 = vmul.f32 %v279, %v316
      %v320 = vmul.f32 %v280, %v316
      %v321 = vmul.f32 %v281, %v316
      %v322 = vmul.f32 %v282, %v316
      %v323 = vmul.f32 %v283, %v316
      %v324 = vmul.f32 %v284, %v316
      %v325 = vmul.f32 %v285, %v316
      %v326 = vmul.f32 %v286, %v316
      %v327 = vmul.f32 %v287, %v316
      %v328 = vmul.f32 %v288, %v316
      %v329 = vmul.f32 %v289, %v316
      %v330 = vmul.f32 %v290, %v316
      %v331 = vmul.f32 %v291, %v316
      %v332 = vmul.f32 %v292, %v316
      %v333 = vmul.f32 %v293, %v316
      %v334 = vmul.f32 %v294, %v316
      %v335 = vmul.f32 %v295, %v316
      %v336 = vmul.f32 %v296, %v316
      %v337 = vmul.f32 %v297, %v316
      %v338 = vmul.f32 %v298, %v316
      %v339 = vmul.f32 %v299, %v316
      %v340 = vmul.f32 %v300, %v316
      %v341 = vmul.f32 %v301, %v316
      %v342 = vmul.f32 %v302, %v316
      %v343 = vmul.f32 %v303, %v316
      %v344 = vmul.f32 %v304, %v316
      %v345 = vmul.f32 %v305, %v316
      %v346 = vmul.f32 %v306, %v316
      %v347 = vmul.f32 %v307, %v316
      %v348 = vmul.f32 %v308, %v316
      %v349 = vmul.f32 %v309, %v316
      %v351 = vlaneseq
      %v352 = vshrl.u32 %v351, 7
      %v353 = vsub.s32 0, %v352
      %v354 = vrot.slane %v311, %v353
      %v356 = vadd.f32 %v318, %v354
      %v357 = vadd.f32 %v319, %v354
      %v358 = vadd.f32 %v320, %v354
      %v359 = vadd.f32 %v321, %v354
      %v360 = vadd.f32 %v322, %v354
      %v361 = vadd.f32 %v323, %v354
      %v362 = vadd.f32 %v324, %v354
      %v363 = vadd.f32 %v325, %v354
      %v364 = vadd.f32 %v326, %v354
      %v365 = vadd.f32 %v327, %v354
      %v366 = vadd.f32 %v328, %v354
      %v367 = vadd.f32 %v329, %v354
      %v368 = vadd.f32 %v330, %v354
      %v369 = vadd.f32 %v331, %v354
      %v370 = vadd.f32 %v332, %v354
      %v371 = vadd.f32 %v333, %v354
      %v372 = vadd.f32 %v334, %v354
      %v373 = vadd.f32 %v335, %v354
      %v374 = vadd.f32 %v336, %v354
      %v375 = vadd.f32 %v337, %v354
      %v376 = vadd.f32 %v338, %v354
      %v377 = vadd.f32 %v339, %v354
      %v378 = vadd.f32 %v340, %v354
      %v379 = vadd.f32 %v341, %v354
      %v380 = vadd.f32 %v342, %v354
      %v381 = vadd.f32 %v343, %v354
      %v382 = vadd.f32 %v344, %v354
      %v383 = vadd.f32 %v345, %v354
      %v384 = vadd.f32 %v346, %v354
      %v385 = vadd.f32 %v347, %v354
      %v386 = vadd.f32 %v348, %v354
      %v387 = vadd.f32 %v349, %v354
      %v388 = vmax.f32 %v356, 0.0
      %v389 = vmax.f32 %v357, 0.0
      %v390 = vmax.f32 %v358, 0.0
      %v391 = vmax.f32 %v359, 0.0
      %v392 = vmax.f32 %v360, 0.0
      %v393 = vmax.f32 %v361, 0.0
      %v394 = vmax.f32 %v362, 0.0
      %v395 = vmax.f32 %v363, 0.0
      %v396 = vmax.f32 %v364, 0.0
      %v397 = vmax.f32 %v365, 0.0
      %v398 = vmax.f32 %v366, 0.0
      %v399 = vmax.f32 %v367, 0.0
      %v400 = vmax.f32 %v368, 0.0
      %v401 = vmax.f32 %v369, 0.0
      %v402 = vmax.f32 %v370, 0.0
      %v403 = vmax.f32 %v371, 0.0
      %v404 = vmax.f32 %v372, 0.0
      %v405 = vmax.f32 %v373, 0.0
      %v406 = vmax.f32 %v374, 0.0
      %v407 = vmax.f32 %v375, 0.0
      %v408 = vmax.f32 %v376, 0.0
      %v409 = vmax.f32 %v377, 0.0
      %v410 = vmax.f32 %v378, 0.0
      %v411 = vmax.f32 %v379, 0.0
      %v412 = vmax.f32 %v380, 0.0
      %v413 = vmax.f32 %v381, 0.0
      %v414 = vmax.f32 %v382, 0.0
      %v415 = vmax.f32 %v383, 0.0
      %v416 = vmax.f32 %v384, 0.0
      %v417 = vmax.f32 %v385, 0.0
      %v418 = vmax.f32 %v386, 0.0
      %v419 = vmax.f32 %v387, 0.0
      %v420 = vlaneseq
      %v421 = vshrl.u32 %v420, 7
      %v422 = vadd.s32 %v421, 8
      %v423 = vrot.slane %v388, 7
      %v424 = vrot.slane %v390, 7
      %v425 = vrot.slane %v392, 7
      %v426 = vrot.slane %v394, 7
      %v427 = vrot.slane %v396, 7
      %v428 = vrot.slane %v398, 7
      %v429 = vrot.slane %v400, 7
      %v430 = vrot.slane %v402, 7
      %v431 = vrot.slane %v404, 7
      %v432 = vrot.slane %v406, 7
      %v433 = vrot.slane %v408, 7
      %v434 = vrot.slane %v410, 7
      %v435 = vrot.slane %v412, 7
      %v436 = vrot.slane %v414, 7
      %v437 = vrot.slane %v416, 7
      %v438 = vrot.slane %v418, 7
      %v439 = vrot.slane %v389, 7
      %v440 = vrot.slane %v391, 7
      %v441 = vrot.slane %v393, 7
      %v442 = vrot.slane %v395, 7
      %v443 = vrot.slane %v397, 7
      %v444 = vrot.slane %v399, 7
      %v445 = vrot.slane %v401, 7
      %v446 = vrot.slane %v403, 7
      %v447 = vrot.slane %v405, 7
      %v448 = vrot.slane %v407, 7
      %v449 = vrot.slane %v409, 7
      %v450 = vrot.slane %v411, 7
      %v451 = vrot.slane %v413, 7
      %v452 = vrot.slane %v415, 7
      %v453 = vrot.slane %v417, 7
      %v454 = vrot.slane %v419, 7
      %vm455 = vcmp.lt.s32.totalorder %v421, 1
      %v456 = vsel %vm455, %v423, %v439
      %v457 = vsel %vm455, %v424, %v440
      %v458 = vsel %vm455, %v425, %v441
      %v459 = vsel %vm455, %v426, %v442
      %v460 = vsel %vm455, %v427, %v443
      %v461 = vsel %vm455, %v428, %v444
      %v462 = vsel %vm455, %v429, %v445
      %v463 = vsel %vm455, %v430, %v446
      %v464 = vsel %vm455, %v431, %v447
      %v465 = vsel %vm455, %v432, %v448
      %v466 = vsel %vm455, %v433, %v449
      %v467 = vsel %vm455, %v434, %v450
      %v468 = vsel %vm455, %v435, %v451
      %v469 = vsel %vm455, %v436, %v452
      %v470 = vsel %vm455, %v437, %v453
      %v471 = vsel %vm455, %v438, %v454
      %v472 = vsel %vm455, %v439, %v423
      %v473 = vsel %vm455, %v440, %v424
      %v474 = vsel %vm455, %v441, %v425
      %v475 = vsel %vm455, %v442, %v426
      %v476 = vsel %vm455, %v443, %v427
      %v477 = vsel %vm455, %v444, %v428
      %v478 = vsel %vm455, %v445, %v429
      %v479 = vsel %vm455, %v446, %v430
      %v480 = vsel %vm455, %v447, %v431
      %v481 = vsel %vm455, %v448, %v432
      %v482 = vsel %vm455, %v449, %v433
      %v483 = vsel %vm455, %v450, %v434
      %v484 = vsel %vm455, %v451, %v435
      %v485 = vsel %vm455, %v452, %v436
      %v486 = vsel %vm455, %v453, %v437
      %v487 = vsel %vm455, %v454, %v438
      %vm488 = vcmp.ge.s32.totalorder %v421, 1
      %vm489 = vcmp.ge.s32.totalorder %v422, 1
      %v490 = vsel %vm488, %v472, 0.0
      %v491 = vsel %vm489, %v456, 0.0
      %v492 = vsel %vm488, %v473, 0.0
      %v493 = vsel %vm489, %v457, 0.0
      %v494 = vsel %vm488, %v474, 0.0
      %v495 = vsel %vm489, %v458, 0.0
      %v496 = vsel %vm488, %v475, 0.0
      %v497 = vsel %vm489, %v459, 0.0
      %v498 = vsel %vm488, %v476, 0.0
      %v499 = vsel %vm489, %v460, 0.0
      %v500 = vsel %vm488, %v477, 0.0
      %v501 = vsel %vm489, %v461, 0.0
      %v502 = vsel %vm488, %v478, 0.0
      %v503 = vsel %vm489, %v462, 0.0
      %v504 = vsel %vm488, %v479, 0.0
      %v505 = vsel %vm489, %v463, 0.0
      %v506 = vsel %vm488, %v480, 0.0
      %v507 = vsel %vm489, %v464, 0.0
      %v508 = vsel %vm488, %v481, 0.0
      %v509 = vsel %vm489, %v465, 0.0
      %v510 = vsel %vm488, %v482, 0.0
      %v511 = vsel %vm489, %v466, 0.0
      %v512 = vsel %vm488, %v483, 0.0
      %v513 = vsel %vm489, %v467, 0.0
      %v514 = vsel %vm488, %v484, 0.0
      %v515 = vsel %vm489, %v468, 0.0
      %v516 = vsel %vm488, %v485, 0.0
      %v517 = vsel %vm489, %v469, 0.0
      %v518 = vsel %vm488, %v486, 0.0
      %v519 = vsel %vm489, %v470, 0.0
      %v520 = vsel %vm488, %v487, 0.0
      %v521 = vsel %vm489, %v471, 0.0
      %v522 = vrot.slane %v388, 1
      %v523 = vrot.slane %v390, 1
      %v524 = vrot.slane %v392, 1
      %v525 = vrot.slane %v394, 1
      %v526 = vrot.slane %v396, 1
      %v527 = vrot.slane %v398, 1
      %v528 = vrot.slane %v400, 1
      %v529 = vrot.slane %v402, 1
      %v530 = vrot.slane %v404, 1
      %v531 = vrot.slane %v406, 1
      %v532 = vrot.slane %v408, 1
      %v533 = vrot.slane %v410, 1
      %v534 = vrot.slane %v412, 1
      %v535 = vrot.slane %v414, 1
      %v536 = vrot.slane %v416, 1
      %v537 = vrot.slane %v418, 1
      %v538 = vrot.slane %v389, 1
      %v539 = vrot.slane %v391, 1
      %v540 = vrot.slane %v393, 1
      %v541 = vrot.slane %v395, 1
      %v542 = vrot.slane %v397, 1
      %v543 = vrot.slane %v399, 1
      %v544 = vrot.slane %v401, 1
      %v545 = vrot.slane %v403, 1
      %v546 = vrot.slane %v405, 1
      %v547 = vrot.slane %v407, 1
      %v548 = vrot.slane %v409, 1
      %v549 = vrot.slane %v411, 1
      %v550 = vrot.slane %v413, 1
      %v551 = vrot.slane %v415, 1
      %v552 = vrot.slane %v417, 1
      %v553 = vrot.slane %v419, 1
      %vm554 = vcmp.lt.s32.totalorder %v421, 7
      %v555 = vsel %vm554, %v522, %v538
      %v556 = vsel %vm554, %v523, %v539
      %v557 = vsel %vm554, %v524, %v540
      %v558 = vsel %vm554, %v525, %v541
      %v559 = vsel %vm554, %v526, %v542
      %v560 = vsel %vm554, %v527, %v543
      %v561 = vsel %vm554, %v528, %v544
      %v562 = vsel %vm554, %v529, %v545
      %v563 = vsel %vm554, %v530, %v546
      %v564 = vsel %vm554, %v531, %v547
      %v565 = vsel %vm554, %v532, %v548
      %v566 = vsel %vm554, %v533, %v549
      %v567 = vsel %vm554, %v534, %v550
      %v568 = vsel %vm554, %v535, %v551
      %v569 = vsel %vm554, %v536, %v552
      %v570 = vsel %vm554, %v537, %v553
      %v571 = vsel %vm554, %v538, %v522
      %v572 = vsel %vm554, %v539, %v523
      %v573 = vsel %vm554, %v540, %v524
      %v574 = vsel %vm554, %v541, %v525
      %v575 = vsel %vm554, %v542, %v526
      %v576 = vsel %vm554, %v543, %v527
      %v577 = vsel %vm554, %v544, %v528
      %v578 = vsel %vm554, %v545, %v529
      %v579 = vsel %vm554, %v546, %v530
      %v580 = vsel %vm554, %v547, %v531
      %v581 = vsel %vm554, %v548, %v532
      %v582 = vsel %vm554, %v549, %v533
      %v583 = vsel %vm554, %v550, %v534
      %v584 = vsel %vm554, %v551, %v535
      %v585 = vsel %vm554, %v552, %v536
      %v586 = vsel %vm554, %v553, %v537
      %vm587 = vcmp.lt.s32.totalorder %v421, 15
      %vm588 = vcmp.lt.s32.totalorder %v422, 15
      %v589 = vsel %vm587, %v555, 0.0
      %v590 = vsel %vm588, %v571, 0.0
      %v591 = vsel %vm587, %v556, 0.0
      %v592 = vsel %vm588, %v572, 0.0
      %v593 = vsel %vm587, %v557, 0.0
      %v594 = vsel %vm588, %v573, 0.0
      %v595 = vsel %vm587, %v558, 0.0
      %v596 = vsel %vm588, %v574, 0.0
      %v597 = vsel %vm587, %v559, 0.0
      %v598 = vsel %vm588, %v575, 0.0
      %v599 = vsel %vm587, %v560, 0.0
      %v600 = vsel %vm588, %v576, 0.0
      %v601 = vsel %vm587, %v561, 0.0
      %v602 = vsel %vm588, %v577, 0.0
      %v603 = vsel %vm587, %v562, 0.0
      %v604 = vsel %vm588, %v578, 0.0
      %v605 = vsel %vm587, %v563, 0.0
      %v606 = vsel %vm588, %v579, 0.0
      %v607 = vsel %vm587, %v564, 0.0
      %v608 = vsel %vm588, %v580, 0.0
      %v609 = vsel %vm587, %v565, 0.0
      %v610 = vsel %vm588, %v581, 0.0
      %v611 = vsel %vm587, %v566, 0.0
      %v612 = vsel %vm588, %v582, 0.0
      %v613 = vsel %vm587, %v567, 0.0
      %v614 = vsel %vm588, %v583, 0.0
      %v615 = vsel %vm587, %v568, 0.0
      %v616 = vsel %vm588, %v584, 0.0
      %v617 = vsel %vm587, %v569, 0.0
      %v618 = vsel %vm588, %v585, 0.0
      %v619 = vsel %vm587, %v570, 0.0
      %v620 = vsel %vm588, %v586, 0.0
      %653 = vrot.lane.b32.xlu0 %v388, 8
      %v654 = vpop.permute.xlu0 %653
      %655 = vrot.lane.b32.xlu0 %v389, 8
      %v656 = vpop.permute.xlu0 %655
      %657 = vrot.lane.b32.xlu0 %v390, 8
      %v658 = vpop.permute.xlu0 %657
      %659 = vrot.lane.b32.xlu0 %v391, 8
      %v660 = vpop.permute.xlu0 %659
      %661 = vrot.lane.b32.xlu0 %v392, 8
      %v662 = vpop.permute.xlu0 %661
      %663 = vrot.lane.b32.xlu0 %v393, 8
      %v664 = vpop.permute.xlu0 %663
      %665 = vrot.lane.b32.xlu0 %v394, 8
      %v666 = vpop.permute.xlu0 %665
      %667 = vrot.lane.b32.xlu0 %v395, 8
      %v668 = vpop.permute.xlu0 %667
      %669 = vrot.lane.b32.xlu0 %v396, 8
      %v670 = vpop.permute.xlu0 %669
      %671 = vrot.lane.b32.xlu0 %v397, 8
      %v672 = vpop.permute.xlu0 %671
      %673 = vrot.lane.b32.xlu0 %v398, 8
      %v674 = vpop.permute.xlu0 %673
      %675 = vrot.lane.b32.xlu0 %v399, 8
      %v676 = vpop.permute.xlu0 %675
      %677 = vrot.lane.b32.xlu0 %v400, 8
      %v678 = vpop.permute.xlu0 %677
      %679 = vrot.lane.b32.xlu0 %v401, 8
      %v680 = vpop.permute.xlu0 %679
      %681 = vrot.lane.b32.xlu0 %v402, 8
      %v682 = vpop.permute.xlu0 %681
      %683 = vrot.lane.b32.xlu0 %v403, 8
      %v684 = vpop.permute.xlu0 %683
      %685 = vrot.lane.b32.xlu0 %v404, 8
      %v686 = vpop.permute.xlu0 %685
      %687 = vrot.lane.b32.xlu0 %v405, 8
      %v688 = vpop.permute.xlu0 %687
      %689 = vrot.lane.b32.xlu0 %v406, 8
      %v690 = vpop.permute.xlu0 %689
      %691 = vrot.lane.b32.xlu0 %v407, 8
      %v692 = vpop.permute.xlu0 %691
      %693 = vrot.lane.b32.xlu0 %v408, 8
      %v694 = vpop.permute.xlu0 %693
      %695 = vrot.lane.b32.xlu0 %v409, 8
      %v696 = vpop.permute.xlu0 %695
      %697 = vrot.lane.b32.xlu0 %v410, 8
      %v698 = vpop.permute.xlu0 %697
      %699 = vrot.lane.b32.xlu0 %v411, 8
      %v700 = vpop.permute.xlu0 %699
      %701 = vrot.lane.b32.xlu0 %v412, 8
      %v702 = vpop.permute.xlu0 %701
      %703 = vrot.lane.b32.xlu0 %v413, 8
      %v704 = vpop.permute.xlu0 %703
      %705 = vrot.lane.b32.xlu0 %v414, 8
      %v706 = vpop.permute.xlu0 %705
      %707 = vrot.lane.b32.xlu0 %v415, 8
      %v708 = vpop.permute.xlu0 %707
      %709 = vrot.lane.b32.xlu0 %v416, 8
      %v710 = vpop.permute.xlu0 %709
      %711 = vrot.lane.b32.xlu0 %v417, 8
      %v712 = vpop.permute.xlu0 %711
      %713 = vrot.lane.b32.xlu0 %v418, 8
      %v714 = vpop.permute.xlu0 %713
      %715 = vrot.lane.b32.xlu0 %v419, 8
      %v716 = vpop.permute.xlu0 %715
      %781 = vrot.lane.b32.xlu0 %v589, 16
      %v782 = vpop.permute.xlu0 %781
      %783 = vrot.lane.b32.xlu0 %v590, 16
      %v784 = vpop.permute.xlu0 %783
      %785 = vrot.lane.b32.xlu0 %v591, 16
      %v786 = vpop.permute.xlu0 %785
      %787 = vrot.lane.b32.xlu0 %v592, 16
      %v788 = vpop.permute.xlu0 %787
      %789 = vrot.lane.b32.xlu0 %v593, 16
      %v790 = vpop.permute.xlu0 %789
      %791 = vrot.lane.b32.xlu0 %v594, 16
      %v792 = vpop.permute.xlu0 %791
      %793 = vrot.lane.b32.xlu0 %v595, 16
      %v794 = vpop.permute.xlu0 %793
      %795 = vrot.lane.b32.xlu0 %v596, 16
      %v796 = vpop.permute.xlu0 %795
      %797 = vrot.lane.b32.xlu0 %v597, 16
      %v798 = vpop.permute.xlu0 %797
      %799 = vrot.lane.b32.xlu0 %v598, 16
      %v800 = vpop.permute.xlu0 %799
      %801 = vrot.lane.b32.xlu0 %v599, 16
      %v802 = vpop.permute.xlu0 %801
      %803 = vrot.lane.b32.xlu0 %v600, 16
      %v804 = vpop.permute.xlu0 %803
      %805 = vrot.lane.b32.xlu0 %v601, 16
      %v806 = vpop.permute.xlu0 %805
      %807 = vrot.lane.b32.xlu0 %v602, 16
      %v808 = vpop.permute.xlu0 %807
      %809 = vrot.lane.b32.xlu0 %v603, 16
      %v810 = vpop.permute.xlu0 %809
      %811 = vrot.lane.b32.xlu0 %v604, 16
      %v812 = vpop.permute.xlu0 %811
      %813 = vrot.lane.b32.xlu0 %v605, 16
      %v814 = vpop.permute.xlu0 %813
      %815 = vrot.lane.b32.xlu0 %v606, 16
      %v816 = vpop.permute.xlu0 %815
      %817 = vrot.lane.b32.xlu0 %v607, 16
      %v818 = vpop.permute.xlu0 %817
      %819 = vrot.lane.b32.xlu0 %v608, 16
      %v820 = vpop.permute.xlu0 %819
      %821 = vrot.lane.b32.xlu0 %v609, 16
      %v822 = vpop.permute.xlu0 %821
      %823 = vrot.lane.b32.xlu0 %v610, 16
      %v824 = vpop.permute.xlu0 %823
      %825 = vrot.lane.b32.xlu0 %v611, 16
      %v826 = vpop.permute.xlu0 %825
      %827 = vrot.lane.b32.xlu0 %v612, 16
      %v828 = vpop.permute.xlu0 %827
      %829 = vrot.lane.b32.xlu0 %v613, 16
      %v830 = vpop.permute.xlu0 %829
      %831 = vrot.lane.b32.xlu0 %v614, 16
      %v832 = vpop.permute.xlu0 %831
      %833 = vrot.lane.b32.xlu0 %v615, 16
      %v834 = vpop.permute.xlu0 %833
      %835 = vrot.lane.b32.xlu0 %v616, 16
      %v836 = vpop.permute.xlu0 %835
      %837 = vrot.lane.b32.xlu0 %v617, 16
      %v838 = vpop.permute.xlu0 %837
      %839 = vrot.lane.b32.xlu0 %v618, 16
      %v840 = vpop.permute.xlu0 %839
      %841 = vrot.lane.b32.xlu0 %v619, 16
      %v842 = vpop.permute.xlu0 %841
      %843 = vrot.lane.b32.xlu0 %v620, 16
      %v844 = vpop.permute.xlu0 %843
      %vm877 = vcmask 64512
      %v878 = vsel %vm877, %v490, %v654
      %v879 = vsel %vm877, %v491, %v656
      %v880 = vsel %vm877, %v492, %v658
      %v881 = vsel %vm877, %v493, %v660
      %v882 = vsel %vm877, %v494, %v662
      %v883 = vsel %vm877, %v495, %v664
      %v884 = vsel %vm877, %v496, %v666
      %v885 = vsel %vm877, %v497, %v668
      %v886 = vsel %vm877, %v498, %v670
      %v887 = vsel %vm877, %v499, %v672
      %v888 = vsel %vm877, %v500, %v674
      %v889 = vsel %vm877, %v501, %v676
      %v890 = vsel %vm877, %v502, %v678
      %v891 = vsel %vm877, %v503, %v680
      %v892 = vsel %vm877, %v504, %v682
      %v893 = vsel %vm877, %v505, %v684
      %v894 = vsel %vm877, %v506, %v686
      %v895 = vsel %vm877, %v507, %v688
      %v896 = vsel %vm877, %v508, %v690
      %v897 = vsel %vm877, %v509, %v692
      %v898 = vsel %vm877, %v510, %v694
      %v899 = vsel %vm877, %v511, %v696
      %v900 = vsel %vm877, %v512, %v698
      %v901 = vsel %vm877, %v513, %v700
      %v902 = vsel %vm877, %v514, %v702
      %v903 = vsel %vm877, %v515, %v704
      %v904 = vsel %vm877, %v516, %v706
      %v905 = vsel %vm877, %v517, %v708
      %v906 = vsel %vm877, %v518, %v710
      %v907 = vsel %vm877, %v519, %v712
      %v908 = vsel %vm877, %v520, %v714
      %v909 = vsel %vm877, %v521, %v716
      %vm910 = vcmask 130048
      %v911 = vsel %vm910, %v878, %v782
      %v912 = vsel %vm910, %v879, %v784
      %v913 = vsel %vm910, %v880, %v786
      %v914 = vsel %vm910, %v881, %v788
      %v915 = vsel %vm910, %v882, %v790
      %v916 = vsel %vm910, %v883, %v792
      %v917 = vsel %vm910, %v884, %v794
      %v918 = vsel %vm910, %v885, %v796
      %v919 = vsel %vm910, %v886, %v798
      %v920 = vsel %vm910, %v887, %v800
      %v921 = vsel %vm910, %v888, %v802
      %v922 = vsel %vm910, %v889, %v804
      %v923 = vsel %vm910, %v890, %v806
      %v924 = vsel %vm910, %v891, %v808
      %v925 = vsel %vm910, %v892, %v810
      %v926 = vsel %vm910, %v893, %v812
      %v927 = vsel %vm910, %v894, %v814
      %v928 = vsel %vm910, %v895, %v816
      %v929 = vsel %vm910, %v896, %v818
      %v930 = vsel %vm910, %v897, %v820
      %v931 = vsel %vm910, %v898, %v822
      %v932 = vsel %vm910, %v899, %v824
      %v933 = vsel %vm910, %v900, %v826
      %v934 = vsel %vm910, %v901, %v828
      %v935 = vsel %vm910, %v902, %v830
      %v936 = vsel %vm910, %v903, %v832
      %v937 = vsel %vm910, %v904, %v834
      %v938 = vsel %vm910, %v905, %v836
      %v939 = vsel %vm910, %v906, %v838
      %v940 = vsel %vm910, %v907, %v840
      %v941 = vsel %vm910, %v908, %v842
      %v942 = vsel %vm910, %v909, %v844
      %s943 = scalar_lea.vmem [#allocation2], 16
      %944 = vst.msk [vmem:[%s943] sm:$0xff] %vm272, %v911
      %945 = vst.msk [vmem:[%s943 + $0x8] sm:$0xff] %vm272, %v912
      %946 = vst.msk [vmem:[%s943 + $0x10] sm:$0xff] %vm272, %v913
      %947 = vst.msk [vmem:[%s943 + $0x18] sm:$0xff] %vm272, %v914
      %948 = vst.msk [vmem:[%s943 + $0x20] sm:$0xff] %vm272, %v915
      %949 = vst.msk [vmem:[%s943 + $0x28] sm:$0xff] %vm272, %v916
      %950 = vst.msk [vmem:[%s943 + $0x30] sm:$0xff] %vm272, %v917
      %951 = vst.msk [vmem:[%s943 + $0x38] sm:$0xff] %vm272, %v918
      %952 = vst.msk [vmem:[%s943 + $0x40] sm:$0xff] %vm272, %v919
      %953 = vst.msk [vmem:[%s943 + $0x48] sm:$0xff] %vm272, %v920
      %954 = vst.msk [vmem:[%s943 + $0x50] sm:$0xff] %vm272, %v921
      %955 = vst.msk [vmem:[%s943 + $0x58] sm:$0xff] %vm272, %v922
      %956 = vst.msk [vmem:[%s943 + $0x60] sm:$0xff] %vm272, %v923
      %957 = vst.msk [vmem:[%s943 + $0x68] sm:$0xff] %vm272, %v924
      %958 = vst.msk [vmem:[%s943 + $0x70] sm:$0xff] %vm272, %v925
      %959 = vst.msk [vmem:[%s943 + $0x78] sm:$0xff] %vm272, %v926
      %960 = vst.msk [vmem:[%s943 + $0x80] sm:$0xff] %vm272, %v927
      %961 = vst.msk [vmem:[%s943 + $0x88] sm:$0xff] %vm272, %v928
      %962 = vst.msk [vmem:[%s943 + $0x90] sm:$0xff] %vm272, %v929
      %963 = vst.msk [vmem:[%s943 + $0x98] sm:$0xff] %vm272, %v930
      %964 = vst.msk [vmem:[%s943 + $0xa0] sm:$0xff] %vm272, %v931
      %965 = vst.msk [vmem:[%s943 + $0xa8] sm:$0xff] %vm272, %v932
      %966 = vst.msk [vmem:[%s943 + $0xb0] sm:$0xff] %vm272, %v933
      %967 = vst.msk [vmem:[%s943 + $0xb8] sm:$0xff] %vm272, %v934
      %968 = vst.msk [vmem:[%s943 + $0xc0] sm:$0xff] %vm272, %v935
      %969 = vst.msk [vmem:[%s943 + $0xc8] sm:$0xff] %vm272, %v936
      %970 = vst.msk [vmem:[%s943 + $0xd0] sm:$0xff] %vm272, %v937
      %971 = vst.msk [vmem:[%s943 + $0xd8] sm:$0xff] %vm272, %v938
      %972 = vst.msk [vmem:[%s943 + $0xe0] sm:$0xff] %vm272, %v939
      %973 = vst.msk [vmem:[%s943 + $0xe8] sm:$0xff] %vm272, %v940
      %974 = vst.msk [vmem:[%s943 + $0xf0] sm:$0xff] %vm272, %v941
      %975 = vst.msk [vmem:[%s943 + $0xf8] sm:$0xff] %vm272, %v942
      %v976 = vld [vmem:[#allocation2] sm:$0xff]
      %v977 = vld [vmem:[#allocation2 + $0x8] sm:$0xff]
      %v978 = vld [vmem:[#allocation2 + $0x10] sm:$0xff]
      %v979 = vld [vmem:[#allocation2 + $0x18] sm:$0xff]
      %v980 = vld [vmem:[#allocation2 + $0x20] sm:$0xff]
      %v981 = vld [vmem:[#allocation2 + $0x28] sm:$0xff]
      %v982 = vld [vmem:[#allocation2 + $0x30] sm:$0xff]
      %v983 = vld [vmem:[#allocation2 + $0x38] sm:$0xff]
      %v984 = vld [vmem:[#allocation2 + $0x40] sm:$0xff]
      %v985 = vld [vmem:[#allocation2 + $0x48] sm:$0xff]
      %v986 = vld [vmem:[#allocation2 + $0x50] sm:$0xff]
      %v987 = vld [vmem:[#allocation2 + $0x58] sm:$0xff]
      %v988 = vld [vmem:[#allocation2 + $0x60] sm:$0xff]
      %v989 = vld [vmem:[#allocation2 + $0x68] sm:$0xff]
      %v990 = vld [vmem:[#allocation2 + $0x70] sm:$0xff]
      %v991 = vld [vmem:[#allocation2 + $0x78] sm:$0xff]
      %v992 = vld [vmem:[#allocation2 + $0x80] sm:$0xff]
      %v993 = vld [vmem:[#allocation2 + $0x88] sm:$0xff]
      %v994 = vld [vmem:[#allocation2 + $0x90] sm:$0xff]
      %v995 = vld [vmem:[#allocation2 + $0x98] sm:$0xff]
      %v996 = vld [vmem:[#allocation2 + $0xa0] sm:$0xff]
      %v997 = vld [vmem:[#allocation2 + $0xa8] sm:$0xff]
      %v998 = vld [vmem:[#allocation2 + $0xb0] sm:$0xff]
      %v999 = vld [vmem:[#allocation2 + $0xb8] sm:$0xff]
      %v1000 = vld [vmem:[#allocation2 + $0xc0] sm:$0xff]
      %v1001 = vld [vmem:[#allocation2 + $0xc8] sm:$0xff]
      %v1002 = vld [vmem:[#allocation2 + $0xd0] sm:$0xff]
      %v1003 = vld [vmem:[#allocation2 + $0xd8] sm:$0xff]
      %v1004 = vld [vmem:[#allocation2 + $0xe0] sm:$0xff]
      %v1005 = vld [vmem:[#allocation2 + $0xe8] sm:$0xff]
      %v1006 = vld [vmem:[#allocation2 + $0xf0] sm:$0xff]
      %v1007 = vld [vmem:[#allocation2 + $0xf8] sm:$0xff]
      %v1008 = vld [vmem:[%s3] sm:$0xff]
      %v1009 = vld [vmem:[%s3 + $0x8] sm:$0xff]
      %v1010 = vld [vmem:[%s3 + $0x10] sm:$0xff]
      %v1011 = vld [vmem:[%s943] sm:$0xff]
      %v1012 = vld [vmem:[%s943 + $0x8] sm:$0xff]
      %v1013 = vld [vmem:[%s943 + $0x10] sm:$0xff]
      %v1014 = vld [vmem:[%s943 + $0x18] sm:$0xff]
      %v1015 = vld [vmem:[%s943 + $0x20] sm:$0xff]
      %v1016 = vld [vmem:[%s943 + $0x28] sm:$0xff]
      %v1017 = vld [vmem:[%s943 + $0x30] sm:$0xff]
      %v1018 = vld [vmem:[%s943 + $0x38] sm:$0xff]
      %v1019 = vld [vmem:[%s943 + $0x40] sm:$0xff]
      %v1020 = vld [vmem:[%s943 + $0x48] sm:$0xff]
      %v1021 = vld [vmem:[%s943 + $0x50] sm:$0xff]
      %v1022 = vld [vmem:[%s943 + $0x58] sm:$0xff]
      %v1023 = vld [vmem:[%s943 + $0x60] sm:$0xff]
      %v1024 = vld [vmem:[%s943 + $0x68] sm:$0xff]
      %v1025 = vld [vmem:[%s943 + $0x70] sm:$0xff]
      %v1026 = vld [vmem:[%s943 + $0x78] sm:$0xff]
      %v1027 = vld [vmem:[%s943 + $0x80] sm:$0xff]
      %v1028 = vld [vmem:[%s943 + $0x88] sm:$0xff]
      %v1029 = vld [vmem:[%s943 + $0x90] sm:$0xff]
      %v1030 = vld [vmem:[%s943 + $0x98] sm:$0xff]
      %v1031 = vld [vmem:[%s943 + $0xa0] sm:$0xff]
      %v1032 = vld [vmem:[%s943 + $0xa8] sm:$0xff]
      %v1033 = vld [vmem:[%s943 + $0xb0] sm:$0xff]
      %v1034 = vld [vmem:[%s943 + $0xb8] sm:$0xff]
      %v1035 = vld [vmem:[%s943 + $0xc0] sm:$0xff]
      %v1036 = vld [vmem:[%s943 + $0xc8] sm:$0xff]
      %v1037 = vld [vmem:[%s943 + $0xd0] sm:$0xff]
      %v1038 = vld [vmem:[%s943 + $0xd8] sm:$0xff]
      %v1039 = vld [vmem:[%s943 + $0xe0] sm:$0xff]
      %v1040 = vld [vmem:[%s943 + $0xe8] sm:$0xff]
      %v1041 = vld [vmem:[%s943 + $0xf0] sm:$0xff]
      %v1042 = vld [vmem:[%s943 + $0xf8] sm:$0xff]
      %s1043 = scalar_lea.vmem %s3, 24
      %v1044 = vld [vmem:[%s1043] sm:$0xff]
      %v1045 = vld [vmem:[%s1043 + $0x8] sm:$0xff]
      %v1046 = vld [vmem:[%s1043 + $0x10] sm:$0xff]
      %v1048 = vsel %vm272, %v1011, 0
      %v1051 = vsel %vm272, %v1012, 0
      %v1054 = vsel %vm272, %v1013, 0
      %v1057 = vsel %vm272, %v1014, 0
      %v1060 = vsel %vm272, %v1015, 0
      %v1063 = vsel %vm272, %v1016, 0
      %v1066 = vsel %vm272, %v1017, 0
      %v1069 = vsel %vm272, %v1018, 0
      %v1072 = vsel %vm272, %v1019, 0
      %v1075 = vsel %vm272, %v1020, 0
      %v1078 = vsel %vm272, %v1021, 0
      %v1081 = vsel %vm272, %v1022, 0
      %v1084 = vsel %vm272, %v1023, 0
      %v1087 = vsel %vm272, %v1024, 0
      %v1090 = vsel %vm272, %v1025, 0
      %v1093 = vsel %vm272, %v1026, 0
      %v1096 = vsel %vm272, %v1027, 0
      %v1099 = vsel %vm272, %v1028, 0
      %v1102 = vsel %vm272, %v1029, 0
      %v1105 = vsel %vm272, %v1030, 0
      %v1108 = vsel %vm272, %v1031, 0
      %v1111 = vsel %vm272, %v1032, 0
      %v1114 = vsel %vm272, %v1033, 0
      %v1117 = vsel %vm272, %v1034, 0
      %v1120 = vsel %vm272, %v1035, 0
      %v1123 = vsel %vm272, %v1036, 0
      %v1126 = vsel %vm272, %v1037, 0
      %v1129 = vsel %vm272, %v1038, 0
      %v1132 = vsel %vm272, %v1039, 0
      %v1135 = vsel %vm272, %v1040, 0
      %v1138 = vsel %vm272, %v1041, 0
      %v1141 = vsel %vm272, %v1042, 0
      %1143 = vmatprep.subr.mxu0 0.0
      %1144 = vmatpush1.msra.mxu0 %v1044
      %1145 = vmatprep.subr.mxu0 0.0
      %1146 = vmatpush1.msra.mxu0 %v1045
      %1147 = vmatprep.subr.mxu0 0.0
      %1148 = vmatpush1.msra.mxu0 %v1046
      %1149 = vmatprep.subr.mxu0 0.0
      %1150 = vmatpush1.msra.mxu0 0.0
      %1151 = vmatprep.subr.mxu0 0.0
      %1152 = vmatpush1.msra.mxu0 0.0
      %1153 = vmatprep.subr.mxu0 0.0
      %1154 = vmatpush1.msra.mxu0 0.0
      %1155 = vmatprep.subr.mxu0 0.0
      %1156 = vmatpush1.msra.mxu0 0.0
      %1157 = vmatprep.subr.mxu0 0.0
      %1158 = vmatpush1.msra.mxu0 0.0
      %1159 = vmatprep.subr.mxu0 0.0
      %1160 = vmatpush1.msra.mxu0 0.0
      %1161 = vmatprep.subr.mxu0 0.0
      %1162 = vmatpush1.msra.mxu0 0.0
      %1163 = vmatprep.subr.mxu0 0.0
      %1164 = vmatpush1.msra.mxu0 0.0
      %1165 = vmatprep.subr.mxu0 0.0
      %1166 = vmatpush1.msra.mxu0 0.0
      %1167 = vmatprep.subr.mxu0 0.0
      %1168 = vmatpush1.msra.mxu0 0.0
      %1169 = vmatprep.subr.mxu0 0.0
      %1170 = vmatpush1.msra.mxu0 0.0
      %1171 = vmatprep.subr.mxu0 0.0
      %1172 = vmatpush1.msra.mxu0 0.0
      %1173 = vmatprep.subr.mxu0 0.0
      %1174 = vmatpush1.msra.mxu0 0.0
      %1175 = vmatprep.subr.mxu0 0.0
      %1176 = vmatpush1.msra.mxu0 0.0
      %1177 = vmatprep.subr.mxu0 0.0
      %1178 = vmatpush1.msra.mxu0 0.0
      %1179 = vmatprep.subr.mxu0 0.0
      %1180 = vmatpush1.msra.mxu0 0.0
      %1181 = vmatprep.subr.mxu0 0.0
      %1182 = vmatpush1.msra.mxu0 0.0
      %1183 = vmatprep.subr.mxu0 0.0
      %1184 = vmatpush1.msra.mxu0 0.0
      %1185 = vmatprep.subr.mxu0 0.0
      %1186 = vmatpush1.msra.mxu0 0.0
      %1187 = vmatprep.subr.mxu0 0.0
      %1188 = vmatpush1.msra.mxu0 0.0
      %1189 = vmatprep.subr.mxu0 0.0
      %1190 = vmatpush1.msra.mxu0 0.0
      %1191 = vmatprep.subr.mxu0 0.0
      %1192 = vmatpush1.msra.mxu0 0.0
      %1193 = vmatprep.subr.mxu0 0.0
      %1194 = vmatpush1.msra.mxu0 0.0
      %1195 = vmatprep.subr.mxu0 0.0
      %1196 = vmatpush1.msra.mxu0 0.0
      %1197 = vmatprep.subr.mxu0 0.0
      %1198 = vmatpush1.msra.mxu0 0.0
      %1199 = vmatprep.subr.mxu0 0.0
      %1200 = vmatpush1.msra.mxu0 0.0
      %1201 = vmatprep.subr.mxu0 0.0
      %1202 = vmatpush1.msra.mxu0 0.0
      %1203 = vmatprep.subr.mxu0 0.0
      %1204 = vmatpush1.msra.mxu0 0.0
      %1205 = vmatprep.subr.mxu0 0.0
      %1206 = vmatpush1.msra.mxu0 0.0
      %1207 = vmatprep.mubr.f32.mxu0 0.0
      %1208 = vmatmul.mubr.f32.gmra.mrb[0].mxu0 %v1048
      %v1209 = vpop.f32.mrb[0].mxu0
      %v1210 = vadd.f32 0.0, %v1209
      %v1211 = vpop.f32.mrb[0].mxu0
      %1212 = vmatprep.mubr.f32.mxu0 0.0
      %1213 = vmatmul.mubr.f32.gmra.mrb[0].mxu0 %v1051
      %v1214 = vpop.f32.mrb[0].mxu0
      %v1215 = vadd.f32 0.0, %v1214
      %v1216 = vpop.f32.mrb[0].mxu0
      %1217 = vmatprep.mubr.f32.mxu0 0.0
      %1218 = vmatmul.mubr.f32.gmra.mrb[0].mxu0 %v1054
      %v1219 = vpop.f32.mrb[0].mxu0
      %v1220 = vadd.f32 0.0, %v1219
      %v1221 = vpop.f32.mrb[0].mxu0
      %1222 = vmatprep.mubr.f32.mxu0 0.0
      %1223 = vmatmul.mubr.f32.gmra.mrb[0].mxu0 %v1057
      %v1224 = vpop.f32.mrb[0].mxu0
      %v1225 = vadd.f32 0.0, %v1224
      %v1226 = vpop.f32.mrb[0].mxu0
      %1227 = vmatprep.mubr.f32.mxu0 0.0
      %1228 = vmatmul.mubr.f32.gmra.mrb[0].mxu0 %v1060
      %v1229 = vpop.f32.mrb[0].mxu0
      %v1230 = vadd.f32 0.0, %v1229
      %v1231 = vpop.f32.mrb[0].mxu0
      %1232 = vmatprep.mubr.f32.mxu0 0.0
      %1233 = vmatmul.mubr.f32.gmra.mrb[0].mxu0 %v1063
      %v1234 = vpop.f32.mrb[0].mxu0
      %v1235 = vadd.f32 0.0, %v1234
      %v1236 = vpop.f32.mrb[0].mxu0
      %1237 = vmatprep.mubr.f32.mxu0 0.0
      %1238 = vmatmul.mubr.f32.gmra.mrb[0].mxu0 %v1066
      %v1239 = vpop.f32.mrb[0].mxu0
      %v1240 = vadd.f32 0.0, %v1239
      %v1241 = vpop.f32.mrb[0].mxu0
      %1242 = vmatprep.mubr.f32.mxu0 0.0
      %1243 = vmatmul.mubr.f32.gmra.mrb[0].mxu0 %v1069
      %v1244 = vpop.f32.mrb[0].mxu0
      %v1245 = vadd.f32 0.0, %v1244
      %v1246 = vpop.f32.mrb[0].mxu0
      %1247 = vmatprep.mubr.f32.mxu0 0.0
      %1248 = vmatmul.mubr.f32.gmra.mrb[0].mxu0 %v1072
      %v1249 = vpop.f32.mrb[0].mxu0
      %v1250 = vadd.f32 0.0, %v1249
      %v1251 = vpop.f32.mrb[0].mxu0
      %1252 = vmatprep.mubr.f32.mxu0 0.0
      %1253 = vmatmul.mubr.f32.gmra.mrb[0].mxu0 %v1075
      %v1254 = vpop.f32.mrb[0].mxu0
      %v1255 = vadd.f32 0.0, %v1254
      %v1256 = vpop.f32.mrb[0].mxu0
      %1257 = vmatprep.mubr.f32.mxu0 0.0
      %1258 = vmatmul.mubr.f32.gmra.mrb[0].mxu0 %v1078
      %v1259 = vpop.f32.mrb[0].mxu0
      %v1260 = vadd.f32 0.0, %v1259
      %v1261 = vpop.f32.mrb[0].mxu0
      %1262 = vmatprep.mubr.f32.mxu0 0.0
      %1263 = vmatmul.mubr.f32.gmra.mrb[0].mxu0 %v1081
      %v1264 = vpop.f32.mrb[0].mxu0
      %v1265 = vadd.f32 0.0, %v1264
      %v1266 = vpop.f32.mrb[0].mxu0
      %1267 = vmatprep.mubr.f32.mxu0 0.0
      %1268 = vmatmul.mubr.f32.gmra.mrb[0].mxu0 %v1084
      %v1269 = vpop.f32.mrb[0].mxu0
      %v1270 = vadd.f32 0.0, %v1269
      %v1271 = vpop.f32.mrb[0].mxu0
      %1272 = vmatprep.mubr.f32.mxu0 0.0
      %1273 = vmatmul.mubr.f32.gmra.mrb[0].mxu0 %v1087
      %v1274 = vpop.f32.mrb[0].mxu0
      %v1275 = vadd.f32 0.0, %v1274
      %v1276 = vpop.f32.mrb[0].mxu0
      %1277 = vmatprep.mubr.f32.mxu0 0.0
      %1278 = vmatmul.mubr.f32.gmra.mrb[0].mxu0 %v1090
      %v1279 = vpop.f32.mrb[0].mxu0
      %v1280 = vadd.f32 0.0, %v1279
      %v1281 = vpop.f32.mrb[0].mxu0
      %1282 = vmatprep.mubr.f32.mxu0 0.0
      %1283 = vmatmul.mubr.f32.gmra.mrb[0].mxu0 %v1093
      %v1284 = vpop.f32.mrb[0].mxu0
      %v1285 = vadd.f32 0.0, %v1284
      %v1286 = vpop.f32.mrb[0].mxu0
      %1287 = vmatprep.mubr.f32.mxu0 0.0
      %1288 = vmatmul.mubr.f32.gmra.mrb[0].mxu0 %v1096
      %v1289 = vpop.f32.mrb[0].mxu0
      %v1290 = vadd.f32 0.0, %v1289
      %v1291 = vpop.f32.mrb[0].mxu0
      %1292 = vmatprep.mubr.f32.mxu0 0.0
      %1293 = vmatmul.mubr.f32.gmra.mrb[0].mxu0 %v1099
      %v1294 = vpop.f32.mrb[0].mxu0
      %v1295 = vadd.f32 0.0, %v1294
      %v1296 = vpop.f32.mrb[0].mxu0
      %1297 = vmatprep.mubr.f32.mxu0 0.0
      %1298 = vmatmul.mubr.f32.gmra.mrb[0].mxu0 %v1102
      %v1299 = vpop.f32.mrb[0].mxu0
      %v1300 = vadd.f32 0.0, %v1299
      %v1301 = vpop.f32.mrb[0].mxu0
      %1302 = vmatprep.mubr.f32.mxu0 0.0
      %1303 = vmatmul.mubr.f32.gmra.mrb[0].mxu0 %v1105
      %v1304 = vpop.f32.mrb[0].mxu0
      %v1305 = vadd.f32 0.0, %v1304
      %v1306 = vpop.f32.mrb[0].mxu0
      %1307 = vmatprep.mubr.f32.mxu0 0.0
      %1308 = vmatmul.mubr.f32.gmra.mrb[0].mxu0 %v1108
      %v1309 = vpop.f32.mrb[0].mxu0
      %v1310 = vadd.f32 0.0, %v1309
      %v1311 = vpop.f32.mrb[0].mxu0
      %1312 = vmatprep.mubr.f32.mxu0 0.0
      %1313 = vmatmul.mubr.f32.gmra.mrb[0].mxu0 %v1111
      %v1314 = vpop.f32.mrb[0].mxu0
      %v1315 = vadd.f32 0.0, %v1314
      %v1316 = vpop.f32.mrb[0].mxu0
      %1317 = vmatprep.mubr.f32.mxu0 0.0
      %1318 = vmatmul.mubr.f32.gmra.mrb[0].mxu0 %v1114
      %v1319 = vpop.f32.mrb[0].mxu0
      %v1320 = vadd.f32 0.0, %v1319
      %v1321 = vpop.f32.mrb[0].mxu0
      %1322 = vmatprep.mubr.f32.mxu0 0.0
      %1323 = vmatmul.mubr.f32.gmra.mrb[0].mxu0 %v1117
      %v1324 = vpop.f32.mrb[0].mxu0
      %v1325 = vadd.f32 0.0, %v1324
      %v1326 = vpop.f32.mrb[0].mxu0
      %1327 = vmatprep.mubr.f32.mxu0 0.0
      %1328 = vmatmul.mubr.f32.gmra.mrb[0].mxu0 %v1120
      %v1329 = vpop.f32.mrb[0].mxu0
      %v1330 = vadd.f32 0.0, %v1329
      %v1331 = vpop.f32.mrb[0].mxu0
      %1332 = vmatprep.mubr.f32.mxu0 0.0
      %1333 = vmatmul.mubr.f32.gmra.mrb[0].mxu0 %v1123
      %v1334 = vpop.f32.mrb[0].mxu0
      %v1335 = vadd.f32 0.0, %v1334
      %v1336 = vpop.f32.mrb[0].mxu0
      %1337 = vmatprep.mubr.f32.mxu0 0.0
      %1338 = vmatmul.mubr.f32.gmra.mrb[0].mxu0 %v1126
      %v1339 = vpop.f32.mrb[0].mxu0
      %v1340 = vadd.f32 0.0, %v1339
      %v1341 = vpop.f32.mrb[0].mxu0
      %1342 = vmatprep.mubr.f32.mxu0 0.0
      %1343 = vmatmul.mubr.f32.gmra.mrb[0].mxu0 %v1129
      %v1344 = vpop.f32.mrb[0].mxu0
      %v1345 = vadd.f32 0.0, %v1344
      %v1346 = vpop.f32.mrb[0].mxu0
      %1347 = vmatprep.mubr.f32.mxu0 0.0
      %1348 = vmatmul.mubr.f32.gmra.mrb[0].mxu0 %v1132
      %v1349 = vpop.f32.mrb[0].mxu0
      %v1350 = vadd.f32 0.0, %v1349
      %v1351 = vpop.f32.mrb[0].mxu0
      %1352 = vmatprep.mubr.f32.mxu0 0.0
      %1353 = vmatmul.mubr.f32.gmra.mrb[0].mxu0 %v1135
      %v1354 = vpop.f32.mrb[0].mxu0
      %v1355 = vadd.f32 0.0, %v1354
      %v1356 = vpop.f32.mrb[0].mxu0
      %1357 = vmatprep.mubr.f32.mxu0 0.0
      %1358 = vmatmul.mubr.f32.gmra.mrb[0].mxu0 %v1138
      %v1359 = vpop.f32.mrb[0].mxu0
      %v1360 = vadd.f32 0.0, %v1359
      %v1361 = vpop.f32.mrb[0].mxu0
      %1362 = vmatprep.mubr.f32.mxu0 0.0
      %1363 = vmatmul.mubr.f32.gmra.mrb[0].mxu0 %v1141
      %v1364 = vpop.f32.mrb[0].mxu0
      %v1365 = vadd.f32 0.0, %v1364
      %v1366 = vpop.f32.mrb[0].mxu0
      %1367 = vdwg.mxu0
      %v1369 = vsel %vm272, %v976, 0
      %v1372 = vsel %vm272, %v977, 0
      %v1375 = vsel %vm272, %v978, 0
      %v1378 = vsel %vm272, %v979, 0
      %v1381 = vsel %vm272, %v980, 0
      %v1384 = vsel %vm272, %v981, 0
      %v1387 = vsel %vm272, %v982, 0
      %v1390 = vsel %vm272, %v983, 0
      %v1393 = vsel %vm272, %v984, 0
      %v1396 = vsel %vm272, %v985, 0
      %v1399 = vsel %vm272, %v986, 0
      %v1402 = vsel %vm272, %v987, 0
      %v1405 = vsel %vm272, %v988, 0
      %v1408 = vsel %vm272, %v989, 0
      %v1411 = vsel %vm272, %v990, 0
      %v1414 = vsel %vm272, %v991, 0
      %v1417 = vsel %vm272, %v992, 0
      %v1420 = vsel %vm272, %v993, 0
      %v1423 = vsel %vm272, %v994, 0
      %v1426 = vsel %vm272, %v995, 0
      %v1429 = vsel %vm272, %v996, 0
      %v1432 = vsel %vm272, %v997, 0
      %v1435 = vsel %vm272, %v998, 0
      %v1438 = vsel %vm272, %v999, 0
      %v1441 = vsel %vm272, %v1000, 0
      %v1444 = vsel %vm272, %v1001, 0
      %v1447 = vsel %vm272, %v1002, 0
      %v1450 = vsel %vm272, %v1003, 0
      %v1453 = vsel %vm272, %v1004, 0
      %v1456 = vsel %vm272, %v1005, 0
      %v1459 = vsel %vm272, %v1006, 0
      %v1462 = vsel %vm272, %v1007, 0
      %1464 = vmatprep.subr.mxu0 0.0
      %1465 = vmatpush1.msra.mxu0 %v1008
      %1466 = vmatprep.subr.mxu0 0.0
      %1467 = vmatpush1.msra.mxu0 %v1009
      %1468 = vmatprep.subr.mxu0 0.0
      %1469 = vmatpush1.msra.mxu0 %v1010
      %1470 = vmatprep.subr.mxu0 0.0
      %1471 = vmatpush1.msra.mxu0 0.0
      %1472 = vmatprep.subr.mxu0 0.0
      %1473 = vmatpush1.msra.mxu0 0.0
      %1474 = vmatprep.subr.mxu0 0.0
      %1475 = vmatpush1.msra.mxu0 0.0
      %1476 = vmatprep.subr.mxu0 0.0
      %1477 = vmatpush1.msra.mxu0 0.0
      %1478 = vmatprep.subr.mxu0 0.0
      %1479 = vmatpush1.msra.mxu0 0.0
      %1480 = vmatprep.subr.mxu0 0.0
      %1481 = vmatpush1.msra.mxu0 0.0
      %1482 = vmatprep.subr.mxu0 0.0
      %1483 = vmatpush1.msra.mxu0 0.0
      %1484 = vmatprep.subr.mxu0 0.0
      %1485 = vmatpush1.msra.mxu0 0.0
      %1486 = vmatprep.subr.mxu0 0.0
      %1487 = vmatpush1.msra.mxu0 0.0
      %1488 = vmatprep.subr.mxu0 0.0
      %1489 = vmatpush1.msra.mxu0 0.0
      %1490 = vmatprep.subr.mxu0 0.0
      %1491 = vmatpush1.msra.mxu0 0.0
      %1492 = vmatprep.subr.mxu0 0.0
      %1493 = vmatpush1.msra.mxu0 0.0
      %1494 = vmatprep.subr.mxu0 0.0
      %1495 = vmatpush1.msra.mxu0 0.0
      %1496 = vmatprep.subr.mxu0 0.0
      %1497 = vmatpush1.msra.mxu0 0.0
      %1498 = vmatprep.subr.mxu0 0.0
      %1499 = vmatpush1.msra.mxu0 0.0
      %1500 = vmatprep.subr.mxu0 0.0
      %1501 = vmatpush1.msra.mxu0 0.0
      %1502 = vmatprep.subr.mxu0 0.0
      %1503 = vmatpush1.msra.mxu0 0.0
      %1504 = vmatprep.subr.mxu0 0.0
      %1505 = vmatpush1.msra.mxu0 0.0
      %1506 = vmatprep.subr.mxu0 0.0
      %1507 = vmatpush1.msra.mxu0 0.0
      %1508 = vmatprep.subr.mxu0 0.0
      %1509 = vmatpush1.msra.mxu0 0.0
      %1510 = vmatprep.subr.mxu0 0.0
      %1511 = vmatpush1.msra.mxu0 0.0
      %1512 = vmatprep.subr.mxu0 0.0
      %1513 = vmatpush1.msra.mxu0 0.0
      %1514 = vmatprep.subr.mxu0 0.0
      %1515 = vmatpush1.msra.mxu0 0.0
      %1516 = vmatprep.subr.mxu0 0.0
      %1517 = vmatpush1.msra.mxu0 0.0
      %1518 = vmatprep.subr.mxu0 0.0
      %1519 = vmatpush1.msra.mxu0 0.0
      %1520 = vmatprep.subr.mxu0 0.0
      %1521 = vmatpush1.msra.mxu0 0.0
      %1522 = vmatprep.subr.mxu0 0.0
      %1523 = vmatpush1.msra.mxu0 0.0
      %1524 = vmatprep.subr.mxu0 0.0
      %1525 = vmatpush1.msra.mxu0 0.0
      %1526 = vmatprep.subr.mxu0 0.0
      %1527 = vmatpush1.msra.mxu0 0.0
      %1528 = vmatprep.mubr.f32.mxu0 0.0
      %1529 = vmatmul.mubr.f32.gmra.mrb[0].mxu0 %v1369
      %v1530 = vpop.f32.mrb[0].mxu0
      %v1531 = vadd.f32 %v1210, %v1530
      %v1532 = vpop.f32.mrb[0].mxu0
      %1533 = vmatprep.mubr.f32.mxu0 0.0
      %1534 = vmatmul.mubr.f32.gmra.mrb[0].mxu0 %v1372
      %v1535 = vpop.f32.mrb[0].mxu0
      %v1536 = vadd.f32 %v1215, %v1535
      %v1537 = vpop.f32.mrb[0].mxu0
      %1538 = vmatprep.mubr.f32.mxu0 0.0
      %1539 = vmatmul.mubr.f32.gmra.mrb[0].mxu0 %v1375
      %v1540 = vpop.f32.mrb[0].mxu0
      %v1541 = vadd.f32 %v1220, %v1540
      %v1542 = vpop.f32.mrb[0].mxu0
      %1543 = vmatprep.mubr.f32.mxu0 0.0
      %1544 = vmatmul.mubr.f32.gmra.mrb[0].mxu0 %v1378
      %v1545 = vpop.f32.mrb[0].mxu0
      %v1546 = vadd.f32 %v1225, %v1545
      %v1547 = vpop.f32.mrb[0].mxu0
      %1548 = vmatprep.mubr.f32.mxu0 0.0
      %1549 = vmatmul.mubr.f32.gmra.mrb[0].mxu0 %v1381
      %v1550 = vpop.f32.mrb[0].mxu0
      %v1551 = vadd.f32 %v1230, %v1550
      %v1552 = vpop.f32.mrb[0].mxu0
      %1553 = vmatprep.mubr.f32.mxu0 0.0
      %1554 = vmatmul.mubr.f32.gmra.mrb[0].mxu0 %v1384
      %v1555 = vpop.f32.mrb[0].mxu0
      %v1556 = vadd.f32 %v1235, %v1555
      %v1557 = vpop.f32.mrb[0].mxu0
      %1558 = vmatprep.mubr.f32.mxu0 0.0
      %1559 = vmatmul.mubr.f32.gmra.mrb[0].mxu0 %v1387
      %v1560 = vpop.f32.mrb[0].mxu0
      %v1561 = vadd.f32 %v1240, %v1560
      %v1562 = vpop.f32.mrb[0].mxu0
      %1563 = vmatprep.mubr.f32.mxu0 0.0
      %1564 = vmatmul.mubr.f32.gmra.mrb[0].mxu0 %v1390
      %v1565 = vpop.f32.mrb[0].mxu0
      %v1566 = vadd.f32 %v1245, %v1565
      %v1567 = vpop.f32.mrb[0].mxu0
      %1568 = vmatprep.mubr.f32.mxu0 0.0
      %1569 = vmatmul.mubr.f32.gmra.mrb[0].mxu0 %v1393
      %v1570 = vpop.f32.mrb[0].mxu0
      %v1571 = vadd.f32 %v1250, %v1570
      %v1572 = vpop.f32.mrb[0].mxu0
      %1573 = vmatprep.mubr.f32.mxu0 0.0
      %1574 = vmatmul.mubr.f32.gmra.mrb[0].mxu0 %v1396
      %v1575 = vpop.f32.mrb[0].mxu0
      %v1576 = vadd.f32 %v1255, %v1575
      %v1577 = vpop.f32.mrb[0].mxu0
      %1578 = vmatprep.mubr.f32.mxu0 0.0
      %1579 = vmatmul.mubr.f32.gmra.mrb[0].mxu0 %v1399
      %v1580 = vpop.f32.mrb[0].mxu0
      %v1581 = vadd.f32 %v1260, %v1580
      %v1582 = vpop.f32.mrb[0].mxu0
      %1583 = vmatprep.mubr.f32.mxu0 0.0
      %1584 = vmatmul.mubr.f32.gmra.mrb[0].mxu0 %v1402
      %v1585 = vpop.f32.mrb[0].mxu0
      %v1586 = vadd.f32 %v1265, %v1585
      %v1587 = vpop.f32.mrb[0].mxu0
      %1588 = vmatprep.mubr.f32.mxu0 0.0
      %1589 = vmatmul.mubr.f32.gmra.mrb[0].mxu0 %v1405
      %v1590 = vpop.f32.mrb[0].mxu0
      %v1591 = vadd.f32 %v1270, %v1590
      %v1592 = vpop.f32.mrb[0].mxu0
      %1593 = vmatprep.mubr.f32.mxu0 0.0
      %1594 = vmatmul.mubr.f32.gmra.mrb[0].mxu0 %v1408
      %v1595 = vpop.f32.mrb[0].mxu0
      %v1596 = vadd.f32 %v1275, %v1595
      %v1597 = vpop.f32.mrb[0].mxu0
      %1598 = vmatprep.mubr.f32.mxu0 0.0
      %1599 = vmatmul.mubr.f32.gmra.mrb[0].mxu0 %v1411
      %v1600 = vpop.f32.mrb[0].mxu0
      %v1601 = vadd.f32 %v1280, %v1600
      %v1602 = vpop.f32.mrb[0].mxu0
      %1603 = vmatprep.mubr.f32.mxu0 0.0
      %1604 = vmatmul.mubr.f32.gmra.mrb[0].mxu0 %v1414
      %v1605 = vpop.f32.mrb[0].mxu0
      %v1606 = vadd.f32 %v1285, %v1605
      %v1607 = vpop.f32.mrb[0].mxu0
      %1608 = vmatprep.mubr.f32.mxu0 0.0
      %1609 = vmatmul.mubr.f32.gmra.mrb[0].mxu0 %v1417
      %v1610 = vpop.f32.mrb[0].mxu0
      %v1611 = vadd.f32 %v1290, %v1610
      %v1612 = vpop.f32.mrb[0].mxu0
      %1613 = vmatprep.mubr.f32.mxu0 0.0
      %1614 = vmatmul.mubr.f32.gmra.mrb[0].mxu0 %v1420
      %v1615 = vpop.f32.mrb[0].mxu0
      %v1616 = vadd.f32 %v1295, %v1615
      %v1617 = vpop.f32.mrb[0].mxu0
      %1618 = vmatprep.mubr.f32.mxu0 0.0
      %1619 = vmatmul.mubr.f32.gmra.mrb[0].mxu0 %v1423
      %v1620 = vpop.f32.mrb[0].mxu0
      %v1621 = vadd.f32 %v1300, %v1620
      %v1622 = vpop.f32.mrb[0].mxu0
      %1623 = vmatprep.mubr.f32.mxu0 0.0
      %1624 = vmatmul.mubr.f32.gmra.mrb[0].mxu0 %v1426
      %v1625 = vpop.f32.mrb[0].mxu0
      %v1626 = vadd.f32 %v1305, %v1625
      %v1627 = vpop.f32.mrb[0].mxu0
      %1628 = vmatprep.mubr.f32.mxu0 0.0
      %1629 = vmatmul.mubr.f32.gmra.mrb[0].mxu0 %v1429
      %v1630 = vpop.f32.mrb[0].mxu0
      %v1631 = vadd.f32 %v1310, %v1630
      %v1632 = vpop.f32.mrb[0].mxu0
      %1633 = vmatprep.mubr.f32.mxu0 0.0
      %1634 = vmatmul.mubr.f32.gmra.mrb[0].mxu0 %v1432
      %v1635 = vpop.f32.mrb[0].mxu0
      %v1636 = vadd.f32 %v1315, %v1635
      %v1637 = vpop.f32.mrb[0].mxu0
      %1638 = vmatprep.mubr.f32.mxu0 0.0
      %1639 = vmatmul.mubr.f32.gmra.mrb[0].mxu0 %v1435
      %v1640 = vpop.f32.mrb[0].mxu0
      %v1641 = vadd.f32 %v1320, %v1640
      %v1642 = vpop.f32.mrb[0].mxu0
      %1643 = vmatprep.mubr.f32.mxu0 0.0
      %1644 = vmatmul.mubr.f32.gmra.mrb[0].mxu0 %v1438
      %v1645 = vpop.f32.mrb[0].mxu0
      %v1646 = vadd.f32 %v1325, %v1645
      %v1647 = vpop.f32.mrb[0].mxu0
      %1648 = vmatprep.mubr.f32.mxu0 0.0
      %1649 = vmatmul.mubr.f32.gmra.mrb[0].mxu0 %v1441
      %v1650 = vpop.f32.mrb[0].mxu0
      %v1651 = vadd.f32 %v1330, %v1650
      %v1652 = vpop.f32.mrb[0].mxu0
      %1653 = vmatprep.mubr.f32.mxu0 0.0
      %1654 = vmatmul.mubr.f32.gmra.mrb[0].mxu0 %v1444
      %v1655 = vpop.f32.mrb[0].mxu0
      %v1656 = vadd.f32 %v1335, %v1655
      %v1657 = vpop.f32.mrb[0].mxu0
      %1658 = vmatprep.mubr.f32.mxu0 0.0
      %1659 = vmatmul.mubr.f32.gmra.mrb[0].mxu0 %v1447
      %v1660 = vpop.f32.mrb[0].mxu0
      %v1661 = vadd.f32 %v1340, %v1660
      %v1662 = vpop.f32.mrb[0].mxu0
      %1663 = vmatprep.mubr.f32.mxu0 0.0
      %1664 = vmatmul.mubr.f32.gmra.mrb[0].mxu0 %v1450
      %v1665 = vpop.f32.mrb[0].mxu0
      %v1666 = vadd.f32 %v1345, %v1665
      %v1667 = vpop.f32.mrb[0].mxu0
      %1668 = vmatprep.mubr.f32.mxu0 0.0
      %1669 = vmatmul.mubr.f32.gmra.mrb[0].mxu0 %v1453
      %v1670 = vpop.f32.mrb[0].mxu0
      %v1671 = vadd.f32 %v1350, %v1670
      %v1672 = vpop.f32.mrb[0].mxu0
      %1673 = vmatprep.mubr.f32.mxu0 0.0
      %1674 = vmatmul.mubr.f32.gmra.mrb[0].mxu0 %v1456
      %v1675 = vpop.f32.mrb[0].mxu0
      %v1676 = vadd.f32 %v1355, %v1675
      %v1677 = vpop.f32.mrb[0].mxu0
      %1678 = vmatprep.mubr.f32.mxu0 0.0
      %1679 = vmatmul.mubr.f32.gmra.mrb[0].mxu0 %v1459
      %v1680 = vpop.f32.mrb[0].mxu0
      %v1681 = vadd.f32 %v1360, %v1680
      %v1682 = vpop.f32.mrb[0].mxu0
      %1683 = vmatprep.mubr.f32.mxu0 0.0
      %1684 = vmatmul.mubr.f32.gmra.mrb[0].mxu0 %v1462
      %v1685 = vpop.f32.mrb[0].mxu0
      %v1686 = vadd.f32 %v1365, %v1685
      %v1687 = vpop.f32.mrb[0].mxu0
      %1688 = vdwg.mxu0
      %s1689 = scalar_lea.vmem [#allocation2], 32
      %v1690 = vld [vmem:[%s1689] sm:$0xff]
      %v1691 = vld [vmem:[%s1689 + $0x8] sm:$0xff]
      %v1692 = vld [vmem:[%s1689 + $0x10] sm:$0xff]
      %v1693 = vld [vmem:[%s1689 + $0x18] sm:$0xff]
      %v1694 = vld [vmem:[%s1689 + $0x20] sm:$0xff]
      %v1695 = vld [vmem:[%s1689 + $0x28] sm:$0xff]
      %v1696 = vld [vmem:[%s1689 + $0x30] sm:$0xff]
      %v1697 = vld [vmem:[%s1689 + $0x38] sm:$0xff]
      %v1698 = vld [vmem:[%s1689 + $0x40] sm:$0xff]
      %v1699 = vld [vmem:[%s1689 + $0x48] sm:$0xff]
      %v1700 = vld [vmem:[%s1689 + $0x50] sm:$0xff]
      %v1701 = vld [vmem:[%s1689 + $0x58] sm:$0xff]
      %v1702 = vld [vmem:[%s1689 + $0x60] sm:$0xff]
      %v1703 = vld [vmem:[%s1689 + $0x68] sm:$0xff]
      %v1704 = vld [vmem:[%s1689 + $0x70] sm:$0xff]
      %v1705 = vld [vmem:[%s1689 + $0x78] sm:$0xff]
      %v1706 = vld [vmem:[%s1689 + $0x80] sm:$0xff]
      %v1707 = vld [vmem:[%s1689 + $0x88] sm:$0xff]
      %v1708 = vld [vmem:[%s1689 + $0x90] sm:$0xff]
      %v1709 = vld [vmem:[%s1689 + $0x98] sm:$0xff]
      %v1710 = vld [vmem:[%s1689 + $0xa0] sm:$0xff]
      %v1711 = vld [vmem:[%s1689 + $0xa8] sm:$0xff]
      %v1712 = vld [vmem:[%s1689 + $0xb0] sm:$0xff]
      %v1713 = vld [vmem:[%s1689 + $0xb8] sm:$0xff]
      %v1714 = vld [vmem:[%s1689 + $0xc0] sm:$0xff]
      %v1715 = vld [vmem:[%s1689 + $0xc8] sm:$0xff]
      %v1716 = vld [vmem:[%s1689 + $0xd0] sm:$0xff]
      %v1717 = vld [vmem:[%s1689 + $0xd8] sm:$0xff]
      %v1718 = vld [vmem:[%s1689 + $0xe0] sm:$0xff]
      %v1719 = vld [vmem:[%s1689 + $0xe8] sm:$0xff]
      %v1720 = vld [vmem:[%s1689 + $0xf0] sm:$0xff]
      %v1721 = vld [vmem:[%s1689 + $0xf8] sm:$0xff]
      %s1722 = scalar_lea.vmem %s3, 48
      %v1723 = vld [vmem:[%s1722] sm:$0xff]
      %v1724 = vld [vmem:[%s1722 + $0x8] sm:$0xff]
      %v1725 = vld [vmem:[%s1722 + $0x10] sm:$0xff]
      %v1727 = vsel %vm272, %v1690, 0
      %v1730 = vsel %vm272, %v1691, 0
      %v1733 = vsel %vm272, %v1692, 0
      %v1736 = vsel %vm272, %v1693, 0
      %v1739 = vsel %vm272, %v1694, 0
      %v1742 = vsel %vm272, %v1695, 0
      %v1745 = vsel %vm272, %v1696, 0
      %v1748 = vsel %vm272, %v1697, 0
      %v1751 = vsel %vm272, %v1698, 0
      %v1754 = vsel %vm272, %v1699, 0
      %v1757 = vsel %vm272, %v1700, 0
      %v1760 = vsel %vm272, %v1701, 0
      %v1763 = vsel %vm272, %v1702, 0
      %v1766 = vsel %vm272, %v1703, 0
      %v1769 = vsel %vm272, %v1704, 0
      %v1772 = vsel %vm272, %v1705, 0
      %v1775 = vsel %vm272, %v1706, 0
      %v1778 = vsel %vm272, %v1707, 0
      %v1781 = vsel %vm272, %v1708, 0
      %v1784 = vsel %vm272, %v1709, 0
      %v1787 = vsel %vm272, %v1710, 0
      %v1790 = vsel %vm272, %v1711, 0
      %v1793 = vsel %vm272, %v1712, 0
      %v1796 = vsel %vm272, %v1713, 0
      %v1799 = vsel %vm272, %v1714, 0
      %v1802 = vsel %vm272, %v1715, 0
      %v1805 = vsel %vm272, %v1716, 0
      %v1808 = vsel %vm272, %v1717, 0
      %v1811 = vsel %vm272, %v1718, 0
      %v1814 = vsel %vm272, %v1719, 0
      %v1817 = vsel %vm272, %v1720, 0
      %v1820 = vsel %vm272, %v1721, 0
      %1822 = vmatprep.subr.mxu0 0.0
      %1823 = vmatpush1.msra.mxu0 %v1723
      %1824 = vmatprep.subr.mxu0 0.0
      %1825 = vmatpush1.msra.mxu0 %v1724
      %1826 = vmatprep.subr.mxu0 0.0
      %1827 = vmatpush1.msra.mxu0 %v1725
      %1828 = vmatprep.subr.mxu0 0.0
      %1829 = vmatpush1.msra.mxu0 0.0
      %1830 = vmatprep.subr.mxu0 0.0
      %1831 = vmatpush1.msra.mxu0 0.0
      %1832 = vmatprep.subr.mxu0 0.0
      %1833 = vmatpush1.msra.mxu0 0.0
      %1834 = vmatprep.subr.mxu0 0.0
      %1835 = vmatpush1.msra.mxu0 0.0
      %1836 = vmatprep.subr.mxu0 0.0
      %1837 = vmatpush1.msra.mxu0 0.0
      %1838 = vmatprep.subr.mxu0 0.0
      %1839 = vmatpush1.msra.mxu0 0.0
      %1840 = vmatprep.subr.mxu0 0.0
      %1841 = vmatpush1.msra.mxu0 0.0
      %1842 = vmatprep.subr.mxu0 0.0
      %1843 = vmatpush1.msra.mxu0 0.0
      %1844 = vmatprep.subr.mxu0 0.0
      %1845 = vmatpush1.msra.mxu0 0.0
      %1846 = vmatprep.subr.mxu0 0.0
      %1847 = vmatpush1.msra.mxu0 0.0
      %1848 = vmatprep.subr.mxu0 0.0
      %1849 = vmatpush1.msra.mxu0 0.0
      %1850 = vmatprep.subr.mxu0 0.0
      %1851 = vmatpush1.msra.mxu0 0.0
      %1852 = vmatprep.subr.mxu0 0.0
      %1853 = vmatpush1.msra.mxu0 0.0
      %1854 = vmatprep.subr.mxu0 0.0
      %1855 = vmatpush1.msra.mxu0 0.0
      %1856 = vmatprep.subr.mxu0 0.0
      %1857 = vmatpush1.msra.mxu0 0.0
      %1858 = vmatprep.subr.mxu0 0.0
      %1859 = vmatpush1.msra.mxu0 0.0
      %1860 = vmatprep.subr.mxu0 0.0
      %1861 = vmatpush1.msra.mxu0 0.0
      %1862 = vmatprep.subr.mxu0 0.0
      %1863 = vmatpush1.msra.mxu0 0.0
      %1864 = vmatprep.subr.mxu0 0.0
      %1865 = vmatpush1.msra.mxu0 0.0
      %1866 = vmatprep.subr.mxu0 0.0
      %1867 = vmatpush1.msra.mxu0 0.0
      %1868 = vmatprep.subr.mxu0 0.0
      %1869 = vmatpush1.msra.mxu0 0.0
      %1870 = vmatprep.subr.mxu0 0.0
      %1871 = vmatpush1.msra.mxu0 0.0
      %1872 = vmatprep.subr.mxu0 0.0
      %1873 = vmatpush1.msra.mxu0 0.0
      %1874 = vmatprep.subr.mxu0 0.0
      %1875 = vmatpush1.msra.mxu0 0.0
      %1876 = vmatprep.subr.mxu0 0.0
      %1877 = vmatpush1.msra.mxu0 0.0
      %1878 = vmatprep.subr.mxu0 0.0
      %1879 = vmatpush1.msra.mxu0 0.0
      %1880 = vmatprep.subr.mxu0 0.0
      %1881 = vmatpush1.msra.mxu0 0.0
      %1882 = vmatprep.subr.mxu0 0.0
      %1883 = vmatpush1.msra.mxu0 0.0
      %1884 = vmatprep.subr.mxu0 0.0
      %1885 = vmatpush1.msra.mxu0 0.0
      %1886 = vmatprep.mubr.f32.mxu0 0.0
      %1887 = vmatmul.mubr.f32.gmra.mrb[0].mxu0 %v1727
      %v1888 = vpop.f32.mrb[0].mxu0
      %v1889 = vadd.f32 0.0, %v1888
      %v1890 = vpop.f32.mrb[0].mxu0
      %1891 = vmatprep.mubr.f32.mxu0 0.0
      %1892 = vmatmul.mubr.f32.gmra.mrb[0].mxu0 %v1730
      %v1893 = vpop.f32.mrb[0].mxu0
      %v1894 = vadd.f32 0.0, %v1893
      %v1895 = vpop.f32.mrb[0].mxu0
      %1896 = vmatprep.mubr.f32.mxu0 0.0
      %1897 = vmatmul.mubr.f32.gmra.mrb[0].mxu0 %v1733
      %v1898 = vpop.f32.mrb[0].mxu0
      %v1899 = vadd.f32 0.0, %v1898
      %v1900 = vpop.f32.mrb[0].mxu0
      %1901 = vmatprep.mubr.f32.mxu0 0.0
      %1902 = vmatmul.mubr.f32.gmra.mrb[0].mxu0 %v1736
      %v1903 = vpop.f32.mrb[0].mxu0
      %v1904 = vadd.f32 0.0, %v1903
      %v1905 = vpop.f32.mrb[0].mxu0
      %1906 = vmatprep.mubr.f32.mxu0 0.0
      %1907 = vmatmul.mubr.f32.gmra.mrb[0].mxu0 %v1739
      %v1908 = vpop.f32.mrb[0].mxu0
      %v1909 = vadd.f32 0.0, %v1908
      %v1910 = vpop.f32.mrb[0].mxu0
      %1911 = vmatprep.mubr.f32.mxu0 0.0
      %1912 = vmatmul.mubr.f32.gmra.mrb[0].mxu0 %v1742
      %v1913 = vpop.f32.mrb[0].mxu0
      %v1914 = vadd.f32 0.0, %v1913
      %v1915 = vpop.f32.mrb[0].mxu0
      %1916 = vmatprep.mubr.f32.mxu0 0.0
      %1917 = vmatmul.mubr.f32.gmra.mrb[0].mxu0 %v1745
      %v1918 = vpop.f32.mrb[0].mxu0
      %v1919 = vadd.f32 0.0, %v1918
      %v1920 = vpop.f32.mrb[0].mxu0
      %1921 = vmatprep.mubr.f32.mxu0 0.0
      %1922 = vmatmul.mubr.f32.gmra.mrb[0].mxu0 %v1748
      %v1923 = vpop.f32.mrb[0].mxu0
      %v1924 = vadd.f32 0.0, %v1923
      %v1925 = vpop.f32.mrb[0].mxu0
      %1926 = vmatprep.mubr.f32.mxu0 0.0
      %1927 = vmatmul.mubr.f32.gmra.mrb[0].mxu0 %v1751
      %v1928 = vpop.f32.mrb[0].mxu0
      %v1929 = vadd.f32 0.0, %v1928
      %v1930 = vpop.f32.mrb[0].mxu0
      %1931 = vmatprep.mubr.f32.mxu0 0.0
      %1932 = vmatmul.mubr.f32.gmra.mrb[0].mxu0 %v1754
      %v1933 = vpop.f32.mrb[0].mxu0
      %v1934 = vadd.f32 0.0, %v1933
      %v1935 = vpop.f32.mrb[0].mxu0
      %1936 = vmatprep.mubr.f32.mxu0 0.0
      %1937 = vmatmul.mubr.f32.gmra.mrb[0].mxu0 %v1757
      %v1938 = vpop.f32.mrb[0].mxu0
      %v1939 = vadd.f32 0.0, %v1938
      %v1940 = vpop.f32.mrb[0].mxu0
      %1941 = vmatprep.mubr.f32.mxu0 0.0
      %1942 = vmatmul.mubr.f32.gmra.mrb[0].mxu0 %v1760
      %v1943 = vpop.f32.mrb[0].mxu0
      %v1944 = vadd.f32 0.0, %v1943
      %v1945 = vpop.f32.mrb[0].mxu0
      %1946 = vmatprep.mubr.f32.mxu0 0.0
      %1947 = vmatmul.mubr.f32.gmra.mrb[0].mxu0 %v1763
      %v1948 = vpop.f32.mrb[0].mxu0
      %v1949 = vadd.f32 0.0, %v1948
      %v1950 = vpop.f32.mrb[0].mxu0
      %1951 = vmatprep.mubr.f32.mxu0 0.0
      %1952 = vmatmul.mubr.f32.gmra.mrb[0].mxu0 %v1766
      %v1953 = vpop.f32.mrb[0].mxu0
      %v1954 = vadd.f32 0.0, %v1953
      %v1955 = vpop.f32.mrb[0].mxu0
      %1956 = vmatprep.mubr.f32.mxu0 0.0
      %1957 = vmatmul.mubr.f32.gmra.mrb[0].mxu0 %v1769
      %v1958 = vpop.f32.mrb[0].mxu0
      %v1959 = vadd.f32 0.0, %v1958
      %v1960 = vpop.f32.mrb[0].mxu0
      %1961 = vmatprep.mubr.f32.mxu0 0.0
      %1962 = vmatmul.mubr.f32.gmra.mrb[0].mxu0 %v1772
      %v1963 = vpop.f32.mrb[0].mxu0
      %v1964 = vadd.f32 0.0, %v1963
      %v1965 = vpop.f32.mrb[0].mxu0
      %1966 = vmatprep.mubr.f32.mxu0 0.0
      %1967 = vmatmul.mubr.f32.gmra.mrb[0].mxu0 %v1775
      %v1968 = vpop.f32.mrb[0].mxu0
      %v1969 = vadd.f32 0.0, %v1968
      %v1970 = vpop.f32.mrb[0].mxu0
      %1971 = vmatprep.mubr.f32.mxu0 0.0
      %1972 = vmatmul.mubr.f32.gmra.mrb[0].mxu0 %v1778
      %v1973 = vpop.f32.mrb[0].mxu0
      %v1974 = vadd.f32 0.0, %v1973
      %v1975 = vpop.f32.mrb[0].mxu0
      %1976 = vmatprep.mubr.f32.mxu0 0.0
      %1977 = vmatmul.mubr.f32.gmra.mrb[0].mxu0 %v1781
      %v1978 = vpop.f32.mrb[0].mxu0
      %v1979 = vadd.f32 0.0, %v1978
      %v1980 = vpop.f32.mrb[0].mxu0
      %1981 = vmatprep.mubr.f32.mxu0 0.0
      %1982 = vmatmul.mubr.f32.gmra.mrb[0].mxu0 %v1784
      %v1983 = vpop.f32.mrb[0].mxu0
      %v1984 = vadd.f32 0.0, %v1983
      %v1985 = vpop.f32.mrb[0].mxu0
      %1986 = vmatprep.mubr.f32.mxu0 0.0
      %1987 = vmatmul.mubr.f32.gmra.mrb[0].mxu0 %v1787
      %v1988 = vpop.f32.mrb[0].mxu0
      %v1989 = vadd.f32 0.0, %v1988
      %v1990 = vpop.f32.mrb[0].mxu0
      %1991 = vmatprep.mubr.f32.mxu0 0.0
      %1992 = vmatmul.mubr.f32.gmra.mrb[0].mxu0 %v1790
      %v1993 = vpop.f32.mrb[0].mxu0
      %v1994 = vadd.f32 0.0, %v1993
      %v1995 = vpop.f32.mrb[0].mxu0
      %1996 = vmatprep.mubr.f32.mxu0 0.0
      %1997 = vmatmul.mubr.f32.gmra.mrb[0].mxu0 %v1793
      %v1998 = vpop.f32.mrb[0].mxu0
      %v1999 = vadd.f32 0.0, %v1998
      %v2000 = vpop.f32.mrb[0].mxu0
      %2001 = vmatprep.mubr.f32.mxu0 0.0
      %2002 = vmatmul.mubr.f32.gmra.mrb[0].mxu0 %v1796
      %v2003 = vpop.f32.mrb[0].mxu0
      %v2004 = vadd.f32 0.0, %v2003
      %v2005 = vpop.f32.mrb[0].mxu0
      %2006 = vmatprep.mubr.f32.mxu0 0.0
      %2007 = vmatmul.mubr.f32.gmra.mrb[0].mxu0 %v1799
      %v2008 = vpop.f32.mrb[0].mxu0
      %v2009 = vadd.f32 0.0, %v2008
      %v2010 = vpop.f32.mrb[0].mxu0
      %2011 = vmatprep.mubr.f32.mxu0 0.0
      %2012 = vmatmul.mubr.f32.gmra.mrb[0].mxu0 %v1802
      %v2013 = vpop.f32.mrb[0].mxu0
      %v2014 = vadd.f32 0.0, %v2013
      %v2015 = vpop.f32.mrb[0].mxu0
      %2016 = vmatprep.mubr.f32.mxu0 0.0
      %2017 = vmatmul.mubr.f32.gmra.mrb[0].mxu0 %v1805
      %v2018 = vpop.f32.mrb[0].mxu0
      %v2019 = vadd.f32 0.0, %v2018
      %v2020 = vpop.f32.mrb[0].mxu0
      %2021 = vmatprep.mubr.f32.mxu0 0.0
      %2022 = vmatmul.mubr.f32.gmra.mrb[0].mxu0 %v1808
      %v2023 = vpop.f32.mrb[0].mxu0
      %v2024 = vadd.f32 0.0, %v2023
      %v2025 = vpop.f32.mrb[0].mxu0
      %2026 = vmatprep.mubr.f32.mxu0 0.0
      %2027 = vmatmul.mubr.f32.gmra.mrb[0].mxu0 %v1811
      %v2028 = vpop.f32.mrb[0].mxu0
      %v2029 = vadd.f32 0.0, %v2028
      %v2030 = vpop.f32.mrb[0].mxu0
      %2031 = vmatprep.mubr.f32.mxu0 0.0
      %2032 = vmatmul.mubr.f32.gmra.mrb[0].mxu0 %v1814
      %v2033 = vpop.f32.mrb[0].mxu0
      %v2034 = vadd.f32 0.0, %v2033
      %v2035 = vpop.f32.mrb[0].mxu0
      %2036 = vmatprep.mubr.f32.mxu0 0.0
      %2037 = vmatmul.mubr.f32.gmra.mrb[0].mxu0 %v1817
      %v2038 = vpop.f32.mrb[0].mxu0
      %v2039 = vadd.f32 0.0, %v2038
      %v2040 = vpop.f32.mrb[0].mxu0
      %2041 = vmatprep.mubr.f32.mxu0 0.0
      %2042 = vmatmul.mubr.f32.gmra.mrb[0].mxu0 %v1820
      %v2043 = vpop.f32.mrb[0].mxu0
      %v2044 = vadd.f32 0.0, %v2043
      %v2045 = vpop.f32.mrb[0].mxu0
      %2046 = vdwg.mxu0
      %v2047 = vadd.f32 %v1531, %v1889
      %v2048 = vadd.f32 %v1536, %v1894
      %v2049 = vadd.f32 %v1541, %v1899
      %v2050 = vadd.f32 %v1546, %v1904
      %v2051 = vadd.f32 %v1551, %v1909
      %v2052 = vadd.f32 %v1556, %v1914
      %v2053 = vadd.f32 %v1561, %v1919
      %v2054 = vadd.f32 %v1566, %v1924
      %v2055 = vadd.f32 %v1571, %v1929
      %v2056 = vadd.f32 %v1576, %v1934
      %v2057 = vadd.f32 %v1581, %v1939
      %v2058 = vadd.f32 %v1586, %v1944
      %v2059 = vadd.f32 %v1591, %v1949
      %v2060 = vadd.f32 %v1596, %v1954
      %v2061 = vadd.f32 %v1601, %v1959
      %v2062 = vadd.f32 %v1606, %v1964
      %v2063 = vadd.f32 %v1611, %v1969
      %v2064 = vadd.f32 %v1616, %v1974
      %v2065 = vadd.f32 %v1621, %v1979
      %v2066 = vadd.f32 %v1626, %v1984
      %v2067 = vadd.f32 %v1631, %v1989
      %v2068 = vadd.f32 %v1636, %v1994
      %v2069 = vadd.f32 %v1641, %v1999
      %v2070 = vadd.f32 %v1646, %v2004
      %v2071 = vadd.f32 %v1651, %v2009
      %v2072 = vadd.f32 %v1656, %v2014
      %v2073 = vadd.f32 %v1661, %v2019
      %v2074 = vadd.f32 %v1666, %v2024
      %v2075 = vadd.f32 %v1671, %v2029
      %v2076 = vadd.f32 %v1676, %v2034
      %v2077 = vadd.f32 %v1681, %v2039
      %v2078 = vadd.f32 %v1686, %v2044
      %v2079 = vld [vmem:[%s4] sm:$0x1]
      %v2081 = vlaneseq
      %v2082 = vshrl.u32 %v2081, 7
      %v2083 = vsub.s32 0, %v2082
      %v2084 = vrot.slane %v2079, %v2083
      %v2086 = vadd.f32 %v2047, %v2084
      %v2087 = vadd.f32 %v2048, %v2084
      %v2088 = vadd.f32 %v2049, %v2084
      %v2089 = vadd.f32 %v2050, %v2084
      %v2090 = vadd.f32 %v2051, %v2084
      %v2091 = vadd.f32 %v2052, %v2084
      %v2092 = vadd.f32 %v2053, %v2084
      %v2093 = vadd.f32 %v2054, %v2084
      %v2094 = vadd.f32 %v2055, %v2084
      %v2095 = vadd.f32 %v2056, %v2084
      %v2096 = vadd.f32 %v2057, %v2084
      %v2097 = vadd.f32 %v2058, %v2084
      %v2098 = vadd.f32 %v2059, %v2084
      %v2099 = vadd.f32 %v2060, %v2084
      %v2100 = vadd.f32 %v2061, %v2084
      %v2101 = vadd.f32 %v2062, %v2084
      %v2102 = vadd.f32 %v2063, %v2084
      %v2103 = vadd.f32 %v2064, %v2084
      %v2104 = vadd.f32 %v2065, %v2084
      %v2105 = vadd.f32 %v2066, %v2084
      %v2106 = vadd.f32 %v2067, %v2084
      %v2107 = vadd.f32 %v2068, %v2084
      %v2108 = vadd.f32 %v2069, %v2084
      %v2109 = vadd.f32 %v2070, %v2084
      %v2110 = vadd.f32 %v2071, %v2084
      %v2111 = vadd.f32 %v2072, %v2084
      %v2112 = vadd.f32 %v2073, %v2084
      %v2113 = vadd.f32 %v2074, %v2084
      %v2114 = vadd.f32 %v2075, %v2084
      %v2115 = vadd.f32 %v2076, %v2084
      %v2116 = vadd.f32 %v2077, %v2084
      %v2117 = vadd.f32 %v2078, %v2084
      %v2118 = vld [vmem:[%s266] sm:$0xff]
      %v2119 = vld [vmem:[%s266 + $0x8] sm:$0xff]
      %v2120 = vld [vmem:[%s266 + $0x10] sm:$0xff]
      %v2121 = vld [vmem:[%s266 + $0x18] sm:$0xff]
      %v2122 = vld [vmem:[%s266 + $0x20] sm:$0xff]
      %v2123 = vld [vmem:[%s266 + $0x28] sm:$0xff]
      %v2124 = vld [vmem:[%s266 + $0x30] sm:$0xff]
      %v2125 = vld [vmem:[%s266 + $0x38] sm:$0xff]
      %v2126 = vld [vmem:[%s266 + $0x40] sm:$0xff]
      %v2127 = vld [vmem:[%s266 + $0x48] sm:$0xff]
      %v2128 = vld [vmem:[%s266 + $0x50] sm:$0xff]
      %v2129 = vld [vmem:[%s266 + $0x58] sm:$0xff]
      %v2130 = vld [vmem:[%s266 + $0x60] sm:$0xff]
      %v2131 = vld [vmem:[%s266 + $0x68] sm:$0xff]
      %v2132 = vld [vmem:[%s266 + $0x70] sm:$0xff]
      %v2133 = vld [vmem:[%s266 + $0x78] sm:$0xff]
      %v2134 = vld [vmem:[%s266 + $0x80] sm:$0xff]
      %v2135 = vld [vmem:[%s266 + $0x88] sm:$0xff]
      %v2136 = vld [vmem:[%s266 + $0x90] sm:$0xff]
      %v2137 = vld [vmem:[%s266 + $0x98] sm:$0xff]
      %v2138 = vld [vmem:[%s266 + $0xa0] sm:$0xff]
      %v2139 = vld [vmem:[%s266 + $0xa8] sm:$0xff]
      %v2140 = vld [vmem:[%s266 + $0xb0] sm:$0xff]
      %v2141 = vld [vmem:[%s266 + $0xb8] sm:$0xff]
      %v2142 = vld [vmem:[%s266 + $0xc0] sm:$0xff]
      %v2143 = vld [vmem:[%s266 + $0xc8] sm:$0xff]
      %v2144 = vld [vmem:[%s266 + $0xd0] sm:$0xff]
      %v2145 = vld [vmem:[%s266 + $0xd8] sm:$0xff]
      %v2146 = vld [vmem:[%s266 + $0xe0] sm:$0xff]
      %v2147 = vld [vmem:[%s266 + $0xe8] sm:$0xff]
      %v2148 = vld [vmem:[%s266 + $0xf0] sm:$0xff]
      %v2149 = vld [vmem:[%s266 + $0xf8] sm:$0xff]
      %v2150 = vadd.f32 %v2086, %v2118
      %v2151 = vadd.f32 %v2087, %v2119
      %v2152 = vadd.f32 %v2088, %v2120
      %v2153 = vadd.f32 %v2089, %v2121
      %v2154 = vadd.f32 %v2090, %v2122
      %v2155 = vadd.f32 %v2091, %v2123
      %v2156 = vadd.f32 %v2092, %v2124
      %v2157 = vadd.f32 %v2093, %v2125
      %v2158 = vadd.f32 %v2094, %v2126
      %v2159 = vadd.f32 %v2095, %v2127
      %v2160 = vadd.f32 %v2096, %v2128
      %v2161 = vadd.f32 %v2097, %v2129
      %v2162 = vadd.f32 %v2098, %v2130
      %v2163 = vadd.f32 %v2099, %v2131
      %v2164 = vadd.f32 %v2100, %v2132
      %v2165 = vadd.f32 %v2101, %v2133
      %v2166 = vadd.f32 %v2102, %v2134
      %v2167 = vadd.f32 %v2103, %v2135
      %v2168 = vadd.f32 %v2104, %v2136
      %v2169 = vadd.f32 %v2105, %v2137
      %v2170 = vadd.f32 %v2106, %v2138
      %v2171 = vadd.f32 %v2107, %v2139
      %v2172 = vadd.f32 %v2108, %v2140
      %v2173 = vadd.f32 %v2109, %v2141
      %v2174 = vadd.f32 %v2110, %v2142
      %v2175 = vadd.f32 %v2111, %v2143
      %v2176 = vadd.f32 %v2112, %v2144
      %v2177 = vadd.f32 %v2113, %v2145
      %v2178 = vadd.f32 %v2114, %v2146
      %v2179 = vadd.f32 %v2115, %v2147
      %v2180 = vadd.f32 %v2116, %v2148
      %v2181 = vadd.f32 %v2117, %v2149
      %2182 = vst.msk [vmem:[%s271] sm:$0xff] %vm877, %v2150
      %2183 = vst.msk [vmem:[%s271 + $0x8] sm:$0xff] %vm877, %v2151
      %2184 = vst.msk [vmem:[%s271 + $0x10] sm:$0xff] %vm877, %v2152
      %2185 = vst.msk [vmem:[%s271 + $0x18] sm:$0xff] %vm877, %v2153
      %2186 = vst.msk [vmem:[%s271 + $0x20] sm:$0xff] %vm877, %v2154
      %2187 = vst.msk [vmem:[%s271 + $0x28] sm:$0xff] %vm877, %v2155
      %2188 = vst.msk [vmem:[%s271 + $0x30] sm:$0xff] %vm877, %v2156
      %2189 = vst.msk [vmem:[%s271 + $0x38] sm:$0xff] %vm877, %v2157
      %2190 = vst.msk [vmem:[%s271 + $0x40] sm:$0xff] %vm877, %v2158
      %2191 = vst.msk [vmem:[%s271 + $0x48] sm:$0xff] %vm877, %v2159
      %2192 = vst.msk [vmem:[%s271 + $0x50] sm:$0xff] %vm877, %v2160
      %2193 = vst.msk [vmem:[%s271 + $0x58] sm:$0xff] %vm877, %v2161
      %2194 = vst.msk [vmem:[%s271 + $0x60] sm:$0xff] %vm877, %v2162
      %2195 = vst.msk [vmem:[%s271 + $0x68] sm:$0xff] %vm877, %v2163
      %2196 = vst.msk [vmem:[%s271 + $0x70] sm:$0xff] %vm877, %v2164
      %2197 = vst.msk [vmem:[%s271 + $0x78] sm:$0xff] %vm877, %v2165
      %2198 = vst.msk [vmem:[%s271 + $0x80] sm:$0xff] %vm877, %v2166
      %2199 = vst.msk [vmem:[%s271 + $0x88] sm:$0xff] %vm877, %v2167
      %2200 = vst.msk [vmem:[%s271 + $0x90] sm:$0xff] %vm877, %v2168
      %2201 = vst.msk [vmem:[%s271 + $0x98] sm:$0xff] %vm877, %v2169
      %2202 = vst.msk [vmem:[%s271 + $0xa0] sm:$0xff] %vm877, %v2170
      %2203 = vst.msk [vmem:[%s271 + $0xa8] sm:$0xff] %vm877, %v2171
      %2204 = vst.msk [vmem:[%s271 + $0xb0] sm:$0xff] %vm877, %v2172
      %2205 = vst.msk [vmem:[%s271 + $0xb8] sm:$0xff] %vm877, %v2173
      %2206 = vst.msk [vmem:[%s271 + $0xc0] sm:$0xff] %vm877, %v2174
      %2207 = vst.msk [vmem:[%s271 + $0xc8] sm:$0xff] %vm877, %v2175
      %2208 = vst.msk [vmem:[%s271 + $0xd0] sm:$0xff] %vm877, %v2176
      %2209 = vst.msk [vmem:[%s271 + $0xd8] sm:$0xff] %vm877, %v2177
      %2210 = vst.msk [vmem:[%s271 + $0xe0] sm:$0xff] %vm877, %v2178
      %2211 = vst.msk [vmem:[%s271 + $0xe8] sm:$0xff] %vm877, %v2179
      %2212 = vst.msk [vmem:[%s271 + $0xf0] sm:$0xff] %vm877, %v2180
      %2213 = vst.msk [vmem:[%s271 + $0xf8] sm:$0xff] %vm877, %v2181
      %p2214 = scmp.lt.s32.totalorder %s17, 1
      %s2215 = scalar_select %p2214, %s17, 1
      %s2216 = smul.addr %s2215, 32
      %s2217 = smul.addr %s2216, 8
      %s2218 = scalar_lea.vmem %s6, %s2217
      // Predicated region
      $region45: #{residual_block_forward.5} parent=43 // pred_check
        %p2219 = pneg %p171
      $region46: #{residual_block_forward.5} parent=43 // pred_check_branch
        %2221 = sbr.rel (%p2219) target = $region48
      $region47: #{residual_block_forward.5} parent=43 // pred_region
        _
      $region48: #{residual_block_forward.5} parent=43 // pred_fallthru
        _
    $region44: #{residual_block_forward.5} parent=5 // pred_fallthru
      _
    %p2222 = scmp.le.s32.totalorder 2, %s12
    // Predicated region
    $region49: #{residual_block_forward.5} parent=5 // pred_check
      %p2223 = pneg %p2222
    $region50: #{residual_block_forward.5} parent=5 // pred_check_branch
      %2225 = sbr.rel (%p2223) target = $region52
    $region51: #{residual_block_forward.5} parent=5 // pred_region
      %s2226 = ssub.s32 %s12, 2
      // Predicated region
      $region53: #{residual_block_forward.5} parent=51 // pred_check
        %p2227 = pneg %p177
      $region54: #{residual_block_forward.5} parent=51 // pred_check_branch
        %2229 = sbr.rel (%p2227) target = $region56
      $region55: #{residual_block_forward.5} parent=51 // pred_region
        %p2230 = scmp.lt.s32.totalorder %s18, 1
        %s2231 = scalar_select %p2230, %s18, 1
        %s2232 = smul.addr %s2231, 32
        %s2233 = smul.addr %s2232, 8
        %s2234 = scalar_lea.vmem %s6, %s2233
      $region56: #{residual_block_forward.5} parent=51 // pred_fallthru
        _
    $region52: #{residual_block_forward.5} parent=5 // pred_fallthru
      _
  $region6: #{residual_block_forward.5} parent=0 // loop_footer
    %s16 = sadd.s32 1, %s12
  $region7: #{residual_block_forward.5} parent=0 // loop_footer_branch
    %11 = sbr.rel target = $region3
  $region8: #{residual_block_forward.5} parent=0 // loop_exit
    _

</llo_original>
